<compile_context>
chip_gen: v7x
topology: tpu7x:2x2x1
jax: 0.10.0
libtpu: 0.0.40
codegen_flags: <defaults>
</compile_context>

<pallas_src>
import functools
import math

import jax
import jax.numpy as jnp
import numpy as np
from jax.experimental import pallas as pl
from jax.experimental.pallas import tpu as pltpu


# ------------------------------------------------------------------------------------------
# small helpers

def _layernorm_f32(v, g, b, eps=1e-5):
    v32 = v.astype(jnp.float32)
    mu = jnp.mean(v32, axis=-1, keepdims=True)
    var = jnp.mean((v32 - mu) ** 2, axis=-1, keepdims=True)
    return (v32 - mu) * jax.lax.rsqrt(var + eps) * g + b


@functools.lru_cache(maxsize=None)
def _vmem_capacity_bytes():
    """Per-core VMEM capacity; conservative (v7x-sized) fallback if the query fails."""
    try:
        return int(getattr(pltpu.get_tpu_info(), "vmem_capacity_bytes", 64 << 20))
    except Exception:
        return 64 << 20


def _probe_kernel(x_ref, o_ref):
    o_ref[...] = x_ref[...] + 1.0


@functools.lru_cache(maxsize=None)
def _single_buffer_supported():
    """Probe ONCE (cached) whether this build accepts/lowers pipeline_mode=pl.Buffered(1)."""
    try:
        fn = pl.pallas_call(
            _probe_kernel,
            out_shape=jax.ShapeDtypeStruct((8, 128), jnp.float32),
            grid=(1,),
            in_specs=[pl.BlockSpec((8, 128), lambda i: (0, 0),
                                   pipeline_mode=pl.Buffered(1))],
            out_specs=pl.BlockSpec((8, 128), lambda i: (0, 0)),
        )
        jax.block_until_ready(fn(jnp.zeros((8, 128), jnp.float32)))
        return True
    except Exception:
        return False


# ------------------------------------------------------------------------------------------
# kernel

def _rab_kernel(n_head, has_bias, *refs):
    if has_bias:
        (x_ref, bias_ref,
         ln1g_ref, ln1b_ref, wint_ref, bin_ref, woutt_ref, bout_ref,
         ln2g_ref, ln2b_ref, wfct_ref, bfc_ref, wprojt_ref, bproj_ref,
         o_ref, ctx_ref) = refs
    else:
        (x_ref,
         ln1g_ref, ln1b_ref, wint_ref, bin_ref, woutt_ref, bout_ref,
         ln2g_ref, ln2b_ref, wfct_ref, bfc_ref, wprojt_ref, bproj_ref,
         o_ref, ctx_ref) = refs
        bias_ref = None

    Bb, L, D = x_ref.shape
    H = n_head
    hd = D // H

    x = x_ref[...].astype(jnp.float32).reshape(Bb * L, D)         # (Bb*L, D) f32

    # --- ln_1 + fused qkv projection (big-M matmul, bf16 weights, f32 accumulate) ----------
    h = _layernorm_f32(x, ln1g_ref[...], ln1b_ref[...])
    qkv = jnp.dot(h.astype(wint_ref.dtype), wint_ref[...],
                  preferred_element_type=jnp.float32) + bin_ref[...]          # (Bb*L, 3D)
    qkv_bf = qkv.astype(jnp.bfloat16).reshape(Bb, L, 3 * D)       # single packing pass

    # --- gather heads into one (Bb*H, L, hd) batch and run attention once for all heads ----
    def gather_heads(base):
        return jnp.stack(
            [qkv_bf[:, :, base + hi * hd: base + (hi + 1) * hd] for hi in range(H)],
            axis=1).reshape(Bb * H, L, hd)

    qh = gather_heads(0)          # q columns were pre-scaled by 1/sqrt(hd) offline
    kh = gather_heads(D)
    vh = gather_heads(2 * D)

    s = jnp.einsum('bqd,bkd->bqk', qh, kh,
                   preferred_element_type=jnp.float32)            # (Bb*H, L, L) f32
    if has_bias:
        s = s + bias_ref[...]                                     # (Bb*H, 1, L) key bias
    s = s - jnp.max(s, axis=-1, keepdims=True)
    e = jnp.exp(s)
    p = e * pl.reciprocal(jnp.sum(e, axis=-1, keepdims=True), approx=True)
    ctx = jnp.einsum('bqk,bkd->bqd', p.astype(jnp.bfloat16), vh,
                     preferred_element_type=jnp.float32)          # (Bb*H, L, hd) f32

    # scatter head slices back to the feature-major bf16 context scratch
    ctx_bf = ctx.astype(jnp.bfloat16).reshape(Bb, H, L, hd)       # single packing pass
    for hi in range(H):
        ctx_ref[:, :, hi * hd:(hi + 1) * hd] = ctx_bf[:, hi]

    attn_out = jnp.dot(ctx_ref[...].reshape(Bb * L, D), woutt_ref[...],
                       preferred_element_type=jnp.float32) + bout_ref[...]
    x1 = x + attn_out

    # --- ln_2 + MLP (c_fc -> QuickGELU -> c_proj) -------------------------------------------
    h2 = _layernorm_f32(x1, ln2g_ref[...], ln2b_ref[...])
    fc = jnp.dot(h2.astype(wfct_ref.dtype), wfct_ref[...],
                 preferred_element_type=jnp.float32) + bfc_ref[...]
    act = fc * jax.nn.sigmoid(1.702 * fc)                         # QuickGELU in f32 (v5e-safe)
    mlp_out = jnp.dot(act.astype(wprojt_ref.dtype), wprojt_ref[...],
                      preferred_element_type=jnp.float32) + bproj_ref[...]

    o_ref[...] = (x1 + mlp_out).reshape(Bb, L, D).astype(o_ref.dtype)


# ------------------------------------------------------------------------------------------
# tiling / budgeting

def _pick_block_b(n, l, target_rows=512, min_rows=256):
    """Batch elements per grid step: largest divisor of n with bb*l <= target_rows,
    preferring an even grid-step count (v7x megacore) when that keeps tiles >= min_rows."""
    divisors = [d for d in range(1, n + 1) if n % d == 0]
    fitting = [d for d in divisors if d * l <= target_rows] or [1]
    bb = fitting[-1]
    if (n // bb) % 2 == 1:
        floor_rows = min(min_rows, bb * l)
        for d in reversed(fitting):
            if d < bb and (n // d) % 2 == 0 and d * l >= floor_rows:
                bb = d
                break
    return bb


def _vmem_estimate(bb, l, d, h, x_itemsize, weight_bytes, has_bias, single_buf):
    """Upper-bound VMEM estimate for one grid step (includes batched LxL softmax temps)."""
    rows = bb * l
    w = weight_bytes * (1 if single_buf else 2)
    io = 2 * 2 * rows * d * x_itemsize                      # double-buffered x / out tiles
    io += (2 * bb * h * l * 4) if has_bias else 0           # double-buffered key-bias tile
    qkv = rows * 3 * d * (4 + 2)                            # f32 result + bf16 copy
    heads = 3 * rows * d * 2                                # stacked q/k/v bf16 batches
    heads += 3 * bb * h * l * l * 4 + bb * h * l * l * 2    # s/exp/prob f32 + p bf16
    ctx = rows * d * (4 + 2 + 2)                            # ctx f32 + bf16 + bf16 scratch
    mlp = 2 * rows * 4 * d * 4                              # fc + act f32
    resid = 3 * rows * d * 4                                # x, x1, ln intermediates
    return w + io + qkv + heads + ctx + mlp + resid + (6 << 20)   # Mosaic-internal headroom


def _prepare_params(params, n_head, compute_dtype=jnp.bfloat16):
    """Cast matmul weights to bf16 and fold 1/sqrt(head_dim) into the q part of in_proj."""
    D = params["w_out_t"].shape[0]
    hd = D // n_head
    scale = 1.0 / math.sqrt(hd)
    qkv_scale = jnp.concatenate([jnp.full((D,), scale, jnp.float32),
                                 jnp.ones((2 * D,), jnp.float32)])
    f32 = jnp.float32
    return dict(
        ln1_g=params["ln1_g"].astype(f32), ln1_b=params["ln1_b"].astype(f32),
        w_in_t=(params["w_in_t"].astype(f32) * qkv_scale[None, :]).astype(compute_dtype),
        b_in=(params["b_in"].astype(f32) * qkv_scale[None, :]),
        w_out_t=params["w_out_t"].astype(compute_dtype), b_out=params["b_out"].astype(f32),
        ln2_g=params["ln2_g"].astype(f32), ln2_b=params["ln2_b"].astype(f32),
        w_fc_t=params["w_fc_t"].astype(compute_dtype), b_fc=params["b_fc"].astype(f32),
        w_proj_t=params["w_proj_t"].astype(compute_dtype), b_proj=params["b_proj"].astype(f32),
    )


def _rab_call(x, key_bias, kp, n_head, bb, single_buffer_weights, vmem_limit):
    N, L, D = x.shape
    has_bias = key_bias is not None
    wkw = {"pipeline_mode": pl.Buffered(1)} if single_buffer_weights else {}

    def const_spec(arr):
        nd = arr.ndim
        return pl.BlockSpec(arr.shape, lambda b, _nd=nd: (0,) * _nd, **wkw)

    weight_args = [kp["ln1_g"], kp["ln1_b"],
                   kp["w_in_t"], kp["b_in"], kp["w_out_t"], kp["b_out"],
                   kp["ln2_g"], kp["ln2_b"],
                   kp["w_fc_t"], kp["b_fc"], kp["w_proj_t"], kp["b_proj"]]
    # TODO(synk): for very large d_model (D >= ~1024 bf16 on v7x) tile w_fc_t / w_proj_t over
    #             an extra 'arbitrary' grid axis (or split attention and MLP into two calls)
    #             to cap resident weight VMEM.

    in_specs = [pl.BlockSpec((bb, L, D), lambda b: (b, 0, 0))]            # x block
    args = [x]
    if has_bias:
        in_specs.append(pl.BlockSpec((bb * n_head, 1, L), lambda b: (b, 0, 0)))
        args.append(key_bias)
    in_specs += [const_spec(a) for a in weight_args]
    args += weight_args

    return pl.pallas_call(
        functools.partial(_rab_kernel, n_head, has_bias),
        out_shape=jax.ShapeDtypeStruct((N, L, D), x.dtype),
        grid=(N // bb,),
        in_specs=in_specs,
        out_specs=pl.BlockSpec((bb, L, D), lambda b: (b, 0, 0)),
        scratch_shapes=[pltpu.VMEM((bb, L, D), jnp.bfloat16)],            # bf16 context scratch
        compiler_params=pltpu.CompilerParams(
            dimension_semantics=("parallel",),
            vmem_limit_bytes=vmem_limit),
    )(*args)


# ------------------------------------------------------------------------------------------
# public wrapper

def residual_attention_block(x_lnd, params, n_head, x_mask=None, block_b=None,
                             compute_dtype=jnp.bfloat16):
    """x_lnd: (L, N, D) like the PyTorch module. x_mask: optional (N, L) bool key_padding_mask."""
    L, N, D = x_lnd.shape
    x = jnp.transpose(x_lnd, (1, 0, 2))                               # (N, L, D)

    # Pad L to a multiple of 8 (sublane alignment); padded keys are masked out below.
    # TODO(synk): evaluate padding CLIP-style L (77/197/257) up to a multiple of 128
    #             (lane-dense score tiles) against the ~L'/L extra projection/MLP rows.
    Lp = -(-L // 8) * 8
    pad = Lp - L
    if pad:
        x = jnp.pad(x, ((0, 0), (0, pad), (0, 0)))

    need_bias = (x_mask is not None) or (pad > 0)
    if need_bias:
        mask_nl = jnp.zeros((N, L), bool) if x_mask is None else x_mask.astype(bool)
        if pad:
            mask_nl = jnp.pad(mask_nl, ((0, 0), (0, pad)), constant_values=True)
        bias_nl = jnp.where(mask_nl, -1e30, 0.0).astype(jnp.float32)  # (N, Lp)
        key_bias = jnp.broadcast_to(bias_nl[:, None, None, :],
                                    (N, n_head, 1, Lp)).reshape(N * n_head, 1, Lp)
    else:
        key_bias = None

    kp = _prepare_params(params, n_head, compute_dtype)
    single_buf = _single_buffer_supported()

    vmem_cap = _vmem_capacity_bytes()
    small_vmem = vmem_cap <= (64 << 20)                               # v7x-class part
    vmem_cap_limit = (48 << 20) if small_vmem else min(100 << 20, int(0.8 * vmem_cap))
    target_rows = 512 if small_vmem else 1024

    bb = block_b if block_b is not None else _pick_block_b(N, Lp, target_rows)
    assert N % bb == 0

    weight_bytes = sum(int(np.prod(a.shape)) * a.dtype.itemsize for a in kp.values())
    while True:
        need = _vmem_estimate(bb, Lp, D, n_head, x.dtype.itemsize, weight_bytes,
                              need_bias, single_buf)
        if block_b is not None or bb == 1 or need <= vmem_cap_limit:
            break
        bb = max(d for d in range(1, bb) if N % d == 0)               # shrink to next divisor
    vmem_limit = int(min(max(need, 32 << 20), vmem_cap_limit))

    out = _rab_call(x, key_bias, kp, n_head, bb, single_buf, vmem_limit)
    if pad:
        out = out[:, :L, :]
    return jnp.transpose(out, (1, 0, 2))                              # back to (L, N, D)


# ------------------------------------------------------------------------------------------
# synthetic parameters + pure-JAX reference

def init_params(key, d_model):
    """Deterministic synthetic parameters matching the PyTorch module's shapes (f32)."""
    ks = jax.random.split(key, 6)
    s = 0.02
    w_in = s * jax.random.normal(ks[0], (3 * d_model, d_model), jnp.float32)   # in_proj_weight
    b_in = jnp.zeros((3 * d_model,), jnp.float32)
    w_out = s * jax.random.normal(ks[1], (d_model, d_model), jnp.float32)      # out_proj.weight
    b_out = jnp.zeros((d_model,), jnp.float32)
    w_fc = s * jax.random.normal(ks[2], (4 * d_model, d_model), jnp.float32)   # c_fc.weight
    b_fc = s * jax.random.normal(ks[3], (4 * d_model,), jnp.float32)
    w_proj = s * jax.random.normal(ks[4], (d_model, 4 * d_model), jnp.float32) # c_proj.weight
    b_proj = s * jax.random.normal(ks[5], (d_model,), jnp.float32)
    return dict(
        ln1_g=jnp.ones((1, d_model), jnp.float32), ln1_b=jnp.zeros((1, d_model), jnp.float32),
        w_in_t=w_in.T, b_in=b_in.reshape(1, -1),
        w_out_t=w_out.T, b_out=b_out.reshape(1, -1),
        ln2_g=jnp.ones((1, d_model), jnp.float32), ln2_b=jnp.zeros((1, d_model), jnp.float32),
        w_fc_t=w_fc.T, b_fc=b_fc.reshape(1, -1),
        w_proj_t=w_proj.T, b_proj=b_proj.reshape(1, -1),
    )


def reference(x_lnd, params, n_head, x_mask=None):
    """Pure-JAX f32 reference of the PyTorch forward pass (for correctness check)."""
    L, N, D = x_lnd.shape
    hd = D // n_head

    def ln(v, g, b):
        mu = v.mean(-1, keepdims=True)
        var = ((v - mu) ** 2).mean(-1, keepdims=True)
        return (v - mu) / jnp.sqrt(var + 1e-5) * g[0] + b[0]

    x = jnp.transpose(x_lnd, (1, 0, 2))
    h = ln(x, params["ln1_g"], params["ln1_b"])
    qkv = jnp.einsum('nld,de->nle', h, params["w_in_t"]) + params["b_in"][0]
    q, k, v = qkv[..., :D], qkv[..., D:2 * D], qkv[..., 2 * D:]
    q = q.reshape(N, L, n_head, hd).transpose(0, 2, 1, 3) / math.sqrt(hd)
    k = k.reshape(N, L, n_head, hd).transpose(0, 2, 1, 3)
    v = v.reshape(N, L, n_head, hd).transpose(0, 2, 1, 3)
    s = jnp.einsum('nhqd,nhkd->nhqk', q, k)
    if x_mask is not None:
        s = s + jnp.where(x_mask.astype(bool), -1e30, 0.0)[:, None, None, :]
    p = jax.nn.softmax(s, axis=-1)
    ctx = jnp.einsum('nhqk,nhkd->nhqd', p, v).transpose(0, 2, 1, 3).reshape(N, L, D)
    attn = jnp.einsum('nld,de->nle', ctx, params["w_out_t"]) + params["b_out"][0]
    x = x + attn
    h2 = ln(x, params["ln2_g"], params["ln2_b"])
    fc = jnp.einsum('nld,de->nle', h2, params["w_fc_t"]) + params["b_fc"][0]
    act = fc * jax.nn.sigmoid(1.702 * fc)
    x = x + jnp.einsum('nld,de->nle', act, params["w_proj_t"]) + params["b_proj"][0]
    return jnp.transpose(x, (1, 0, 2))


# ------------------------------------------------------------------------------------------

if __name__ == "__main__":
    key = jax.random.PRNGKey(0)

    def check(L, N, D, H, with_mask, kseed):
        kx, kp = jax.random.split(jax.random.fold_in(key, kseed))
        x = jax.random.normal(kx, (L, N, D), jnp.float32)          # PyTorch layout (L, N, D)
        params = init_params(kp, D)
        if with_mask:
            # last two keys of every odd batch element are padding
            x_mask = (jnp.arange(L)[None, :] >= (L - 2)) & (jnp.arange(N)[:, None] % 2 == 1)
        else:
            x_mask = None
        out = jax.block_until_ready(residual_attention_block(x, params, H, x_mask))
        ref = reference(x, params, H, x_mask)
        assert out.shape == (L, N, D)
        np.testing.assert_allclose(np.asarray(out), np.asarray(ref), rtol=2e-3, atol=2e-3)

    check(L=8,  N=4, D=32, H=4, with_mask=True,  kseed=0)   # key_padding_mask path
    check(L=12, N=2, D=32, H=4, with_mask=False, kseed=1)   # L padded 12 -> 16 (masked pad keys)
    check(L=8,  N=2, D=32, H=2, with_mask=False, kseed=2)   # no-mask kernel variant
    print("KERNEL_OK")
</pallas_src>

<mosaic_0001>
module attributes {stable_mosaic.version = 11 : i64} {
  func.func @_probe_kernel(%arg0: i32, %arg1: memref<8x128xf32, #tpu.memory_space<vmem>>, %arg2: memref<8x128xf32, #tpu.memory_space<vmem>>) attributes {dimension_semantics = [#tpu.dimension_semantics<arbitrary>], iteration_bounds = array<i64: 1>, scalar_prefetch = 0 : i64, scratch_operands = 0 : i64, tpu.core_type = #tpu.core_type<tc>, window_params = [{pipeline_mode = #tpu.pipeline_mode<synchronous>, transform_indices = @transform_0, window_bounds = array<i64: 8, 128>}, {pipeline_mode = #tpu.pipeline_mode<synchronous>, transform_indices = @transform_1, window_bounds = array<i64: 8, 128>}]} {
    %c0 = arith.constant 0 : index
    %c0_0 = arith.constant 0 : index
    %0 = vector.load %arg1[%c0, %c0_0] : memref<8x128xf32, #tpu.memory_space<vmem>>, vector<8x128xf32>
    %cst = arith.constant 1.000000e+00 : f32
    %1 = vector.broadcast %cst : f32 to vector<8x128xf32>
    %2 = arith.addf %0, %1 : vector<8x128xf32>
    %c0_1 = arith.constant 0 : index
    %c0_2 = arith.constant 0 : index
    %3 = vector.load %arg2[%c0_1, %c0_2] : memref<8x128xf32, #tpu.memory_space<vmem>>, vector<8x128xf32>
    tpu.vector_store %arg2[%c0_1, %c0_2], %2 {strides = array<i32>} : memref<8x128xf32, #tpu.memory_space<vmem>>, vector<8x128xf32>,
    return
  }
  func.func @transform_0(%arg0: i32) -> (i32, i32) {
    %c0_i32 = arith.constant 0 : i32
    %c0_i32_0 = arith.constant 0 : i32
    %c0_i32_1 = arith.constant 0 : i32
    return %c0_i32, %c0_i32_0 : i32, i32
  }
  func.func @transform_1(%arg0: i32) -> (i32, i32) {
    %c0_i32 = arith.constant 0 : i32
    %c0_i32_0 = arith.constant 0 : i32
    %c0_i32_1 = arith.constant 0 : i32
    return %c0_i32, %c0_i32_0 : i32, i32
  }
}

module attributes {stable_mosaic.version = 11 : i64} {
  func.func @_rab_kernel(%arg0: i32, %arg1: memref<4x8x32xf32, #tpu.memory_space<vmem>>, %arg2: memref<16x1x8xf32, #tpu.memory_space<vmem>>, %arg3: memref<1x32xf32, #tpu.memory_space<vmem>>, %arg4: memref<1x32xf32, #tpu.memory_space<vmem>>, %arg5: memref<32x96xbf16, #tpu.memory_space<vmem>>, %arg6: memref<1x96xf32, #tpu.memory_space<vmem>>, %arg7: memref<32x32xbf16, #tpu.memory_space<vmem>>, %arg8: memref<1x32xf32, #tpu.memory_space<vmem>>, %arg9: memref<1x32xf32, #tpu.memory_space<vmem>>, %arg10: memref<1x32xf32, #tpu.memory_space<vmem>>, %arg11: memref<32x128xbf16, #tpu.memory_space<vmem>>, %arg12: memref<1x128xf32, #tpu.memory_space<vmem>>, %arg13: memref<128x32xbf16, #tpu.memory_space<vmem>>, %arg14: memref<1x32xf32, #tpu.memory_space<vmem>>, %arg15: memref<4x8x32xf32, #tpu.memory_space<vmem>>, %arg16: memref<4x8x32xbf16, #tpu.memory_space<vmem>>) attributes {dimension_semantics = [#tpu.dimension_semantics<parallel>], iteration_bounds = array<i64: 1>, scalar_prefetch = 0 : i64, scratch_operands = 1 : i64, tpu.core_type = #tpu.core_type<tc>, window_params = [{transform_indices = @transform_0, window_bounds = array<i64: 4, 8, 32>}, {transform_indices = @transform_1, window_bounds = array<i64: 16, 1, 8>}, {pipeline_mode = #tpu.pipeline_mode<synchronous>, transform_indices = @transform_2, window_bounds = array<i64: 1, 32>}, {pipeline_mode = #tpu.pipeline_mode<synchronous>, transform_indices = @transform_3, window_bounds = array<i64: 1, 32>}, {pipeline_mode = #tpu.pipeline_mode<synchronous>, transform_indices = @transform_4, window_bounds = array<i64: 32, 96>}, {pipeline_mode = #tpu.pipeline_mode<synchronous>, transform_indices = @transform_5, window_bounds = array<i64: 1, 96>}, {pipeline_mode = #tpu.pipeline_mode<synchronous>, transform_indices = @transform_6, window_bounds = array<i64: 32, 32>}, {pipeline_mode = #tpu.pipeline_mode<synchronous>, transform_indices = @transform_7, window_bounds = array<i64: 1, 32>}, {pipeline_mode = #tpu.pipeline_mode<synchronous>, transform_indices = @transform_8, window_bounds = array<i64: 1, 32>}, {pipeline_mode = #tpu.pipeline_mode<synchronous>, transform_indices = @transform_9, window_bounds = array<i64: 1, 32>}, {pipeline_mode = #tpu.pipeline_mode<synchronous>, transform_indices = @transform_10, window_bounds = array<i64: 32, 128>}, {pipeline_mode = #tpu.pipeline_mode<synchronous>, transform_indices = @transform_11, window_bounds = array<i64: 1, 128>}, {pipeline_mode = #tpu.pipeline_mode<synchronous>, transform_indices = @transform_12, window_bounds = array<i64: 128, 32>}, {pipeline_mode = #tpu.pipeline_mode<synchronous>, transform_indices = @transform_13, window_bounds = array<i64: 1, 32>}, {transform_indices = @transform_14, window_bounds = array<i64: 4, 8, 32>}]} {
    %c0 = arith.constant 0 : index
    %c0_0 = arith.constant 0 : index
    %c0_1 = arith.constant 0 : index
    %0 = vector.load %arg1[%c0, %c0_0, %c0_1] : memref<4x8x32xf32, #tpu.memory_space<vmem>>, vector<4x8x32xf32>
    %1 = vector.shape_cast %0 : vector<4x8x32xf32> to vector<32x32xf32>
    %c0_2 = arith.constant 0 : index
    %c0_3 = arith.constant 0 : index
    %2 = vector.load %arg3[%c0_2, %c0_3] : memref<1x32xf32, #tpu.memory_space<vmem>>, vector<1x32xf32>
    %c0_4 = arith.constant 0 : index
    %c0_5 = arith.constant 0 : index
    %3 = vector.load %arg4[%c0_4, %c0_5] : memref<1x32xf32, #tpu.memory_space<vmem>>, vector<1x32xf32>
    %cst = arith.constant dense<0.000000e+00> : vector<32xf32>
    %4 = vector.multi_reduction <add>, %1, %cst [1] : vector<32x32xf32> to vector<32xf32>
    %5 = vector.shape_cast %4 : vector<32xf32> to vector<32x1xf32>
    %cst_6 = arith.constant 3.200000e+01 : f32
    %6 = vector.broadcast %cst_6 : f32 to vector<32x1xf32>
    %7 = arith.divf %5, %6 : vector<32x1xf32>
    %8 = vector.broadcast %7 : vector<32x1xf32> to vector<32x32xf32>
    %9 = arith.subf %1, %8 : vector<32x32xf32>
    %10 = arith.mulf %9, %9 : vector<32x32xf32>
    %cst_7 = arith.constant dense<0.000000e+00> : vector<32xf32>
    %11 = vector.multi_reduction <add>, %10, %cst_7 [1] : vector<32x32xf32> to vector<32xf32>
    %12 = vector.shape_cast %11 : vector<32xf32> to vector<32x1xf32>
    %cst_8 = arith.constant 3.200000e+01 : f32
    %13 = vector.broadcast %cst_8 : f32 to vector<32x1xf32>
    %14 = arith.divf %12, %13 : vector<32x1xf32>
    %15 = vector.broadcast %7 : vector<32x1xf32> to vector<32x32xf32>
    %16 = arith.subf %1, %15 : vector<32x32xf32>
    %cst_9 = arith.constant 9.99999974E-6 : f32
    %17 = vector.broadcast %cst_9 : f32 to vector<32x1xf32>
    %18 = arith.addf %14, %17 : vector<32x1xf32>
    %19 = math.rsqrt %18 : vector<32x1xf32>
    %20 = vector.broadcast %19 : vector<32x1xf32> to vector<32x32xf32>
    %21 = arith.mulf %16, %20 : vector<32x32xf32>
    %22 = vector.broadcast %2 : vector<1x32xf32> to vector<32x32xf32>
    %23 = arith.mulf %21, %22 : vector<32x32xf32>
    %24 = vector.broadcast %3 : vector<1x32xf32> to vector<32x32xf32>
    %25 = arith.addf %23, %24 : vector<32x32xf32>
    %26 = arith.truncf %25 : vector<32x32xf32> to vector<32x32xbf16>
    %c0_10 = arith.constant 0 : index
    %c0_11 = arith.constant 0 : index
    %27 = vector.load %arg5[%c0_10, %c0_11] : memref<32x96xbf16, #tpu.memory_space<vmem>>, vector<32x96xbf16>
    %cst_12 = arith.constant dense<0.000000e+00> : vector<32x96xf32>
    %28 = tpu.matmul %26, %27, %cst_12 {dimension_numbers = #tpu.dot_dimension_numbers<[1], [0], [0], [1], [0, 0, 1, 1], [], []>} : vector<32x32xbf16>, vector<32x96xbf16>, vector<32x96xf32> -> vector<32x96xf32>
    %c0_13 = arith.constant 0 : index
    %c0_14 = arith.constant 0 : index
    %29 = vector.load %arg6[%c0_13, %c0_14] : memref<1x96xf32, #tpu.memory_space<vmem>>, vector<1x96xf32>
    %30 = vector.broadcast %29 : vector<1x96xf32> to vector<32x96xf32>
    %31 = arith.addf %28, %30 : vector<32x96xf32>
    %32 = arith.truncf %31 : vector<32x96xf32> to vector<32x96xbf16>
    %33 = vector.shape_cast %32 : vector<32x96xbf16> to vector<4x8x96xbf16>
    %34 = vector.extract_strided_slice %33 {offsets = [0, 0, 0], sizes = [4, 8, 8], strides = [1, 1, 1]} : vector<4x8x96xbf16> to vector<4x8x8xbf16>
    %35 = vector.extract_strided_slice %33 {offsets = [0, 0, 8], sizes = [4, 8, 8], strides = [1, 1, 1]} : vector<4x8x96xbf16> to vector<4x8x8xbf16>
    %36 = vector.extract_strided_slice %33 {offsets = [0, 0, 16], sizes = [4, 8, 8], strides = [1, 1, 1]} : vector<4x8x96xbf16> to vector<4x8x8xbf16>
    %37 = vector.extract_strided_slice %33 {offsets = [0, 0, 24], sizes = [4, 8, 8], strides = [1, 1, 1]} : vector<4x8x96xbf16> to vector<4x8x8xbf16>
    %38 = vector.shape_cast %34 : vector<4x8x8xbf16> to vector<4x1x8x8xbf16>
    %39 = vector.shape_cast %35 : vector<4x8x8xbf16> to vector<4x1x8x8xbf16>
    %40 = vector.shape_cast %36 : vector<4x8x8xbf16> to vector<4x1x8x8xbf16>
    %41 = vector.shape_cast %37 : vector<4x8x8xbf16> to vector<4x1x8x8xbf16>
    %42 = tpu.concatenate %38, %39, %40, %41 in 1 : vector<4x1x8x8xbf16>, vector<4x1x8x8xbf16>, vector<4x1x8x8xbf16>, vector<4x1x8x8xbf16> -> vector<4x4x8x8xbf16>
    %43 = vector.shape_cast %42 : vector<4x4x8x8xbf16> to vector<16x8x8xbf16>
    %44 = vector.extract_strided_slice %33 {offsets = [0, 0, 32], sizes = [4, 8, 8], strides = [1, 1, 1]} : vector<4x8x96xbf16> to vector<4x8x8xbf16>
    %45 = vector.extract_strided_slice %33 {offsets = [0, 0, 40], sizes = [4, 8, 8], strides = [1, 1, 1]} : vector<4x8x96xbf16> to vector<4x8x8xbf16>
    %46 = vector.extract_strided_slice %33 {offsets = [0, 0, 48], sizes = [4, 8, 8], strides = [1, 1, 1]} : vector<4x8x96xbf16> to vector<4x8x8xbf16>
    %47 = vector.extract_strided_slice %33 {offsets = [0, 0, 56], sizes = [4, 8, 8], strides = [1, 1, 1]} : vector<4x8x96xbf16> to vector<4x8x8xbf16>
    %48 = vector.shape_cast %44 : vector<4x8x8xbf16> to vector<4x1x8x8xbf16>
    %49 = vector.shape_cast %45 : vector<4x8x8xbf16> to vector<4x1x8x8xbf16>
    %50 = vector.shape_cast %46 : vector<4x8x8xbf16> to vector<4x1x8x8xbf16>
    %51 = vector.shape_cast %47 : vector<4x8x8xbf16> to vector<4x1x8x8xbf16>
    %52 = tpu.concatenate %48, %49, %50, %51 in 1 : vector<4x1x8x8xbf16>, vector<4x1x8x8xbf16>, vector<4x1x8x8xbf16>, vector<4x1x8x8xbf16> -> vector<4x4x8x8xbf16>
    %53 = vector.shape_cast %52 : vector<4x4x8x8xbf16> to vector<16x8x8xbf16>
    %54 = vector.extract_strided_slice %33 {offsets = [0, 0, 64], sizes = [4, 8, 8], strides = [1, 1, 1]} : vector<4x8x96xbf16> to vector<4x8x8xbf16>
    %55 = vector.extract_strided_slice %33 {offsets = [0, 0, 72], sizes = [4, 8, 8], strides = [1, 1, 1]} : vector<4x8x96xbf16> to vector<4x8x8xbf16>
    %56 = vector.extract_strided_slice %33 {offsets = [0, 0, 80], sizes = [4, 8, 8], strides = [1, 1, 1]} : vector<4x8x96xbf16> to vector<4x8x8xbf16>
    %57 = vector.extract_strided_slice %33 {offsets = [0, 0, 88], sizes = [4, 8, 8], strides = [1, 1, 1]} : vector<4x8x96xbf16> to vector<4x8x8xbf16>
    %58 = vector.shape_cast %54 : vector<4x8x8xbf16> to vector<4x1x8x8xbf16>
    %59 = vector.shape_cast %55 : vector<4x8x8xbf16> to vector<4x1x8x8xbf16>
    %60 = vector.shape_cast %56 : vector<4x8x8xbf16> to vector<4x1x8x8xbf16>
    %61 = vector.shape_cast %57 : vector<4x8x8xbf16> to vector<4x1x8x8xbf16>
    %62 = tpu.concatenate %58, %59, %60, %61 in 1 : vector<4x1x8x8xbf16>, vector<4x1x8x8xbf16>, vector<4x1x8x8xbf16>, vector<4x1x8x8xbf16> -> vector<4x4x8x8xbf16>
    %63 = vector.shape_cast %62 : vector<4x4x8x8xbf16> to vector<16x8x8xbf16>
    "tpu.trace_start"() <{level = 10 : i32, message = "bqd,bkd->bqk"}> : () -> ()
    %cst_15 = arith.constant dense<0.000000e+00> : vector<16x8x8xf32>
    %64 = tpu.matmul %43, %53, %cst_15 {dimension_numbers = #tpu.dot_dimension_numbers<[2], [2], [1], [1], [0, 0, 0, 1, 1, 1], [0], [0]>} : vector<16x8x8xbf16>, vector<16x8x8xbf16>, vector<16x8x8xf32> -> vector<16x8x8xf32>
    "tpu.trace_stop"() : () -> ()
    %c0_16 = arith.constant 0 : index
    %c0_17 = arith.constant 0 : index
    %c0_18 = arith.constant 0 : index
    %65 = vector.load %arg2[%c0_16, %c0_17, %c0_18] : memref<16x1x8xf32, #tpu.memory_space<vmem>>, vector<16x1x8xf32>
    %66 = vector.broadcast %65 : vector<16x1x8xf32> to vector<16x8x8xf32>
    %67 = arith.addf %64, %66 : vector<16x8x8xf32>
    %cst_19 = arith.constant dense<0xFF800000> : vector<16x8xf32>
    %68 = vector.multi_reduction <maximumf>, %67, %cst_19 [2] : vector<16x8x8xf32> to vector<16x8xf32>
    %69 = vector.shape_cast %68 : vector<16x8xf32> to vector<16x8x1xf32>
    %70 = vector.broadcast %69 : vector<16x8x1xf32> to vector<16x8x8xf32>
    %71 = arith.subf %67, %70 : vector<16x8x8xf32>
    %72 = math.exp %71 : vector<16x8x8xf32>
    %cst_20 = arith.constant dense<0.000000e+00> : vector<16x8xf32>
    %73 = vector.multi_reduction <add>, %72, %cst_20 [2] : vector<16x8x8xf32> to vector<16x8xf32>
    %74 = vector.shape_cast %73 : vector<16x8xf32> to vector<16x8x1xf32>
    %75 = tpu.reciprocal %74 {approx = true} : vector<16x8x1xf32> -> vector<16x8x1xf32>
    %76 = vector.broadcast %75 : vector<16x8x1xf32> to vector<16x8x8xf32>
    %77 = arith.mulf %72, %76 : vector<16x8x8xf32>
    %78 = arith.truncf %77 : vector<16x8x8xf32> to vector<16x8x8xbf16>
    "tpu.trace_start"() <{level = 10 : i32, message = "bqk,bkd->bqd"}> : () -> ()
    %cst_21 = arith.constant dense<0.000000e+00> : vector<16x8x8xf32>
    %79 = tpu.matmul %78, %63, %cst_21 {dimension_numbers = #tpu.dot_dimension_numbers<[2], [1], [1], [2], [0, 0, 0, 1, 1, 2], [0], [0]>} : vector<16x8x8xbf16>, vector<16x8x8xbf16>, vector<16x8x8xf32> -> vector<16x8x8xf32>
    "tpu.trace_stop"() : () -> ()
    %80 = arith.truncf %79 : vector<16x8x8xf32> to vector<16x8x8xbf16>
    %81 = vector.shape_cast %80 : vector<16x8x8xbf16> to vector<4x4x8x8xbf16>
    %82 = vector.extract_strided_slice %81 {offsets = [0, 0, 0, 0], sizes = [4, 1, 8, 8], strides = [1, 1, 1, 1]} : vector<4x4x8x8xbf16> to vector<4x1x8x8xbf16>
    %83 = vector.shape_cast %82 : vector<4x1x8x8xbf16> to vector<4x8x8xbf16>
    %c0_22 = arith.constant 0 : index
    %c0_23 = arith.constant 0 : index
    %c0_24 = arith.constant 0 : index
    %84 = vector.load %arg16[%c0_22, %c0_23, %c0_24] : memref<4x8x32xbf16, #tpu.memory_space<vmem>>, vector<4x8x8xbf16>
    tpu.vector_store %arg16[%c0_22, %c0_23, %c0_24], %83 {strides = array<i32>} : memref<4x8x32xbf16, #tpu.memory_space<vmem>>, vector<4x8x8xbf16>,
    %85 = vector.extract_strided_slice %81 {offsets = [0, 1, 0, 0], sizes = [4, 1, 8, 8], strides = [1, 1, 1, 1]} : vector<4x4x8x8xbf16> to vector<4x1x8x8xbf16>
    %86 = vector.shape_cast %85 : vector<4x1x8x8xbf16> to vector<4x8x8xbf16>
    %c0_25 = arith.constant 0 : index
    %c0_26 = arith.constant 0 : index
    %c8 = arith.constant 8 : index
    %87 = vector.load %arg16[%c0_25, %c0_26, %c8] : memref<4x8x32xbf16, #tpu.memory_space<vmem>>, vector<4x8x8xbf16>
    tpu.vector_store %arg16[%c0_25, %c0_26, %c8], %86 {strides = array<i32>} : memref<4x8x32xbf16, #tpu.memory_space<vmem>>, vector<4x8x8xbf16>,
    %88 = vector.extract_strided_slice %81 {offsets = [0, 2, 0, 0], sizes = [4, 1, 8, 8], strides = [1, 1, 1, 1]} : vector<4x4x8x8xbf16> to vector<4x1x8x8xbf16>
    %89 = vector.shape_cast %88 : vector<4x1x8x8xbf16> to vector<4x8x8xbf16>
    %c0_27 = arith.constant 0 : index
    %c0_28 = arith.constant 0 : index
    %c16 = arith.constant 16 : index
    %90 = vector.load %arg16[%c0_27, %c0_28, %c16] : memref<4x8x32xbf16, #tpu.memory_space<vmem>>, vector<4x8x8xbf16>
    tpu.vector_store %arg16[%c0_27, %c0_28, %c16], %89 {strides = array<i32>} : memref<4x8x32xbf16, #tpu.memory_space<vmem>>, vector<4x8x8xbf16>,
    %91 = vector.extract_strided_slice %81 {offsets = [0, 3, 0, 0], sizes = [4, 1, 8, 8], strides = [1, 1, 1, 1]} : vector<4x4x8x8xbf16> to vector<4x1x8x8xbf16>
    %92 = vector.shape_cast %91 : vector<4x1x8x8xbf16> to vector<4x8x8xbf16>
    %c0_29 = arith.constant 0 : index
    %c0_30 = arith.constant 0 : index
    %c24 = arith.constant 24 : index
    %93 = vector.load %arg16[%c0_29, %c0_30, %c24] : memref<4x8x32xbf16, #tpu.memory_space<vmem>>, vector<4x8x8xbf16>
    tpu.vector_store %arg16[%c0_29, %c0_30, %c24], %92 {strides = array<i32>} : memref<4x8x32xbf16, #tpu.memory_space<vmem>>, vector<4x8x8xbf16>,
    %c0_31 = arith.constant 0 : index
    %c0_32 = arith.constant 0 : index
    %c0_33 = arith.constant 0 : index
    %94 = vector.load %arg16[%c0_31, %c0_32, %c0_33] : memref<4x8x32xbf16, #tpu.memory_space<vmem>>, vector<4x8x32xbf16>
    %95 = vector.shape_cast %94 : vector<4x8x32xbf16> to vector<32x32xbf16>
    %c0_34 = arith.constant 0 : index
    %c0_35 = arith.constant 0 : index
    %96 = vector.load %arg7[%c0_34, %c0_35] : memref<32x32xbf16, #tpu.memory_space<vmem>>, vector<32x32xbf16>
    %cst_36 = arith.constant dense<0.000000e+00> : vector<32x32xf32>
    %97 = tpu.matmul %95, %96, %cst_36 {dimension_numbers = #tpu.dot_dimension_numbers<[1], [0], [0], [1], [0, 0, 1, 1], [], []>} : vector<32x32xbf16>, vector<32x32xbf16>, vector<32x32xf32> -> vector<32x32xf32>
    %c0_37 = arith.constant 0 : index
    %c0_38 = arith.constant 0 : index
    %98 = vector.load %arg8[%c0_37, %c0_38] : memref<1x32xf32, #tpu.memory_space<vmem>>, vector<1x32xf32>
    %99 = vector.broadcast %98 : vector<1x32xf32> to vector<32x32xf32>
    %100 = arith.addf %97, %99 : vector<32x32xf32>
    %101 = arith.addf %1, %100 : vector<32x32xf32>
    %c0_39 = arith.constant 0 : index
    %c0_40 = arith.constant 0 : index
    %102 = vector.load %arg9[%c0_39, %c0_40] : memref<1x32xf32, #tpu.memory_space<vmem>>, vector<1x32xf32>
    %c0_41 = arith.constant 0 : index
    %c0_42 = arith.constant 0 : index
    %103 = vector.load %arg10[%c0_41, %c0_42] : memref<1x32xf32, #tpu.memory_space<vmem>>, vector<1x32xf32>
    %cst_43 = arith.constant dense<0.000000e+00> : vector<32xf32>
    %104 = vector.multi_reduction <add>, %101, %cst_43 [1] : vector<32x32xf32> to vector<32xf32>
    %105 = vector.shape_cast %104 : vector<32xf32> to vector<32x1xf32>
    %cst_44 = arith.constant 3.200000e+01 : f32
    %106 = vector.broadcast %cst_44 : f32 to vector<32x1xf32>
    %107 = arith.divf %105, %106 : vector<32x1xf32>
    %108 = vector.broadcast %107 : vector<32x1xf32> to vector<32x32xf32>
    %109 = arith.subf %101, %108 : vector<32x32xf32>
    %110 = arith.mulf %109, %109 : vector<32x32xf32>
    %cst_45 = arith.constant dense<0.000000e+00> : vector<32xf32>
    %111 = vector.multi_reduction <add>, %110, %cst_45 [1] : vector<32x32xf32> to vector<32xf32>
    %112 = vector.shape_cast %111 : vector<32xf32> to vector<32x1xf32>
    %cst_46 = arith.constant 3.200000e+01 : f32
    %113 = vector.broadcast %cst_46 : f32 to vector<32x1xf32>
    %114 = arith.divf %112, %113 : vector<32x1xf32>
    %115 = vector.broadcast %107 : vector<32x1xf32> to vector<32x32xf32>
    %116 = arith.subf %101, %115 : vector<32x32xf32>
    %cst_47 = arith.constant 9.99999974E-6 : f32
    %117 = vector.broadcast %cst_47 : f32 to vector<32x1xf32>
    %118 = arith.addf %114, %117 : vector<32x1xf32>
    %119 = math.rsqrt %118 : vector<32x1xf32>
    %120 = vector.broadcast %119 : vector<32x1xf32> to vector<32x32xf32>
    %121 = arith.mulf %116, %120 : vector<32x32xf32>
    %122 = vector.broadcast %102 : vector<1x32xf32> to vector<32x32xf32>
    %123 = arith.mulf %121, %122 : vector<32x32xf32>
    %124 = vector.broadcast %103 : vector<1x32xf32> to vector<32x32xf32>
    %125 = arith.addf %123, %124 : vector<32x32xf32>
    %126 = arith.truncf %125 : vector<32x32xf32> to vector<32x32xbf16>
    %c0_48 = arith.constant 0 : index
    %c0_49 = arith.constant 0 : index
    %127 = vector.load %arg11[%c0_48, %c0_49] : memref<32x128xbf16, #tpu.memory_space<vmem>>, vector<32x128xbf16>
    %cst_50 = arith.constant dense<0.000000e+00> : vector<32x128xf32>
    %128 = tpu.matmul %126, %127, %cst_50 {dimension_numbers = #tpu.dot_dimension_numbers<[1], [0], [0], [1], [0, 0, 1, 1], [], []>} : vector<32x32xbf16>, vector<32x128xbf16>, vector<32x128xf32> -> vector<32x128xf32>
    %c0_51 = arith.constant 0 : index
    %c0_52 = arith.constant 0 : index
    %129 = vector.load %arg12[%c0_51, %c0_52] : memref<1x128xf32, #tpu.memory_space<vmem>>, vector<1x128xf32>
    %130 = vector.broadcast %129 : vector<1x128xf32> to vector<32x128xf32>
    %131 = arith.addf %128, %130 : vector<32x128xf32>
    %cst_53 = arith.constant 1.702000e+00 : f32
    %132 = vector.broadcast %cst_53 : f32 to vector<32x128xf32>
    %133 = arith.mulf %132, %131 : vector<32x128xf32>
    %134 = arith.negf %133 : vector<32x128xf32>
    %135 = math.exp %134 : vector<32x128xf32>
    %cst_54 = arith.constant 1.000000e+00 : f32
    %136 = vector.broadcast %cst_54 : f32 to vector<32x128xf32>
    %137 = arith.addf %136, %135 : vector<32x128xf32>
    %138 = arith.divf %136, %137 : vector<32x128xf32>
    %139 = arith.mulf %131, %138 : vector<32x128xf32>
    %140 = arith.truncf %139 : vector<32x128xf32> to vector<32x128xbf16>
    %c0_55 = arith.constant 0 : index
    %c0_56 = arith.constant 0 : index
    %141 = vector.load %arg13[%c0_55, %c0_56] : memref<128x32xbf16, #tpu.memory_space<vmem>>, vector<128x32xbf16>
    %cst_57 = arith.constant dense<0.000000e+00> : vector<32x32xf32>
    %142 = tpu.matmul %140, %141, %cst_57 {dimension_numbers = #tpu.dot_dimension_numbers<[1], [0], [0], [1], [0, 0, 1, 1], [], []>} : vector<32x128xbf16>, vector<128x32xbf16>, vector<32x32xf32> -> vector<32x32xf32>
    %c0_58 = arith.constant 0 : index
    %c0_59 = arith.constant 0 : index
    %143 = vector.load %arg14[%c0_58, %c0_59] : memref<1x32xf32, #tpu.memory_space<vmem>>, vector<1x32xf32>
    %144 = vector.broadcast %143 : vector<1x32xf32> to vector<32x32xf32>
    %145 = arith.addf %142, %144 : vector<32x32xf32>
    %146 = arith.addf %101, %145 : vector<32x32xf32>
    %147 = vector.shape_cast %146 : vector<32x32xf32> to vector<4x8x32xf32>
    %c0_60 = arith.constant 0 : index
    %c0_61 = arith.constant 0 : index
    %c0_62 = arith.constant 0 : index
    %148 = vector.load %arg15[%c0_60, %c0_61, %c0_62] : memref<4x8x32xf32, #tpu.memory_space<vmem>>, vector<4x8x32xf32>
    tpu.vector_store %arg15[%c0_60, %c0_61, %c0_62], %147 {strides = array<i32>} : memref<4x8x32xf32, #tpu.memory_space<vmem>>, vector<4x8x32xf32>,
    return
  }
  func.func @transform_0(%arg0: i32) -> (i32, i32, i32) {
    %c0_i32 = arith.constant 0 : i32
    %c0_i32_0 = arith.constant 0 : i32
    %c0_i32_1 = arith.constant 0 : i32
    return %arg0, %c0_i32, %c0_i32_0 : i32, i32, i32
  }
  func.func @transform_1(%arg0: i32) -> (i32, i32, i32) {
    %c0_i32 = arith.constant 0 : i32
    %c0_i32_0 = arith.constant 0 : i32
    %c0_i32_1 = arith.constant 0 : i32
    return %arg0, %c0_i32, %c0_i32_0 : i32, i32, i32
  }
  func.func @transform_2(%arg0: i32) -> (i32, i32) {
    %c0_i32 = arith.constant 0 : i32
    %c0_i32_0 = arith.constant 0 : i32
    %c0_i32_1 = arith.constant 0 : i32
    return %c0_i32, %c0_i32_0 : i32, i32
  }
  func.func @transform_3(%arg0: i32) -> (i32, i32) {
    %c0_i32 = arith.constant 0 : i32
    %c0_i32_0 = arith.constant 0 : i32
    %c0_i32_1 = arith.constant 0 : i32
    return %c0_i32, %c0_i32_0 : i32, i32
  }
  func.func @transform_4(%arg0: i32) -> (i32, i32) {
    %c0_i32 = arith.constant 0 : i32
    %c0_i32_0 = arith.constant 0 : i32
    %c0_i32_1 = arith.constant 0 : i32
    return %c0_i32, %c0_i32_0 : i32, i32
  }
  func.func @transform_5(%arg0: i32) -> (i32, i32) {
    %c0_i32 = arith.constant 0 : i32
    %c0_i32_0 = arith.constant 0 : i32
    %c0_i32_1 = arith.constant 0 : i32
    return %c0_i32, %c0_i32_0 : i32, i32
  }
  func.func @transform_6(%arg0: i32) -> (i32, i32) {
    %c0_i32 = arith.constant 0 : i32
    %c0_i32_0 = arith.constant 0 : i32
    %c0_i32_1 = arith.constant 0 : i32
    return %c0_i32, %c0_i32_0 : i32, i32
  }
  func.func @transform_7(%arg0: i32) -> (i32, i32) {
    %c0_i32 = arith.constant 0 : i32
    %c0_i32_0 = arith.constant 0 : i32
    %c0_i32_1 = arith.constant 0 : i32
    return %c0_i32, %c0_i32_0 : i32, i32
  }
  func.func @transform_8(%arg0: i32) -> (i32, i32) {
    %c0_i32 = arith.constant 0 : i32
    %c0_i32_0 = arith.constant 0 : i32
    %c0_i32_1 = arith.constant 0 : i32
    return %c0_i32, %c0_i32_0 : i32, i32
  }
  func.func @transform_9(%arg0: i32) -> (i32, i32) {
    %c0_i32 = arith.constant 0 : i32
    %c0_i32_0 = arith.constant 0 : i32
    %c0_i32_1 = arith.constant 0 : i32
    return %c0_i32, %c0_i32_0 : i32, i32
  }
  func.func @transform_10(%arg0: i32) -> (i32, i32) {
    %c0_i32 = arith.constant 0 : i32
    %c0_i32_0 = arith.constant 0 : i32
    %c0_i32_1 = arith.constant 0 : i32
    return %c0_i32, %c0_i32_0 : i32, i32
  }
  func.func @transform_11(%arg0: i32) -> (i32, i32) {
    %c0_i32 = arith.constant 0 : i32
    %c0_i32_0 = arith.constant 0 : i32
    %c0_i32_1 = arith.constant 0 : i32
    return %c0_i32, %c0_i32_0 : i32, i32
  }
  func.func @transform_12(%arg0: i32) -> (i32, i32) {
    %c0_i32 = arith.constant 0 : i32
    %c0_i32_0 = arith.constant 0 : i32
    %c0_i32_1 = arith.constant 0 : i32
    return %c0_i32, %c0_i32_0 : i32, i32
  }
  func.func @transform_13(%arg0: i32) -> (i32, i32) {
    %c0_i32 = arith.constant 0 : i32
    %c0_i32_0 = arith.constant 0 : i32
    %c0_i32_1 = arith.constant 0 : i32
    return %c0_i32, %c0_i32_0 : i32, i32
  }
  func.func @transform_14(%arg0: i32) -> (i32, i32, i32) {
    %c0_i32 = arith.constant 0 : i32
    %c0_i32_0 = arith.constant 0 : i32
    %c0_i32_1 = arith.constant 0 : i32
    return %arg0, %c0_i32, %c0_i32_0 : i32, i32, i32
  }
}

</mosaic_0001>

<llo_original>
// kernel: tpu_custom_call.1
$region0: #{tpu_custom_call.1}
  #allocation0 [shape = 'u32[]', space=smem, size = 0x4, offset = 0x4, fixed_abs, tag = 'smem constant byte address 0x4 - core index']
  #allocation1 [shape = 'u32[144,128]{1,0:T(1,128)}', space=vmem, size = 0x12000, scoped, tag = 'internal scratch']
  %s0 = inlined_call_operand.hbm [shape: f32[8,128], index: 0, kind: input, shape index: {}]
  %s1 = inlined_call_operand.hbm [shape: f32[8,128], index: 1, kind: output, shape index: {}]
  %s2 = sld [smem:[#allocation0]]
  $region18: #{tpu_custom_call.1} parent=0
    _
  %s4 = ssub.s32 1, %s2
  %s5 = scalar_select 0, %s4, %s2
  $region1: #{tpu_custom_call.1} parent=0
    #allocation2 [shape = 'u8[4096]{0}', space=vmem, size = 0x1000, scoped, tag = 'input window, operand 0, single buffered']
    #allocation3 [shape = 's32[1]{0}', space=sflag, size = 0x4, scoped, tag = 'scoped memory for tpu_custom_call.1']
    #allocation4 [shape = 's32[1]{0}', space=sflag, size = 0x4, scoped, tag = 'scoped memory for tpu_custom_call.1']
    #allocation5 [shape = 'u8[4096]{0}', space=vmem, size = 0x1000, scoped, tag = 'output window, operand 0, single buffered']
    %6 = vsyncpa [#allocation3], 0
    %7 = vsyncpa [#allocation4], 0
    // Predicated region
    $region2: #{tpu_custom_call.1} parent=1 // pred_check
      _
    $region3: #{tpu_custom_call.1} parent=1 // pred_check_branch
      %9 = sbr.rel (0) target = $region5
    $region4: #{tpu_custom_call.1} parent=1 // pred_region
      %s11 = ssub.s32 128, 128
      %12 = vsyncadd [#allocation3], %s11
      %s14 = sshll.u32 [#allocation2], 4
      %s15 = int_to_ptr.vmem [resolvable:$true] %s14
      %17 = dma.hbm_to_vmem [thread:$0]  %s0, 128, %s15, [#allocation3]
    $region5: #{tpu_custom_call.1} parent=1 // pred_fallthru
      _
    // Predicated region
    $region6: #{tpu_custom_call.1} parent=1 // pred_check
      _
    $region7: #{tpu_custom_call.1} parent=1 // pred_check_branch
      %19 = sbr.rel (0) target = $region9
    $region8: #{tpu_custom_call.1} parent=1 // pred_region
      %20 = dma.done [#allocation3], 128
    $region9: #{tpu_custom_call.1} parent=1 // pred_fallthru
      _
    %v21 = vld [vmem:[#allocation2] sm:$0xff]
    %v22 = vadd.f32 %v21, 1.0
    %23 = vst [vmem:[#allocation5] sm:$0xff] %v22
    // Predicated region
    $region10: #{tpu_custom_call.1} parent=1 // pred_check
      _
    $region11: #{tpu_custom_call.1} parent=1 // pred_check_branch
      %25 = sbr.rel (0) target = $region13
    $region12: #{tpu_custom_call.1} parent=1 // pred_region
      %s27 = ssub.s32 128, 128
      %28 = vsyncadd [#allocation4], %s27
      %s30 = sshll.u32 [#allocation5], 4
      %s31 = int_to_ptr.vmem [resolvable:$true] %s30
      %33 = dma.vmem_to_hbm [thread:$0]  %s31, 128, %s1, [#allocation4]
    $region13: #{tpu_custom_call.1} parent=1 // pred_fallthru
      _
    // Predicated region
    $region14: #{tpu_custom_call.1} parent=1 // pred_check
      _
    $region15: #{tpu_custom_call.1} parent=1 // pred_check_branch
      %35 = sbr.rel (0) target = $region17
    $region16: #{tpu_custom_call.1} parent=1 // pred_region
      %36 = dma.done [#allocation4], 128
    $region17: #{tpu_custom_call.1} parent=1 // pred_fallthru
      _
    %37 = vsyncpa [#allocation3], 1
    %38 = vsyncpa [#allocation4], 1

// kernel: tpu_custom_call.1
$region0: #{tpu_custom_call.1}
  #allocation0 [shape = 'u32[]', space=smem, size = 0x4, offset = 0x4, fixed_abs, tag = 'smem constant byte address 0x4 - core index']
  #allocation1 [shape = 'u32[144,128]{1,0:T(1,128)}', space=vmem, size = 0x12000, scoped, tag = 'internal scratch']
  #allocation2 [shape = 'bf16[4,8,32]{2,1,0:T(8,128)(2,1)}', space=vmem, size = 0x2000, scoped, tag = 'scratch operand']
  %s0 = inlined_call_operand.vmem [shape: f32[4,8,32], index: 0, kind: input, shape index: {}]
  %s1 = inlined_call_operand.vmem [shape: f32[16,1,8], index: 1, kind: input, shape index: {}]
  %s2 = inlined_call_operand.vmem [shape: f32[1,32], index: 2, kind: input, shape index: {}]
  %s3 = inlined_call_operand.vmem [shape: f32[1,32], index: 3, kind: input, shape index: {}]
  %s4 = inlined_call_operand.vmem [shape: bf16[32,96], index: 4, kind: input, shape index: {}]
  %s5 = inlined_call_operand.vmem [shape: f32[1,96], index: 5, kind: input, shape index: {}]
  %s6 = inlined_call_operand.vmem [shape: bf16[32,32], index: 6, kind: input, shape index: {}]
  %s7 = inlined_call_operand.vmem [shape: f32[1,32], index: 7, kind: input, shape index: {}]
  %s8 = inlined_call_operand.vmem [shape: f32[1,32], index: 8, kind: input, shape index: {}]
  %s9 = inlined_call_operand.vmem [shape: f32[1,32], index: 9, kind: input, shape index: {}]
  %s10 = inlined_call_operand.vmem [shape: bf16[32,128], index: 10, kind: input, shape index: {}]
  %s11 = inlined_call_operand.vmem [shape: f32[1,128], index: 11, kind: input, shape index: {}]
  %s12 = inlined_call_operand.vmem [shape: bf16[128,32], index: 12, kind: input, shape index: {}]
  %s13 = inlined_call_operand.vmem [shape: f32[1,32], index: 13, kind: input, shape index: {}]
  %s14 = inlined_call_operand.hbm [shape: f32[4,8,32], index: 14, kind: output, shape index: {}]
  %s15 = sld [smem:[#allocation0]]
  $region66: #{tpu_custom_call.1} parent=0
    _
  %s17 = ssub.s32 1, %s15
  %s18 = scalar_select 0, %s17, %s15
  $region1: #{tpu_custom_call.1} parent=0
    #allocation3 [shape = 'u8[16384]{0}', space=vmem, size = 0x4000, scoped, tag = 'output window, operand 0, single buffered']
    #allocation4 [shape = 's32[1]{0}', space=sflag, size = 0x4, scoped, tag = 'scoped memory for tpu_custom_call.1']
    %19 = vsyncpa [#allocation4], 0
    // Predicated region
    $region2: #{tpu_custom_call.1} parent=1 // pred_check
      _
    $region3: #{tpu_custom_call.1} parent=1 // pred_check_branch
      %21 = sbr.rel (0) target = $region5
    $region4: #{tpu_custom_call.1} parent=1 // pred_region
      _
    $region5: #{tpu_custom_call.1} parent=1 // pred_fallthru
      _
    // Predicated region
    $region6: #{tpu_custom_call.1} parent=1 // pred_check
      _
    $region7: #{tpu_custom_call.1} parent=1 // pred_check_branch
      %23 = sbr.rel (0) target = $region9
    $region8: #{tpu_custom_call.1} parent=1 // pred_region
      _
    $region9: #{tpu_custom_call.1} parent=1 // pred_fallthru
      _
    // Predicated region
    $region10: #{tpu_custom_call.1} parent=1 // pred_check
      _
    $region11: #{tpu_custom_call.1} parent=1 // pred_check_branch
      %25 = sbr.rel (0) target = $region13
    $region12: #{tpu_custom_call.1} parent=1 // pred_region
      _
    $region13: #{tpu_custom_call.1} parent=1 // pred_fallthru
      _
    // Predicated region
    $region14: #{tpu_custom_call.1} parent=1 // pred_check
      _
    $region15: #{tpu_custom_call.1} parent=1 // pred_check_branch
      %27 = sbr.rel (0) target = $region17
    $region16: #{tpu_custom_call.1} parent=1 // pred_region
      _
    $region17: #{tpu_custom_call.1} parent=1 // pred_fallthru
      _
    // Predicated region
    $region18: #{tpu_custom_call.1} parent=1 // pred_check
      _
    $region19: #{tpu_custom_call.1} parent=1 // pred_check_branch
      %29 = sbr.rel (0) target = $region21
    $region20: #{tpu_custom_call.1} parent=1 // pred_region
      _
    $region21: #{tpu_custom_call.1} parent=1 // pred_fallthru
      _
    // Predicated region
    $region22: #{tpu_custom_call.1} parent=1 // pred_check
      _
    $region23: #{tpu_custom_call.1} parent=1 // pred_check_branch
      %31 = sbr.rel (0) target = $region25
    $region24: #{tpu_custom_call.1} parent=1 // pred_region
      _
    $region25: #{tpu_custom_call.1} parent=1 // pred_fallthru
      _
    // Predicated region
    $region26: #{tpu_custom_call.1} parent=1 // pred_check
      _
    $region27: #{tpu_custom_call.1} parent=1 // pred_check_branch
      %33 = sbr.rel (0) target = $region29
    $region28: #{tpu_custom_call.1} parent=1 // pred_region
      _
    $region29: #{tpu_custom_call.1} parent=1 // pred_fallthru
      _
    // Predicated region
    $region30: #{tpu_custom_call.1} parent=1 // pred_check
      _
    $region31: #{tpu_custom_call.1} parent=1 // pred_check_branch
      %35 = sbr.rel (0) target = $region33
    $region32: #{tpu_custom_call.1} parent=1 // pred_region
      _
    $region33: #{tpu_custom_call.1} parent=1 // pred_fallthru
      _
    // Predicated region
    $region34: #{tpu_custom_call.1} parent=1 // pred_check
      _
    $region35: #{tpu_custom_call.1} parent=1 // pred_check_branch
      %37 = sbr.rel (0) target = $region37
    $region36: #{tpu_custom_call.1} parent=1 // pred_region
      _
    $region37: #{tpu_custom_call.1} parent=1 // pred_fallthru
      _
    // Predicated region
    $region38: #{tpu_custom_call.1} parent=1 // pred_check
      _
    $region39: #{tpu_custom_call.1} parent=1 // pred_check_branch
      %39 = sbr.rel (0) target = $region41
    $region40: #{tpu_custom_call.1} parent=1 // pred_region
      _
    $region41: #{tpu_custom_call.1} parent=1 // pred_fallthru
      _
    // Predicated region
    $region42: #{tpu_custom_call.1} parent=1 // pred_check
      _
    $region43: #{tpu_custom_call.1} parent=1 // pred_check_branch
      %41 = sbr.rel (0) target = $region45
    $region44: #{tpu_custom_call.1} parent=1 // pred_region
      _
    $region45: #{tpu_custom_call.1} parent=1 // pred_fallthru
      _
    // Predicated region
    $region46: #{tpu_custom_call.1} parent=1 // pred_check
      _
    $region47: #{tpu_custom_call.1} parent=1 // pred_check_branch
      %43 = sbr.rel (0) target = $region49
    $region48: #{tpu_custom_call.1} parent=1 // pred_region
      _
    $region49: #{tpu_custom_call.1} parent=1 // pred_fallthru
      _
    // Predicated region
    $region50: #{tpu_custom_call.1} parent=1 // pred_check
      _
    $region51: #{tpu_custom_call.1} parent=1 // pred_check_branch
      %45 = sbr.rel (0) target = $region53
    $region52: #{tpu_custom_call.1} parent=1 // pred_region
      _
    $region53: #{tpu_custom_call.1} parent=1 // pred_fallthru
      _
    // Predicated region
    $region54: #{tpu_custom_call.1} parent=1 // pred_check
      _
    $region55: #{tpu_custom_call.1} parent=1 // pred_check_branch
      %47 = sbr.rel (0) target = $region57
    $region56: #{tpu_custom_call.1} parent=1 // pred_region
      _
    $region57: #{tpu_custom_call.1} parent=1 // pred_fallthru
      _
    %v49 = vld [vmem:[%s0] sm:$0xff]
    %v50 = vld [vmem:[%s0 + $0x8] sm:$0xff]
    %v51 = vld [vmem:[%s0 + $0x10] sm:$0xff]
    %v52 = vld [vmem:[%s0 + $0x18] sm:$0xff]
    %v53 = vld [vmem:[%s2] sm:$0x1]
    %v54 = vld [vmem:[%s3] sm:$0x1]
    %vm55 = vcmask 261120
    %v56 = vsel %vm55, %v49, 0.0
    %57 = vadd.xlane.f32.xlu0 %v56
    %v58 = vpop.xlane.xlu0 %57
    %v59 = vsel %vm55, %v50, 0.0
    %60 = vadd.xlane.f32.xlu0 %v59
    %v61 = vpop.xlane.xlu0 %60
    %v62 = vsel %vm55, %v51, 0.0
    %63 = vadd.xlane.f32.xlu0 %v62
    %v64 = vpop.xlane.xlu0 %63
    %v65 = vsel %vm55, %v52, 0.0
    %66 = vadd.xlane.f32.xlu0 %v65
    %v67 = vpop.xlane.xlu0 %66
    %v68 = vrcp.pop 32.0
    %v69 = vmul.f32 %v58, %v68
    %v70 = vmul.f32 %v61, %v68
    %v71 = vmul.f32 %v64, %v68
    %v72 = vmul.f32 %v67, %v68
    %v73 = vsub.f32 %v49, %v69
    %v74 = vsub.f32 %v50, %v70
    %v75 = vsub.f32 %v51, %v71
    %v76 = vsub.f32 %v52, %v72
    %v77 = vmul.f32 %v73, %v73
    %v78 = vmul.f32 %v74, %v74
    %v79 = vmul.f32 %v75, %v75
    %v80 = vmul.f32 %v76, %v76
    %v81 = vsel %vm55, %v77, 0.0
    %82 = vadd.xlane.f32.xlu0 %v81
    %v83 = vpop.xlane.xlu0 %82
    %v84 = vsel %vm55, %v78, 0.0
    %85 = vadd.xlane.f32.xlu0 %v84
    %v86 = vpop.xlane.xlu0 %85
    %v87 = vsel %vm55, %v79, 0.0
    %88 = vadd.xlane.f32.xlu0 %v87
    %v89 = vpop.xlane.xlu0 %88
    %v90 = vsel %vm55, %v80, 0.0
    %91 = vadd.xlane.f32.xlu0 %v90
    %v92 = vpop.xlane.xlu0 %91
    %v93 = vmul.f32 %v83, %v68
    %v94 = vmul.f32 %v86, %v68
    %v95 = vmul.f32 %v89, %v68
    %v96 = vmul.f32 %v92, %v68
    %v97 = vadd.f32 %v93, 1e-05
    %v98 = vadd.f32 %v94, 1e-05
    %v99 = vadd.f32 %v95, 1e-05
    %v100 = vadd.f32 %v96, 1e-05
    %v101 = vrsqrt.pop %v97
    %v102 = vrsqrt.pop %v98
    %v103 = vrsqrt.pop %v99
    %v104 = vrsqrt.pop %v100
    %v105 = vmul.f32 %v73, %v101
    %v106 = vmul.f32 %v74, %v102
    %v107 = vmul.f32 %v75, %v103
    %v108 = vmul.f32 %v76, %v104
    %v110 = vlaneseq
    %v111 = vshrl.u32 %v110, 7
    %v112 = vsub.s32 0, %v111
    %v113 = vrot.slane %v53, %v112
    %v115 = vmul.f32 %v105, %v113
    %v116 = vmul.f32 %v106, %v113
    %v117 = vmul.f32 %v107, %v113
    %v118 = vmul.f32 %v108, %v113
    %v120 = vlaneseq
    %v121 = vshrl.u32 %v120, 7
    %v122 = vsub.s32 0, %v121
    %v123 = vrot.slane %v54, %v122
    %v125 = vadd.f32 %v115, %v123
    %v126 = vadd.f32 %v116, %v123
    %v127 = vadd.f32 %v117, %v123
    %v128 = vadd.f32 %v118, %v123
    %v129 = vpack.c.bf16 %v126, %v125
    %v130 = vpack.c.bf16 %v128, %v127
    %v131 = vld [vmem:[%s4] sm:$0xf]
    %v132 = vld [vmem:[%s4 + $0x4] sm:$0xf]
    %v133 = vld [vmem:[%s4 + $0x8] sm:$0xf]
    %v134 = vld [vmem:[%s4 + $0xc] sm:$0xf]
    %v135 = vld [vmem:[%s5] sm:$0x1]
    %v137 = vlaneseq
    %v138 = vshrl.u32 %v137, 7
    %v139 = vsub.s32 0, %v138
    %v140 = vrot.slane %v135, %v139
    %v146 = vunpack.c.l.b16 %v131
    %v147 = vunpack.c.l.b16 %v132
    %v148 = vunpack.c.l.b16 %v133
    %v149 = vunpack.c.l.b16 %v134
    %v150 = vpack.c.b16 %v147, %v146
    %v151 = vpack.c.b16 %v149, %v148
    %v155 = vsel %vm55, %v129, 0
    %v158 = vsel %vm55, %v130, 0
    %160 = vmatprep.subr.bf16.mxu0 0
    %161 = vmatpush1.bf16.msra.mxu0 %v150
    %162 = vmatprep.subr.bf16.mxu0 0
    %163 = vmatpush1.bf16.msra.mxu0 %v151
    %164 = vmatprep.subr.bf16.mxu0 0
    %165 = vmatpush1.bf16.msra.mxu0 0
    %166 = vmatprep.subr.bf16.mxu0 0
    %167 = vmatpush1.bf16.msra.mxu0 0
    %168 = vmatprep.subr.bf16.mxu0 0
    %169 = vmatpush1.bf16.msra.mxu0 0
    %170 = vmatprep.subr.bf16.mxu0 0
    %171 = vmatpush1.bf16.msra.mxu0 0
    %172 = vmatprep.subr.bf16.mxu0 0
    %173 = vmatpush1.bf16.msra.mxu0 0
    %174 = vmatprep.subr.bf16.mxu0 0
    %175 = vmatpush1.bf16.msra.mxu0 0
    %176 = vmatprep.subr.bf16.mxu0 0
    %177 = vmatpush1.bf16.msra.mxu0 0
    %178 = vmatprep.subr.bf16.mxu0 0
    %179 = vmatpush1.bf16.msra.mxu0 0
    %180 = vmatprep.subr.bf16.mxu0 0
    %181 = vmatpush1.bf16.msra.mxu0 0
    %182 = vmatprep.subr.bf16.mxu0 0
    %183 = vmatpush1.bf16.msra.mxu0 0
    %184 = vmatprep.subr.bf16.mxu0 0
    %185 = vmatpush1.bf16.msra.mxu0 0
    %186 = vmatprep.subr.bf16.mxu0 0
    %187 = vmatpush1.bf16.msra.mxu0 0
    %188 = vmatprep.subr.bf16.mxu0 0
    %189 = vmatpush1.bf16.msra.mxu0 0
    %190 = vmatprep.subr.bf16.mxu0 0
    %191 = vmatpush1.bf16.msra.mxu0 0
    %192 = vmatprep.mubr.bf16.mxu0 0
    %193 = vmatmul.mubr.bf16.gmra.mrb[0].mxu0 %v155
    %v194 = vpop.f32.mrb[0].mxu0
    %v195 = vadd.f32 %v140, %v194
    %v196 = vpop.f32.mrb[0].mxu0
    %v197 = vpop.f32.mrb[0].mxu0
    %v198 = vadd.f32 %v140, %v197
    %v199 = vpop.f32.mrb[0].mxu0
    %200 = vmatprep.mubr.bf16.mxu0 0
    %201 = vmatmul.mubr.bf16.gmra.mrb[0].mxu0 %v158
    %v202 = vpop.f32.mrb[0].mxu0
    %v203 = vadd.f32 %v140, %v202
    %v204 = vpop.f32.mrb[0].mxu0
    %v205 = vpop.f32.mrb[0].mxu0
    %v206 = vadd.f32 %v140, %v205
    %v207 = vpop.f32.mrb[0].mxu0
    %208 = vdwg.mxu0
    %v209 = vpack.c.bf16 %v198, %v195
    %v210 = vpack.c.bf16 %v206, %v203
    %v213 = vunpack.c.l.b16 %v209
    %v214 = vunpack.c.h.b16 %v209
    %v215 = vunpack.c.l.b16 %v210
    %v216 = vunpack.c.h.b16 %v210
    %v217 = vpack.c.b16 %v213, %v213
    %v218 = vpack.c.b16 %v214, %v214
    %v219 = vpack.c.b16 %v215, %v215
    %v220 = vpack.c.b16 %v216, %v216
    %221 = vrot.lane.b32.xlu0 %v217, 120
    %v222 = vpop.permute.xlu0 %221
    %223 = vrot.lane.b32.xlu0 %v218, 120
    %v224 = vpop.permute.xlu0 %223
    %225 = vrot.lane.b32.xlu0 %v219, 120
    %v226 = vpop.permute.xlu0 %225
    %227 = vrot.lane.b32.xlu0 %v220, 120
    %v228 = vpop.permute.xlu0 %227
    %229 = vrot.lane.b32.xlu0 %v217, 112
    %v230 = vpop.permute.xlu0 %229
    %231 = vrot.lane.b32.xlu0 %v218, 112
    %v232 = vpop.permute.xlu0 %231
    %233 = vrot.lane.b32.xlu0 %v219, 112
    %v234 = vpop.permute.xlu0 %233
    %235 = vrot.lane.b32.xlu0 %v220, 112
    %v236 = vpop.permute.xlu0 %235
    %237 = vrot.lane.b32.xlu0 %v217, 104
    %v238 = vpop.permute.xlu0 %237
    %239 = vrot.lane.b32.xlu0 %v218, 104
    %v240 = vpop.permute.xlu0 %239
    %241 = vrot.lane.b32.xlu0 %v219, 104
    %v242 = vpop.permute.xlu0 %241
    %243 = vrot.lane.b32.xlu0 %v220, 104
    %v244 = vpop.permute.xlu0 %243
    %v245 = vld [vmem:[%s1] sm:$0x1]
    %v246 = vld [vmem:[%s1 + $0x1] sm:$0x1]
    %v247 = vld [vmem:[%s1 + $0x2] sm:$0x1]
    %v248 = vld [vmem:[%s1 + $0x3] sm:$0x1]
    %v249 = vld [vmem:[%s1 + $0x4] sm:$0x1]
    %v250 = vld [vmem:[%s1 + $0x5] sm:$0x1]
    %v251 = vld [vmem:[%s1 + $0x6] sm:$0x1]
    %v252 = vld [vmem:[%s1 + $0x7] sm:$0x1]
    %v253 = vld [vmem:[%s1 + $0x8] sm:$0x1]
    %v254 = vld [vmem:[%s1 + $0x9] sm:$0x1]
    %v255 = vld [vmem:[%s1 + $0xa] sm:$0x1]
    %v256 = vld [vmem:[%s1 + $0xb] sm:$0x1]
    %v257 = vld [vmem:[%s1 + $0xc] sm:$0x1]
    %v258 = vld [vmem:[%s1 + $0xd] sm:$0x1]
    %v259 = vld [vmem:[%s1 + $0xe] sm:$0x1]
    %v260 = vld [vmem:[%s1 + $0xf] sm:$0x1]
    %v277 = vlaneseq
    %v278 = vshrl.u32 %v277, 7
    %v279 = vsub.s32 0, %v278
    %v280 = vrot.slane %v245, %v279
    %v281 = vlaneseq
    %v282 = vshrl.u32 %v281, 7
    %v283 = vsub.s32 0, %v282
    %v284 = vrot.slane %v246, %v283
    %v285 = vlaneseq
    %v286 = vshrl.u32 %v285, 7
    %v287 = vsub.s32 0, %v286
    %v288 = vrot.slane %v247, %v287
    %v289 = vlaneseq
    %v290 = vshrl.u32 %v289, 7
    %v291 = vsub.s32 0, %v290
    %v292 = vrot.slane %v248, %v291
    %v293 = vlaneseq
    %v294 = vshrl.u32 %v293, 7
    %v295 = vsub.s32 0, %v294
    %v296 = vrot.slane %v249, %v295
    %v297 = vlaneseq
    %v298 = vshrl.u32 %v297, 7
    %v299 = vsub.s32 0, %v298
    %v300 = vrot.slane %v250, %v299
    %v301 = vlaneseq
    %v302 = vshrl.u32 %v301, 7
    %v303 = vsub.s32 0, %v302
    %v304 = vrot.slane %v251, %v303
    %v305 = vlaneseq
    %v306 = vshrl.u32 %v305, 7
    %v307 = vsub.s32 0, %v306
    %v308 = vrot.slane %v252, %v307
    %v309 = vlaneseq
    %v310 = vshrl.u32 %v309, 7
    %v311 = vsub.s32 0, %v310
    %v312 = vrot.slane %v253, %v311
    %v313 = vlaneseq
    %v314 = vshrl.u32 %v313, 7
    %v315 = vsub.s32 0, %v314
    %v316 = vrot.slane %v254, %v315
    %v317 = vlaneseq
    %v318 = vshrl.u32 %v317, 7
    %v319 = vsub.s32 0, %v318
    %v320 = vrot.slane %v255, %v319
    %v321 = vlaneseq
    %v322 = vshrl.u32 %v321, 7
    %v323 = vsub.s32 0, %v322
    %v324 = vrot.slane %v256, %v323
    %v325 = vlaneseq
    %v326 = vshrl.u32 %v325, 7
    %v327 = vsub.s32 0, %v326
    %v328 = vrot.slane %v257, %v327
    %v329 = vlaneseq
    %v330 = vshrl.u32 %v329, 7
    %v331 = vsub.s32 0, %v330
    %v332 = vrot.slane %v258, %v331
    %v333 = vlaneseq
    %v334 = vshrl.u32 %v333, 7
    %v335 = vsub.s32 0, %v334
    %v336 = vrot.slane %v259, %v335
    %v337 = vlaneseq
    %v338 = vshrl.u32 %v337, 7
    %v339 = vsub.s32 0, %v338
    %v340 = vrot.slane %v260, %v339
    %357 = vrot.lane.b32.xlu0 %v217, 96
    %v358 = vpop.permute.xlu0 %357
    %vm359 = vcmask 64512
    %v361 = vsel %vm359, %v217, 0
    %v364 = vsel %vm359, %v358, 0
    %366 = vmatprep.subr.bf16.mxu0 0
    %367 = vmatpush1.bf16.xpose.msra.mxu0 %v364
    %368 = vmatprep.subr.bf16.mxu0 0
    %369 = vmatpush1.bf16.xpose.msra.mxu0 0
    %370 = vmatprep.subr.bf16.mxu0 0
    %371 = vmatpush1.bf16.xpose.msra.mxu0 0
    %372 = vmatprep.subr.bf16.mxu0 0
    %373 = vmatpush1.bf16.xpose.msra.mxu0 0
    %374 = vmatprep.subr.bf16.mxu0 0
    %375 = vmatpush1.bf16.xpose.msra.mxu0 0
    %376 = vmatprep.subr.bf16.mxu0 0
    %377 = vmatpush1.bf16.xpose.msra.mxu0 0
    %378 = vmatprep.subr.bf16.mxu0 0
    %379 = vmatpush1.bf16.xpose.msra.mxu0 0
    %380 = vmatprep.subr.bf16.mxu0 0
    %381 = vmatpush1.bf16.xpose.msra.mxu0 0
    %382 = vmatprep.subr.bf16.mxu0 0
    %383 = vmatpush1.bf16.xpose.msra.mxu0 0
    %384 = vmatprep.subr.bf16.mxu0 0
    %385 = vmatpush1.bf16.xpose.msra.mxu0 0
    %386 = vmatprep.subr.bf16.mxu0 0
    %387 = vmatpush1.bf16.xpose.msra.mxu0 0
    %388 = vmatprep.subr.bf16.mxu0 0
    %389 = vmatpush1.bf16.xpose.msra.mxu0 0
    %390 = vmatprep.subr.bf16.mxu0 0
    %391 = vmatpush1.bf16.xpose.msra.mxu0 0
    %392 = vmatprep.subr.bf16.mxu0 0
    %393 = vmatpush1.bf16.xpose.msra.mxu0 0
    %394 = vmatprep.subr.bf16.mxu0 0
    %395 = vmatpush1.bf16.xpose.msra.mxu0 0
    %396 = vmatprep.subr.bf16.mxu0 0
    %397 = vmatpush1.bf16.xpose.msra.mxu0 0
    %398 = vmatprep.mubr.bf16.mxu0 0
    %399 = vmatmul.mubr.bf16.gmra.mrb[0].mxu0 %v361
    %v400 = vpop.f32.mrb[0].mxu0
    %v401 = vadd.f32 %v280, %v400
    %v402 = vpop.f32.mrb[0].mxu0
    %v403 = vpop.f32.mrb[0].mxu0
    %v404 = vpop.f32.mrb[0].mxu0
    %405 = vdwg.mxu0
    %v406 = vunpack.c.l.b16 %v222
    %v407 = vpack.c.b16 %v406, %v406
    %408 = vrot.lane.b32.xlu0 %v407, 96
    %v409 = vpop.permute.xlu0 %408
    %v411 = vsel %vm359, %v222, 0
    %v414 = vsel %vm359, %v409, 0
    %416 = vmatprep.subr.bf16.mxu0 0
    %417 = vmatpush1.bf16.xpose.msra.mxu0 %v414
    %418 = vmatprep.subr.bf16.mxu0 0
    %419 = vmatpush1.bf16.xpose.msra.mxu0 0
    %420 = vmatprep.subr.bf16.mxu0 0
    %421 = vmatpush1.bf16.xpose.msra.mxu0 0
    %422 = vmatprep.subr.bf16.mxu0 0
    %423 = vmatpush1.bf16.xpose.msra.mxu0 0
    %424 = vmatprep.subr.bf16.mxu0 0
    %425 = vmatpush1.bf16.xpose.msra.mxu0 0
    %426 = vmatprep.subr.bf16.mxu0 0
    %427 = vmatpush1.bf16.xpose.msra.mxu0 0
    %428 = vmatprep.subr.bf16.mxu0 0
    %429 = vmatpush1.bf16.xpose.msra.mxu0 0
    %430 = vmatprep.subr.bf16.mxu0 0
    %431 = vmatpush1.bf16.xpose.msra.mxu0 0
    %432 = vmatprep.subr.bf16.mxu0 0
    %433 = vmatpush1.bf16.xpose.msra.mxu0 0
    %434 = vmatprep.subr.bf16.mxu0 0
    %435 = vmatpush1.bf16.xpose.msra.mxu0 0
    %436 = vmatprep.subr.bf16.mxu0 0
    %437 = vmatpush1.bf16.xpose.msra.mxu0 0
    %438 = vmatprep.subr.bf16.mxu0 0
    %439 = vmatpush1.bf16.xpose.msra.mxu0 0
    %440 = vmatprep.subr.bf16.mxu0 0
    %441 = vmatpush1.bf16.xpose.msra.mxu0 0
    %442 = vmatprep.subr.bf16.mxu0 0
    %443 = vmatpush1.bf16.xpose.msra.mxu0 0
    %444 = vmatprep.subr.bf16.mxu0 0
    %445 = vmatpush1.bf16.xpose.msra.mxu0 0
    %446 = vmatprep.subr.bf16.mxu0 0
    %447 = vmatpush1.bf16.xpose.msra.mxu0 0
    %448 = vmatprep.mubr.bf16.mxu0 0
    %449 = vmatmul.mubr.bf16.gmra.mrb[0].mxu0 %v411
    %v450 = vpop.f32.mrb[0].mxu0
    %v451 = vadd.f32 %v284, %v450
    %v452 = vpop.f32.mrb[0].mxu0
    %v453 = vpop.f32.mrb[0].mxu0
    %v454 = vpop.f32.mrb[0].mxu0
    %455 = vdwg.mxu0
    %v456 = vunpack.c.l.b16 %v230
    %v457 = vpack.c.b16 %v456, %v456
    %458 = vrot.lane.b32.xlu0 %v457, 96
    %v459 = vpop.permute.xlu0 %458
    %v461 = vsel %vm359, %v230, 0
    %v464 = vsel %vm359, %v459, 0
    %466 = vmatprep.subr.bf16.mxu0 0
    %467 = vmatpush1.bf16.xpose.msra.mxu0 %v464
    %468 = vmatprep.subr.bf16.mxu0 0
    %469 = vmatpush1.bf16.xpose.msra.mxu0 0
    %470 = vmatprep.subr.bf16.mxu0 0
    %471 = vmatpush1.bf16.xpose.msra.mxu0 0
    %472 = vmatprep.subr.bf16.mxu0 0
    %473 = vmatpush1.bf16.xpose.msra.mxu0 0
    %474 = vmatprep.subr.bf16.mxu0 0
    %475 = vmatpush1.bf16.xpose.msra.mxu0 0
    %476 = vmatprep.subr.bf16.mxu0 0
    %477 = vmatpush1.bf16.xpose.msra.mxu0 0
    %478 = vmatprep.subr.bf16.mxu0 0
    %479 = vmatpush1.bf16.xpose.msra.mxu0 0
    %480 = vmatprep.subr.bf16.mxu0 0
    %481 = vmatpush1.bf16.xpose.msra.mxu0 0
    %482 = vmatprep.subr.bf16.mxu0 0
    %483 = vmatpush1.bf16.xpose.msra.mxu0 0
    %484 = vmatprep.subr.bf16.mxu0 0
    %485 = vmatpush1.bf16.xpose.msra.mxu0 0
    %486 = vmatprep.subr.bf16.mxu0 0
    %487 = vmatpush1.bf16.xpose.msra.mxu0 0
    %488 = vmatprep.subr.bf16.mxu0 0
    %489 = vmatpush1.bf16.xpose.msra.mxu0 0
    %490 = vmatprep.subr.bf16.mxu0 0
    %491 = vmatpush1.bf16.xpose.msra.mxu0 0
    %492 = vmatprep.subr.bf16.mxu0 0
    %493 = vmatpush1.bf16.xpose.msra.mxu0 0
    %494 = vmatprep.subr.bf16.mxu0 0
    %495 = vmatpush1.bf16.xpose.msra.mxu0 0
    %496 = vmatprep.subr.bf16.mxu0 0
    %497 = vmatpush1.bf16.xpose.msra.mxu0 0
    %498 = vmatprep.mubr.bf16.mxu0 0
    %499 = vmatmul.mubr.bf16.gmra.mrb[0].mxu0 %v461
    %v500 = vpop.f32.mrb[0].mxu0
    %v501 = vadd.f32 %v288, %v500
    %v502 = vpop.f32.mrb[0].mxu0
    %v503 = vpop.f32.mrb[0].mxu0
    %v504 = vpop.f32.mrb[0].mxu0
    %505 = vdwg.mxu0
    %v506 = vunpack.c.l.b16 %v238
    %v507 = vpack.c.b16 %v506, %v506
    %508 = vrot.lane.b32.xlu0 %v507, 96
    %v509 = vpop.permute.xlu0 %508
    %v511 = vsel %vm359, %v238, 0
    %v514 = vsel %vm359, %v509, 0
    %516 = vmatprep.subr.bf16.mxu0 0
    %517 = vmatpush1.bf16.xpose.msra.mxu0 %v514
    %518 = vmatprep.subr.bf16.mxu0 0
    %519 = vmatpush1.bf16.xpose.msra.mxu0 0
    %520 = vmatprep.subr.bf16.mxu0 0
    %521 = vmatpush1.bf16.xpose.msra.mxu0 0
    %522 = vmatprep.subr.bf16.mxu0 0
    %523 = vmatpush1.bf16.xpose.msra.mxu0 0
    %524 = vmatprep.subr.bf16.mxu0 0
    %525 = vmatpush1.bf16.xpose.msra.mxu0 0
    %526 = vmatprep.subr.bf16.mxu0 0
    %527 = vmatpush1.bf16.xpose.msra.mxu0 0
    %528 = vmatprep.subr.bf16.mxu0 0
    %529 = vmatpush1.bf16.xpose.msra.mxu0 0
    %530 = vmatprep.subr.bf16.mxu0 0
    %531 = vmatpush1.bf16.xpose.msra.mxu0 0
    %532 = vmatprep.subr.bf16.mxu0 0
    %533 = vmatpush1.bf16.xpose.msra.mxu0 0
    %534 = vmatprep.subr.bf16.mxu0 0
    %535 = vmatpush1.bf16.xpose.msra.mxu0 0
    %536 = vmatprep.subr.bf16.mxu0 0
    %537 = vmatpush1.bf16.xpose.msra.mxu0 0
    %538 = vmatprep.subr.bf16.mxu0 0
    %539 = vmatpush1.bf16.xpose.msra.mxu0 0
    %540 = vmatprep.subr.bf16.mxu0 0
    %541 = vmatpush1.bf16.xpose.msra.mxu0 0
    %542 = vmatprep.subr.bf16.mxu0 0
    %543 = vmatpush1.bf16.xpose.msra.mxu0 0
    %544 = vmatprep.subr.bf16.mxu0 0
    %545 = vmatpush1.bf16.xpose.msra.mxu0 0
    %546 = vmatprep.subr.bf16.mxu0 0
    %547 = vmatpush1.bf16.xpose.msra.mxu0 0
    %548 = vmatprep.mubr.bf16.mxu0 0
    %549 = vmatmul.mubr.bf16.gmra.mrb[0].mxu0 %v511
    %v550 = vpop.f32.mrb[0].mxu0
    %v551 = vadd.f32 %v292, %v550
    %v552 = vpop.f32.mrb[0].mxu0
    %v553 = vpop.f32.mrb[0].mxu0
    %v554 = vpop.f32.mrb[0].mxu0
    %555 = vdwg.mxu0
    %556 = vrot.lane.b32.xlu0 %v218, 96
    %v557 = vpop.permute.xlu0 %556
    %v559 = vsel %vm359, %v218, 0
    %v562 = vsel %vm359, %v557, 0
    %564 = vmatprep.subr.bf16.mxu0 0
    %565 = vmatpush1.bf16.xpose.msra.mxu0 %v562
    %566 = vmatprep.subr.bf16.mxu0 0
    %567 = vmatpush1.bf16.xpose.msra.mxu0 0
    %568 = vmatprep.subr.bf16.mxu0 0
    %569 = vmatpush1.bf16.xpose.msra.mxu0 0
    %570 = vmatprep.subr.bf16.mxu0 0
    %571 = vmatpush1.bf16.xpose.msra.mxu0 0
    %572 = vmatprep.subr.bf16.mxu0 0
    %573 = vmatpush1.bf16.xpose.msra.mxu0 0
    %574 = vmatprep.subr.bf16.mxu0 0
    %575 = vmatpush1.bf16.xpose.msra.mxu0 0
    %576 = vmatprep.subr.bf16.mxu0 0
    %577 = vmatpush1.bf16.xpose.msra.mxu0 0
    %578 = vmatprep.subr.bf16.mxu0 0
    %579 = vmatpush1.bf16.xpose.msra.mxu0 0
    %580 = vmatprep.subr.bf16.mxu0 0
    %581 = vmatpush1.bf16.xpose.msra.mxu0 0
    %582 = vmatprep.subr.bf16.mxu0 0
    %583 = vmatpush1.bf16.xpose.msra.mxu0 0
    %584 = vmatprep.subr.bf16.mxu0 0
    %585 = vmatpush1.bf16.xpose.msra.mxu0 0
    %586 = vmatprep.subr.bf16.mxu0 0
    %587 = vmatpush1.bf16.xpose.msra.mxu0 0
    %588 = vmatprep.subr.bf16.mxu0 0
    %589 = vmatpush1.bf16.xpose.msra.mxu0 0
    %590 = vmatprep.subr.bf16.mxu0 0
    %591 = vmatpush1.bf16.xpose.msra.mxu0 0
    %592 = vmatprep.subr.bf16.mxu0 0
    %593 = vmatpush1.bf16.xpose.msra.mxu0 0
    %594 = vmatprep.subr.bf16.mxu0 0
    %595 = vmatpush1.bf16.xpose.msra.mxu0 0
    %596 = vmatprep.mubr.bf16.mxu0 0
    %597 = vmatmul.mubr.bf16.gmra.mrb[0].mxu0 %v559
    %v598 = vpop.f32.mrb[0].mxu0
    %v599 = vadd.f32 %v296, %v598
    %v600 = vpop.f32.mrb[0].mxu0
    %v601 = vpop.f32.mrb[0].mxu0
    %v602 = vpop.f32.mrb[0].mxu0
    %603 = vdwg.mxu0
    %v604 = vunpack.c.l.b16 %v224
    %v605 = vpack.c.b16 %v604, %v604
    %606 = vrot.lane.b32.xlu0 %v605, 96
    %v607 = vpop.permute.xlu0 %606
    %v609 = vsel %vm359, %v224, 0
    %v612 = vsel %vm359, %v607, 0
    %614 = vmatprep.subr.bf16.mxu0 0
    %615 = vmatpush1.bf16.xpose.msra.mxu0 %v612
    %616 = vmatprep.subr.bf16.mxu0 0
    %617 = vmatpush1.bf16.xpose.msra.mxu0 0
    %618 = vmatprep.subr.bf16.mxu0 0
    %619 = vmatpush1.bf16.xpose.msra.mxu0 0
    %620 = vmatprep.subr.bf16.mxu0 0
    %621 = vmatpush1.bf16.xpose.msra.mxu0 0
    %622 = vmatprep.subr.bf16.mxu0 0
    %623 = vmatpush1.bf16.xpose.msra.mxu0 0
    %624 = vmatprep.subr.bf16.mxu0 0
    %625 = vmatpush1.bf16.xpose.msra.mxu0 0
    %626 = vmatprep.subr.bf16.mxu0 0
    %627 = vmatpush1.bf16.xpose.msra.mxu0 0
    %628 = vmatprep.subr.bf16.mxu0 0
    %629 = vmatpush1.bf16.xpose.msra.mxu0 0
    %630 = vmatprep.subr.bf16.mxu0 0
    %631 = vmatpush1.bf16.xpose.msra.mxu0 0
    %632 = vmatprep.subr.bf16.mxu0 0
    %633 = vmatpush1.bf16.xpose.msra.mxu0 0
    %634 = vmatprep.subr.bf16.mxu0 0
    %635 = vmatpush1.bf16.xpose.msra.mxu0 0
    %636 = vmatprep.subr.bf16.mxu0 0
    %637 = vmatpush1.bf16.xpose.msra.mxu0 0
    %638 = vmatprep.subr.bf16.mxu0 0
    %639 = vmatpush1.bf16.xpose.msra.mxu0 0
    %640 = vmatprep.subr.bf16.mxu0 0
    %641 = vmatpush1.bf16.xpose.msra.mxu0 0
    %642 = vmatprep.subr.bf16.mxu0 0
    %643 = vmatpush1.bf16.xpose.msra.mxu0 0
    %644 = vmatprep.subr.bf16.mxu0 0
    %645 = vmatpush1.bf16.xpose.msra.mxu0 0
    %646 = vmatprep.mubr.bf16.mxu0 0
    %647 = vmatmul.mubr.bf16.gmra.mrb[0].mxu0 %v609
    %v648 = vpop.f32.mrb[0].mxu0
    %v649 = vadd.f32 %v300, %v648
    %v650 = vpop.f32.mrb[0].mxu0
    %v651 = vpop.f32.mrb[0].mxu0
    %v652 = vpop.f32.mrb[0].mxu0
    %653 = vdwg.mxu0
    %v654 = vunpack.c.l.b16 %v232
    %v655 = vpack.c.b16 %v654, %v654
    %656 = vrot.lane.b32.xlu0 %v655, 96
    %v657 = vpop.permute.xlu0 %656
    %v659 = vsel %vm359, %v232, 0
    %v662 = vsel %vm359, %v657, 0
    %664 = vmatprep.subr.bf16.mxu0 0
    %665 = vmatpush1.bf16.xpose.msra.mxu0 %v662
    %666 = vmatprep.subr.bf16.mxu0 0
    %667 = vmatpush1.bf16.xpose.msra.mxu0 0
    %668 = vmatprep.subr.bf16.mxu0 0
    %669 = vmatpush1.bf16.xpose.msra.mxu0 0
    %670 = vmatprep.subr.bf16.mxu0 0
    %671 = vmatpush1.bf16.xpose.msra.mxu0 0
    %672 = vmatprep.subr.bf16.mxu0 0
    %673 = vmatpush1.bf16.xpose.msra.mxu0 0
    %674 = vmatprep.subr.bf16.mxu0 0
    %675 = vmatpush1.bf16.xpose.msra.mxu0 0
    %676 = vmatprep.subr.bf16.mxu0 0
    %677 = vmatpush1.bf16.xpose.msra.mxu0 0
    %678 = vmatprep.subr.bf16.mxu0 0
    %679 = vmatpush1.bf16.xpose.msra.mxu0 0
    %680 = vmatprep.subr.bf16.mxu0 0
    %681 = vmatpush1.bf16.xpose.msra.mxu0 0
    %682 = vmatprep.subr.bf16.mxu0 0
    %683 = vmatpush1.bf16.xpose.msra.mxu0 0
    %684 = vmatprep.subr.bf16.mxu0 0
    %685 = vmatpush1.bf16.xpose.msra.mxu0 0
    %686 = vmatprep.subr.bf16.mxu0 0
    %687 = vmatpush1.bf16.xpose.msra.mxu0 0
    %688 = vmatprep.subr.bf16.mxu0 0
    %689 = vmatpush1.bf16.xpose.msra.mxu0 0
    %690 = vmatprep.subr.bf16.mxu0 0
    %691 = vmatpush1.bf16.xpose.msra.mxu0 0
    %692 = vmatprep.subr.bf16.mxu0 0
    %693 = vmatpush1.bf16.xpose.msra.mxu0 0
    %694 = vmatprep.subr.bf16.mxu0 0
    %695 = vmatpush1.bf16.xpose.msra.mxu0 0
    %696 = vmatprep.mubr.bf16.mxu0 0
    %697 = vmatmul.mubr.bf16.gmra.mrb[0].mxu0 %v659
    %v698 = vpop.f32.mrb[0].mxu0
    %v699 = vadd.f32 %v304, %v698
    %v700 = vpop.f32.mrb[0].mxu0
    %v701 = vpop.f32.mrb[0].mxu0
    %v702 = vpop.f32.mrb[0].mxu0
    %703 = vdwg.mxu0
    %v704 = vunpack.c.l.b16 %v240
    %v705 = vpack.c.b16 %v704, %v704
    %706 = vrot.lane.b32.xlu0 %v705, 96
    %v707 = vpop.permute.xlu0 %706
    %v709 = vsel %vm359, %v240, 0
    %v712 = vsel %vm359, %v707, 0
    %714 = vmatprep.subr.bf16.mxu0 0
    %715 = vmatpush1.bf16.xpose.msra.mxu0 %v712
    %716 = vmatprep.subr.bf16.mxu0 0
    %717 = vmatpush1.bf16.xpose.msra.mxu0 0
    %718 = vmatprep.subr.bf16.mxu0 0
    %719 = vmatpush1.bf16.xpose.msra.mxu0 0
    %720 = vmatprep.subr.bf16.mxu0 0
    %721 = vmatpush1.bf16.xpose.msra.mxu0 0
    %722 = vmatprep.subr.bf16.mxu0 0
    %723 = vmatpush1.bf16.xpose.msra.mxu0 0
    %724 = vmatprep.subr.bf16.mxu0 0
    %725 = vmatpush1.bf16.xpose.msra.mxu0 0
    %726 = vmatprep.subr.bf16.mxu0 0
    %727 = vmatpush1.bf16.xpose.msra.mxu0 0
    %728 = vmatprep.subr.bf16.mxu0 0
    %729 = vmatpush1.bf16.xpose.msra.mxu0 0
    %730 = vmatprep.subr.bf16.mxu0 0
    %731 = vmatpush1.bf16.xpose.msra.mxu0 0
    %732 = vmatprep.subr.bf16.mxu0 0
    %733 = vmatpush1.bf16.xpose.msra.mxu0 0
    %734 = vmatprep.subr.bf16.mxu0 0
    %735 = vmatpush1.bf16.xpose.msra.mxu0 0
    %736 = vmatprep.subr.bf16.mxu0 0
    %737 = vmatpush1.bf16.xpose.msra.mxu0 0
    %738 = vmatprep.subr.bf16.mxu0 0
    %739 = vmatpush1.bf16.xpose.msra.mxu0 0
    %740 = vmatprep.subr.bf16.mxu0 0
    %741 = vmatpush1.bf16.xpose.msra.mxu0 0
    %742 = vmatprep.subr.bf16.mxu0 0
    %743 = vmatpush1.bf16.xpose.msra.mxu0 0
    %744 = vmatprep.subr.bf16.mxu0 0
    %745 = vmatpush1.bf16.xpose.msra.mxu0 0
    %746 = vmatprep.mubr.bf16.mxu0 0
    %747 = vmatmul.mubr.bf16.gmra.mrb[0].mxu0 %v709
    %v748 = vpop.f32.mrb[0].mxu0
    %v749 = vadd.f32 %v308, %v748
    %v750 = vpop.f32.mrb[0].mxu0
    %v751 = vpop.f32.mrb[0].mxu0
    %v752 = vpop.f32.mrb[0].mxu0
    %753 = vdwg.mxu0
    %754 = vrot.lane.b32.xlu0 %v219, 96
    %v755 = vpop.permute.xlu0 %754
    %v757 = vsel %vm359, %v219, 0
    %v760 = vsel %vm359, %v755, 0
    %762 = vmatprep.subr.bf16.mxu0 0
    %763 = vmatpush1.bf16.xpose.msra.mxu0 %v760
    %764 = vmatprep.subr.bf16.mxu0 0
    %765 = vmatpush1.bf16.xpose.msra.mxu0 0
    %766 = vmatprep.subr.bf16.mxu0 0
    %767 = vmatpush1.bf16.xpose.msra.mxu0 0
    %768 = vmatprep.subr.bf16.mxu0 0
    %769 = vmatpush1.bf16.xpose.msra.mxu0 0
    %770 = vmatprep.subr.bf16.mxu0 0
    %771 = vmatpush1.bf16.xpose.msra.mxu0 0
    %772 = vmatprep.subr.bf16.mxu0 0
    %773 = vmatpush1.bf16.xpose.msra.mxu0 0
    %774 = vmatprep.subr.bf16.mxu0 0
    %775 = vmatpush1.bf16.xpose.msra.mxu0 0
    %776 = vmatprep.subr.bf16.mxu0 0
    %777 = vmatpush1.bf16.xpose.msra.mxu0 0
    %778 = vmatprep.subr.bf16.mxu0 0
    %779 = vmatpush1.bf16.xpose.msra.mxu0 0
    %780 = vmatprep.subr.bf16.mxu0 0
    %781 = vmatpush1.bf16.xpose.msra.mxu0 0
    %782 = vmatprep.subr.bf16.mxu0 0
    %783 = vmatpush1.bf16.xpose.msra.mxu0 0
    %784 = vmatprep.subr.bf16.mxu0 0
    %785 = vmatpush1.bf16.xpose.msra.mxu0 0
    %786 = vmatprep.subr.bf16.mxu0 0
    %787 = vmatpush1.bf16.xpose.msra.mxu0 0
    %788 = vmatprep.subr.bf16.mxu0 0
    %789 = vmatpush1.bf16.xpose.msra.mxu0 0
    %790 = vmatprep.subr.bf16.mxu0 0
    %791 = vmatpush1.bf16.xpose.msra.mxu0 0
    %792 = vmatprep.subr.bf16.mxu0 0
    %793 = vmatpush1.bf16.xpose.msra.mxu0 0
    %794 = vmatprep.mubr.bf16.mxu0 0
    %795 = vmatmul.mubr.bf16.gmra.mrb[0].mxu0 %v757
    %v796 = vpop.f32.mrb[0].mxu0
    %v797 = vadd.f32 %v312, %v796
    %v798 = vpop.f32.mrb[0].mxu0
    %v799 = vpop.f32.mrb[0].mxu0
    %v800 = vpop.f32.mrb[0].mxu0
    %801 = vdwg.mxu0
    %v802 = vunpack.c.l.b16 %v226
    %v803 = vpack.c.b16 %v802, %v802
    %804 = vrot.lane.b32.xlu0 %v803, 96
    %v805 = vpop.permute.xlu0 %804
    %v807 = vsel %vm359, %v226, 0
    %v810 = vsel %vm359, %v805, 0
    %812 = vmatprep.subr.bf16.mxu0 0
    %813 = vmatpush1.bf16.xpose.msra.mxu0 %v810
    %814 = vmatprep.subr.bf16.mxu0 0
    %815 = vmatpush1.bf16.xpose.msra.mxu0 0
    %816 = vmatprep.subr.bf16.mxu0 0
    %817 = vmatpush1.bf16.xpose.msra.mxu0 0
    %818 = vmatprep.subr.bf16.mxu0 0
    %819 = vmatpush1.bf16.xpose.msra.mxu0 0
    %820 = vmatprep.subr.bf16.mxu0 0
    %821 = vmatpush1.bf16.xpose.msra.mxu0 0
    %822 = vmatprep.subr.bf16.mxu0 0
    %823 = vmatpush1.bf16.xpose.msra.mxu0 0
    %824 = vmatprep.subr.bf16.mxu0 0
    %825 = vmatpush1.bf16.xpose.msra.mxu0 0
    %826 = vmatprep.subr.bf16.mxu0 0
    %827 = vmatpush1.bf16.xpose.msra.mxu0 0
    %828 = vmatprep.subr.bf16.mxu0 0
    %829 = vmatpush1.bf16.xpose.msra.mxu0 0
    %830 = vmatprep.subr.bf16.mxu0 0
    %831 = vmatpush1.bf16.xpose.msra.mxu0 0
    %832 = vmatprep.subr.bf16.mxu0 0
    %833 = vmatpush1.bf16.xpose.msra.mxu0 0
    %834 = vmatprep.subr.bf16.mxu0 0
    %835 = vmatpush1.bf16.xpose.msra.mxu0 0
    %836 = vmatprep.subr.bf16.mxu0 0
    %837 = vmatpush1.bf16.xpose.msra.mxu0 0
    %838 = vmatprep.subr.bf16.mxu0 0
    %839 = vmatpush1.bf16.xpose.msra.mxu0 0
    %840 = vmatprep.subr.bf16.mxu0 0
    %841 = vmatpush1.bf16.xpose.msra.mxu0 0
    %842 = vmatprep.subr.bf16.mxu0 0
    %843 = vmatpush1.bf16.xpose.msra.mxu0 0
    %844 = vmatprep.mubr.bf16.mxu0 0
    %845 = vmatmul.mubr.bf16.gmra.mrb[0].mxu0 %v807
    %v846 = vpop.f32.mrb[0].mxu0
    %v847 = vadd.f32 %v316, %v846
    %v848 = vpop.f32.mrb[0].mxu0
    %v849 = vpop.f32.mrb[0].mxu0
    %v850 = vpop.f32.mrb[0].mxu0
    %851 = vdwg.mxu0
    %v852 = vunpack.c.l.b16 %v234
    %v853 = vpack.c.b16 %v852, %v852
    %854 = vrot.lane.b32.xlu0 %v853, 96
    %v855 = vpop.permute.xlu0 %854
    %v857 = vsel %vm359, %v234, 0
    %v860 = vsel %vm359, %v855, 0
    %862 = vmatprep.subr.bf16.mxu0 0
    %863 = vmatpush1.bf16.xpose.msra.mxu0 %v860
    %864 = vmatprep.subr.bf16.mxu0 0
    %865 = vmatpush1.bf16.xpose.msra.mxu0 0
    %866 = vmatprep.subr.bf16.mxu0 0
    %867 = vmatpush1.bf16.xpose.msra.mxu0 0
    %868 = vmatprep.subr.bf16.mxu0 0
    %869 = vmatpush1.bf16.xpose.msra.mxu0 0
    %870 = vmatprep.subr.bf16.mxu0 0
    %871 = vmatpush1.bf16.xpose.msra.mxu0 0
    %872 = vmatprep.subr.bf16.mxu0 0
    %873 = vmatpush1.bf16.xpose.msra.mxu0 0
    %874 = vmatprep.subr.bf16.mxu0 0
    %875 = vmatpush1.bf16.xpose.msra.mxu0 0
    %876 = vmatprep.subr.bf16.mxu0 0
    %877 = vmatpush1.bf16.xpose.msra.mxu0 0
    %878 = vmatprep.subr.bf16.mxu0 0
    %879 = vmatpush1.bf16.xpose.msra.mxu0 0
    %880 = vmatprep.subr.bf16.mxu0 0
    %881 = vmatpush1.bf16.xpose.msra.mxu0 0
    %882 = vmatprep.subr.bf16.mxu0 0
    %883 = vmatpush1.bf16.xpose.msra.mxu0 0
    %884 = vmatprep.subr.bf16.mxu0 0
    %885 = vmatpush1.bf16.xpose.msra.mxu0 0
    %886 = vmatprep.subr.bf16.mxu0 0
    %887 = vmatpush1.bf16.xpose.msra.mxu0 0
    %888 = vmatprep.subr.bf16.mxu0 0
    %889 = vmatpush1.bf16.xpose.msra.mxu0 0
    %890 = vmatprep.subr.bf16.mxu0 0
    %891 = vmatpush1.bf16.xpose.msra.mxu0 0
    %892 = vmatprep.subr.bf16.mxu0 0
    %893 = vmatpush1.bf16.xpose.msra.mxu0 0
    %894 = vmatprep.mubr.bf16.mxu0 0
    %895 = vmatmul.mubr.bf16.gmra.mrb[0].mxu0 %v857
    %v896 = vpop.f32.mrb[0].mxu0
    %v897 = vadd.f32 %v320, %v896
    %v898 = vpop.f32.mrb[0].mxu0
    %v899 = vpop.f32.mrb[0].mxu0
    %v900 = vpop.f32.mrb[0].mxu0
    %901 = vdwg.mxu0
    %v902 = vunpack.c.l.b16 %v242
    %v903 = vpack.c.b16 %v902, %v902
    %904 = vrot.lane.b32.xlu0 %v903, 96
    %v905 = vpop.permute.xlu0 %904
    %v907 = vsel %vm359, %v242, 0
    %v910 = vsel %vm359, %v905, 0
    %912 = vmatprep.subr.bf16.mxu0 0
    %913 = vmatpush1.bf16.xpose.msra.mxu0 %v910
    %914 = vmatprep.subr.bf16.mxu0 0
    %915 = vmatpush1.bf16.xpose.msra.mxu0 0
    %916 = vmatprep.subr.bf16.mxu0 0
    %917 = vmatpush1.bf16.xpose.msra.mxu0 0
    %918 = vmatprep.subr.bf16.mxu0 0
    %919 = vmatpush1.bf16.xpose.msra.mxu0 0
    %920 = vmatprep.subr.bf16.mxu0 0
    %921 = vmatpush1.bf16.xpose.msra.mxu0 0
    %922 = vmatprep.subr.bf16.mxu0 0
    %923 = vmatpush1.bf16.xpose.msra.mxu0 0
    %924 = vmatprep.subr.bf16.mxu0 0
    %925 = vmatpush1.bf16.xpose.msra.mxu0 0
    %926 = vmatprep.subr.bf16.mxu0 0
    %927 = vmatpush1.bf16.xpose.msra.mxu0 0
    %928 = vmatprep.subr.bf16.mxu0 0
    %929 = vmatpush1.bf16.xpose.msra.mxu0 0
    %930 = vmatprep.subr.bf16.mxu0 0
    %931 = vmatpush1.bf16.xpose.msra.mxu0 0
    %932 = vmatprep.subr.bf16.mxu0 0
    %933 = vmatpush1.bf16.xpose.msra.mxu0 0
    %934 = vmatprep.subr.bf16.mxu0 0
    %935 = vmatpush1.bf16.xpose.msra.mxu0 0
    %936 = vmatprep.subr.bf16.mxu0 0
    %937 = vmatpush1.bf16.xpose.msra.mxu0 0
    %938 = vmatprep.subr.bf16.mxu0 0
    %939 = vmatpush1.bf16.xpose.msra.mxu0 0
    %940 = vmatprep.subr.bf16.mxu0 0
    %941 = vmatpush1.bf16.xpose.msra.mxu0 0
    %942 = vmatprep.subr.bf16.mxu0 0
    %943 = vmatpush1.bf16.xpose.msra.mxu0 0
    %944 = vmatprep.mubr.bf16.mxu0 0
    %945 = vmatmul.mubr.bf16.gmra.mrb[0].mxu0 %v907
    %v946 = vpop.f32.mrb[0].mxu0
    %v947 = vadd.f32 %v324, %v946
    %v948 = vpop.f32.mrb[0].mxu0
    %v949 = vpop.f32.mrb[0].mxu0
    %v950 = vpop.f32.mrb[0].mxu0
    %951 = vdwg.mxu0
    %952 = vrot.lane.b32.xlu0 %v220, 96
    %v953 = vpop.permute.xlu0 %952
    %v955 = vsel %vm359, %v220, 0
    %v958 = vsel %vm359, %v953, 0
    %960 = vmatprep.subr.bf16.mxu0 0
    %961 = vmatpush1.bf16.xpose.msra.mxu0 %v958
    %962 = vmatprep.subr.bf16.mxu0 0
    %963 = vmatpush1.bf16.xpose.msra.mxu0 0
    %964 = vmatprep.subr.bf16.mxu0 0
    %965 = vmatpush1.bf16.xpose.msra.mxu0 0
    %966 = vmatprep.subr.bf16.mxu0 0
    %967 = vmatpush1.bf16.xpose.msra.mxu0 0
    %968 = vmatprep.subr.bf16.mxu0 0
    %969 = vmatpush1.bf16.xpose.msra.mxu0 0
    %970 = vmatprep.subr.bf16.mxu0 0
    %971 = vmatpush1.bf16.xpose.msra.mxu0 0
    %972 = vmatprep.subr.bf16.mxu0 0
    %973 = vmatpush1.bf16.xpose.msra.mxu0 0
    %974 = vmatprep.subr.bf16.mxu0 0
    %975 = vmatpush1.bf16.xpose.msra.mxu0 0
    %976 = vmatprep.subr.bf16.mxu0 0
    %977 = vmatpush1.bf16.xpose.msra.mxu0 0
    %978 = vmatprep.subr.bf16.mxu0 0
    %979 = vmatpush1.bf16.xpose.msra.mxu0 0
    %980 = vmatprep.subr.bf16.mxu0 0
    %981 = vmatpush1.bf16.xpose.msra.mxu0 0
    %982 = vmatprep.subr.bf16.mxu0 0
    %983 = vmatpush1.bf16.xpose.msra.mxu0 0
    %984 = vmatprep.subr.bf16.mxu0 0
    %985 = vmatpush1.bf16.xpose.msra.mxu0 0
    %986 = vmatprep.subr.bf16.mxu0 0
    %987 = vmatpush1.bf16.xpose.msra.mxu0 0
    %988 = vmatprep.subr.bf16.mxu0 0
    %989 = vmatpush1.bf16.xpose.msra.mxu0 0
    %990 = vmatprep.subr.bf16.mxu0 0
    %991 = vmatpush1.bf16.xpose.msra.mxu0 0
    %992 = vmatprep.mubr.bf16.mxu0 0
    %993 = vmatmul.mubr.bf16.gmra.mrb[0].mxu0 %v955
    %v994 = vpop.f32.mrb[0].mxu0
    %v995 = vadd.f32 %v328, %v994
    %v996 = vpop.f32.mrb[0].mxu0
    %v997 = vpop.f32.mrb[0].mxu0
    %v998 = vpop.f32.mrb[0].mxu0
    %999 = vdwg.mxu0
    %v1000 = vunpack.c.l.b16 %v228
    %v1001 = vpack.c.b16 %v1000, %v1000
    %1002 = vrot.lane.b32.xlu0 %v1001, 96
    %v1003 = vpop.permute.xlu0 %1002
    %v1005 = vsel %vm359, %v228, 0
    %v1008 = vsel %vm359, %v1003, 0
    %1010 = vmatprep.subr.bf16.mxu0 0
    %1011 = vmatpush1.bf16.xpose.msra.mxu0 %v1008
    %1012 = vmatprep.subr.bf16.mxu0 0
    %1013 = vmatpush1.bf16.xpose.msra.mxu0 0
    %1014 = vmatprep.subr.bf16.mxu0 0
    %1015 = vmatpush1.bf16.xpose.msra.mxu0 0
    %1016 = vmatprep.subr.bf16.mxu0 0
    %1017 = vmatpush1.bf16.xpose.msra.mxu0 0
    %1018 = vmatprep.subr.bf16.mxu0 0
    %1019 = vmatpush1.bf16.xpose.msra.mxu0 0
    %1020 = vmatprep.subr.bf16.mxu0 0
    %1021 = vmatpush1.bf16.xpose.msra.mxu0 0
    %1022 = vmatprep.subr.bf16.mxu0 0
    %1023 = vmatpush1.bf16.xpose.msra.mxu0 0
    %1024 = vmatprep.subr.bf16.mxu0 0
    %1025 = vmatpush1.bf16.xpose.msra.mxu0 0
    %1026 = vmatprep.subr.bf16.mxu0 0
    %1027 = vmatpush1.bf16.xpose.msra.mxu0 0
    %1028 = vmatprep.subr.bf16.mxu0 0
    %1029 = vmatpush1.bf16.xpose.msra.mxu0 0
    %1030 = vmatprep.subr.bf16.mxu0 0
    %1031 = vmatpush1.bf16.xpose.msra.mxu0 0
    %1032 = vmatprep.subr.bf16.mxu0 0
    %1033 = vmatpush1.bf16.xpose.msra.mxu0 0
    %1034 = vmatprep.subr.bf16.mxu0 0
    %1035 = vmatpush1.bf16.xpose.msra.mxu0 0
    %1036 = vmatprep.subr.bf16.mxu0 0
    %1037 = vmatpush1.bf16.xpose.msra.mxu0 0
    %1038 = vmatprep.subr.bf16.mxu0 0
    %1039 = vmatpush1.bf16.xpose.msra.mxu0 0
    %1040 = vmatprep.subr.bf16.mxu0 0
    %1041 = vmatpush1.bf16.xpose.msra.mxu0 0
    %1042 = vmatprep.mubr.bf16.mxu0 0
    %1043 = vmatmul.mubr.bf16.gmra.mrb[0].mxu0 %v1005
    %v1044 = vpop.f32.mrb[0].mxu0
    %v1045 = vadd.f32 %v332, %v1044
    %v1046 = vpop.f32.mrb[0].mxu0
    %v1047 = vpop.f32.mrb[0].mxu0
    %v1048 = vpop.f32.mrb[0].mxu0
    %1049 = vdwg.mxu0
    %v1050 = vunpack.c.l.b16 %v236
    %v1051 = vpack.c.b16 %v1050, %v1050
    %1052 = vrot.lane.b32.xlu0 %v1051, 96
    %v1053 = vpop.permute.xlu0 %1052
    %v1055 = vsel %vm359, %v236, 0
    %v1058 = vsel %vm359, %v1053, 0
    %1060 = vmatprep.subr.bf16.mxu0 0
    %1061 = vmatpush1.bf16.xpose.msra.mxu0 %v1058
    %1062 = vmatprep.subr.bf16.mxu0 0
    %1063 = vmatpush1.bf16.xpose.msra.mxu0 0
    %1064 = vmatprep.subr.bf16.mxu0 0
    %1065 = vmatpush1.bf16.xpose.msra.mxu0 0
    %1066 = vmatprep.subr.bf16.mxu0 0
    %1067 = vmatpush1.bf16.xpose.msra.mxu0 0
    %1068 = vmatprep.subr.bf16.mxu0 0
    %1069 = vmatpush1.bf16.xpose.msra.mxu0 0
    %1070 = vmatprep.subr.bf16.mxu0 0
    %1071 = vmatpush1.bf16.xpose.msra.mxu0 0
    %1072 = vmatprep.subr.bf16.mxu0 0
    %1073 = vmatpush1.bf16.xpose.msra.mxu0 0
    %1074 = vmatprep.subr.bf16.mxu0 0
    %1075 = vmatpush1.bf16.xpose.msra.mxu0 0
    %1076 = vmatprep.subr.bf16.mxu0 0
    %1077 = vmatpush1.bf16.xpose.msra.mxu0 0
    %1078 = vmatprep.subr.bf16.mxu0 0
    %1079 = vmatpush1.bf16.xpose.msra.mxu0 0
    %1080 = vmatprep.subr.bf16.mxu0 0
    %1081 = vmatpush1.bf16.xpose.msra.mxu0 0
    %1082 = vmatprep.subr.bf16.mxu0 0
    %1083 = vmatpush1.bf16.xpose.msra.mxu0 0
    %1084 = vmatprep.subr.bf16.mxu0 0
    %1085 = vmatpush1.bf16.xpose.msra.mxu0 0
    %1086 = vmatprep.subr.bf16.mxu0 0
    %1087 = vmatpush1.bf16.xpose.msra.mxu0 0
    %1088 = vmatprep.subr.bf16.mxu0 0
    %1089 = vmatpush1.bf16.xpose.msra.mxu0 0
    %1090 = vmatprep.subr.bf16.mxu0 0
    %1091 = vmatpush1.bf16.xpose.msra.mxu0 0
    %1092 = vmatprep.mubr.bf16.mxu0 0
    %1093 = vmatmul.mubr.bf16.gmra.mrb[0].mxu0 %v1055
    %v1094 = vpop.f32.mrb[0].mxu0
    %v1095 = vadd.f32 %v336, %v1094
    %v1096 = vpop.f32.mrb[0].mxu0
    %v1097 = vpop.f32.mrb[0].mxu0
    %v1098 = vpop.f32.mrb[0].mxu0
    %1099 = vdwg.mxu0
    %v1100 = vunpack.c.l.b16 %v244
    %v1101 = vpack.c.b16 %v1100, %v1100
    %1102 = vrot.lane.b32.xlu0 %v1101, 96
    %v1103 = vpop.permute.xlu0 %1102
    %v1105 = vsel %vm359, %v244, 0
    %v1108 = vsel %vm359, %v1103, 0
    %1110 = vmatprep.subr.bf16.mxu0 0
    %1111 = vmatpush1.bf16.xpose.msra.mxu0 %v1108
    %1112 = vmatprep.subr.bf16.mxu0 0
    %1113 = vmatpush1.bf16.xpose.msra.mxu0 0
    %1114 = vmatprep.subr.bf16.mxu0 0
    %1115 = vmatpush1.bf16.xpose.msra.mxu0 0
    %1116 = vmatprep.subr.bf16.mxu0 0
    %1117 = vmatpush1.bf16.xpose.msra.mxu0 0
    %1118 = vmatprep.subr.bf16.mxu0 0
    %1119 = vmatpush1.bf16.xpose.msra.mxu0 0
    %1120 = vmatprep.subr.bf16.mxu0 0
    %1121 = vmatpush1.bf16.xpose.msra.mxu0 0
    %1122 = vmatprep.subr.bf16.mxu0 0
    %1123 = vmatpush1.bf16.xpose.msra.mxu0 0
    %1124 = vmatprep.subr.bf16.mxu0 0
    %1125 = vmatpush1.bf16.xpose.msra.mxu0 0
    %1126 = vmatprep.subr.bf16.mxu0 0
    %1127 = vmatpush1.bf16.xpose.msra.mxu0 0
    %1128 = vmatprep.subr.bf16.mxu0 0
    %1129 = vmatpush1.bf16.xpose.msra.mxu0 0
    %1130 = vmatprep.subr.bf16.mxu0 0
    %1131 = vmatpush1.bf16.xpose.msra.mxu0 0
    %1132 = vmatprep.subr.bf16.mxu0 0
    %1133 = vmatpush1.bf16.xpose.msra.mxu0 0
    %1134 = vmatprep.subr.bf16.mxu0 0
    %1135 = vmatpush1.bf16.xpose.msra.mxu0 0
    %1136 = vmatprep.subr.bf16.mxu0 0
    %1137 = vmatpush1.bf16.xpose.msra.mxu0 0
    %1138 = vmatprep.subr.bf16.mxu0 0
    %1139 = vmatpush1.bf16.xpose.msra.mxu0 0
    %1140 = vmatprep.subr.bf16.mxu0 0
    %1141 = vmatpush1.bf16.xpose.msra.mxu0 0
    %1142 = vmatprep.mubr.bf16.mxu0 0
    %1143 = vmatmul.mubr.bf16.gmra.mrb[0].mxu0 %v1105
    %v1144 = vpop.f32.mrb[0].mxu0
    %v1145 = vadd.f32 %v340, %v1144
    %v1146 = vpop.f32.mrb[0].mxu0
    %v1147 = vpop.f32.mrb[0].mxu0
    %v1148 = vpop.f32.mrb[0].mxu0
    %1149 = vdwg.mxu0
    %v1150 = vsel %vm359, %v401, -inf
    %1151 = vmax.xlane.f32.xlu0 %v1150
    %v1152 = vpop.xlane.xlu0 %1151
    %v1153 = vsel %vm359, %v451, -inf
    %1154 = vmax.xlane.f32.xlu0 %v1153
    %v1155 = vpop.xlane.xlu0 %1154
    %v1156 = vsel %vm359, %v501, -inf
    %1157 = vmax.xlane.f32.xlu0 %v1156
    %v1158 = vpop.xlane.xlu0 %1157
    %v1159 = vsel %vm359, %v551, -inf
    %1160 = vmax.xlane.f32.xlu0 %v1159
    %v1161 = vpop.xlane.xlu0 %1160
    %v1162 = vsel %vm359, %v599, -inf
    %1163 = vmax.xlane.f32.xlu0 %v1162
    %v1164 = vpop.xlane.xlu0 %1163
    %v1165 = vsel %vm359, %v649, -inf
    %1166 = vmax.xlane.f32.xlu0 %v1165
    %v1167 = vpop.xlane.xlu0 %1166
    %v1168 = vsel %vm359, %v699, -inf
    %1169 = vmax.xlane.f32.xlu0 %v1168
    %v1170 = vpop.xlane.xlu0 %1169
    %v1171 = vsel %vm359, %v749, -inf
    %1172 = vmax.xlane.f32.xlu0 %v1171
    %v1173 = vpop.xlane.xlu0 %1172
    %v1174 = vsel %vm359, %v797, -inf
    %1175 = vmax.xlane.f32.xlu0 %v1174
    %v1176 = vpop.xlane.xlu0 %1175
    %v1177 = vsel %vm359, %v847, -inf
    %1178 = vmax.xlane.f32.xlu0 %v1177
    %v1179 = vpop.xlane.xlu0 %1178
    %v1180 = vsel %vm359, %v897, -inf
    %1181 = vmax.xlane.f32.xlu0 %v1180
    %v1182 = vpop.xlane.xlu0 %1181
    %v1183 = vsel %vm359, %v947, -inf
    %1184 = vmax.xlane.f32.xlu0 %v1183
    %v1185 = vpop.xlane.xlu0 %1184
    %v1186 = vsel %vm359, %v995, -inf
    %1187 = vmax.xlane.f32.xlu0 %v1186
    %v1188 = vpop.xlane.xlu0 %1187
    %v1189 = vsel %vm359, %v1045, -inf
    %1190 = vmax.xlane.f32.xlu0 %v1189
    %v1191 = vpop.xlane.xlu0 %1190
    %v1192 = vsel %vm359, %v1095, -inf
    %1193 = vmax.xlane.f32.xlu0 %v1192
    %v1194 = vpop.xlane.xlu0 %1193
    %v1195 = vsel %vm359, %v1145, -inf
    %1196 = vmax.xlane.f32.xlu0 %v1195
    %v1197 = vpop.xlane.xlu0 %1196
    %v1198 = vsub.f32 %v401, %v1152
    %v1199 = vsub.f32 %v451, %v1155
    %v1200 = vsub.f32 %v501, %v1158
    %v1201 = vsub.f32 %v551, %v1161
    %v1202 = vsub.f32 %v599, %v1164
    %v1203 = vsub.f32 %v649, %v1167
    %v1204 = vsub.f32 %v699, %v1170
    %v1205 = vsub.f32 %v749, %v1173
    %v1206 = vsub.f32 %v797, %v1176
    %v1207 = vsub.f32 %v847, %v1179
    %v1208 = vsub.f32 %v897, %v1182
    %v1209 = vsub.f32 %v947, %v1185
    %v1210 = vsub.f32 %v995, %v1188
    %v1211 = vsub.f32 %v1045, %v1191
    %v1212 = vsub.f32 %v1095, %v1194
    %v1213 = vsub.f32 %v1145, %v1197
    %v1214 = vmul.f32 %v1198, 1.442695
    %v1215 = vpow.pop %v1214
    %v1216 = vmul.f32 %v1199, 1.442695
    %v1217 = vpow.pop %v1216
    %v1218 = vmul.f32 %v1200, 1.442695
    %v1219 = vpow.pop %v1218
    %v1220 = vmul.f32 %v1201, 1.442695
    %v1221 = vpow.pop %v1220
    %v1222 = vmul.f32 %v1202, 1.442695
    %v1223 = vpow.pop %v1222
    %v1224 = vmul.f32 %v1203, 1.442695
    %v1225 = vpow.pop %v1224
    %v1226 = vmul.f32 %v1204, 1.442695
    %v1227 = vpow.pop %v1226
    %v1228 = vmul.f32 %v1205, 1.442695
    %v1229 = vpow.pop %v1228
    %v1230 = vmul.f32 %v1206, 1.442695
    %v1231 = vpow.pop %v1230
    %v1232 = vmul.f32 %v1207, 1.442695
    %v1233 = vpow.pop %v1232
    %v1234 = vmul.f32 %v1208, 1.442695
    %v1235 = vpow.pop %v1234
    %v1236 = vmul.f32 %v1209, 1.442695
    %v1237 = vpow.pop %v1236
    %v1238 = vmul.f32 %v1210, 1.442695
    %v1239 = vpow.pop %v1238
    %v1240 = vmul.f32 %v1211, 1.442695
    %v1241 = vpow.pop %v1240
    %v1242 = vmul.f32 %v1212, 1.442695
    %v1243 = vpow.pop %v1242
    %v1244 = vmul.f32 %v1213, 1.442695
    %v1245 = vpow.pop %v1244
    %v1246 = vsel %vm359, %v1215, 0.0
    %1247 = vadd.xlane.f32.xlu0 %v1246
    %v1248 = vpop.xlane.xlu0 %1247
    %v1249 = vsel %vm359, %v1217, 0.0
    %1250 = vadd.xlane.f32.xlu0 %v1249
    %v1251 = vpop.xlane.xlu0 %1250
    %v1252 = vsel %vm359, %v1219, 0.0
    %1253 = vadd.xlane.f32.xlu0 %v1252
    %v1254 = vpop.xlane.xlu0 %1253
    %v1255 = vsel %vm359, %v1221, 0.0
    %1256 = vadd.xlane.f32.xlu0 %v1255
    %v1257 = vpop.xlane.xlu0 %1256
    %v1258 = vsel %vm359, %v1223, 0.0
    %1259 = vadd.xlane.f32.xlu0 %v1258
    %v1260 = vpop.xlane.xlu0 %1259
    %v1261 = vsel %vm359, %v1225, 0.0
    %1262 = vadd.xlane.f32.xlu0 %v1261
    %v1263 = vpop.xlane.xlu0 %1262
    %v1264 = vsel %vm359, %v1227, 0.0
    %1265 = vadd.xlane.f32.xlu0 %v1264
    %v1266 = vpop.xlane.xlu0 %1265
    %v1267 = vsel %vm359, %v1229, 0.0
    %1268 = vadd.xlane.f32.xlu0 %v1267
    %v1269 = vpop.xlane.xlu0 %1268
    %v1270 = vsel %vm359, %v1231, 0.0
    %1271 = vadd.xlane.f32.xlu0 %v1270
    %v1272 = vpop.xlane.xlu0 %1271
    %v1273 = vsel %vm359, %v1233, 0.0
    %1274 = vadd.xlane.f32.xlu0 %v1273
    %v1275 = vpop.xlane.xlu0 %1274
    %v1276 = vsel %vm359, %v1235, 0.0
    %1277 = vadd.xlane.f32.xlu0 %v1276
    %v1278 = vpop.xlane.xlu0 %1277
    %v1279 = vsel %vm359, %v1237, 0.0
    %1280 = vadd.xlane.f32.xlu0 %v1279
    %v1281 = vpop.xlane.xlu0 %1280
    %v1282 = vsel %vm359, %v1239, 0.0
    %1283 = vadd.xlane.f32.xlu0 %v1282
    %v1284 = vpop.xlane.xlu0 %1283
    %v1285 = vsel %vm359, %v1241, 0.0
    %1286 = vadd.xlane.f32.xlu0 %v1285
    %v1287 = vpop.xlane.xlu0 %1286
    %v1288 = vsel %vm359, %v1243, 0.0
    %1289 = vadd.xlane.f32.xlu0 %v1288
    %v1290 = vpop.xlane.xlu0 %1289
    %v1291 = vsel %vm359, %v1245, 0.0
    %1292 = vadd.xlane.f32.xlu0 %v1291
    %v1293 = vpop.xlane.xlu0 %1292
    %v1294 = vrcp.pop %v1248
    %v1295 = vrcp.pop %v1251
    %v1296 = vrcp.pop %v1254
    %v1297 = vrcp.pop %v1257
    %v1298 = vrcp.pop %v1260
    %v1299 = vrcp.pop %v1263
    %v1300 = vrcp.pop %v1266
    %v1301 = vrcp.pop %v1269
    %v1302 = vrcp.pop %v1272
    %v1303 = vrcp.pop %v1275
    %v1304 = vrcp.pop %v1278
    %v1305 = vrcp.pop %v1281
    %v1306 = vrcp.pop %v1284
    %v1307 = vrcp.pop %v1287
    %v1308 = vrcp.pop %v1290
    %v1309 = vrcp.pop %v1293
    %v1310 = vmul.f32 %v1215, %v1294
    %v1311 = vmul.f32 %v1217, %v1295
    %v1312 = vmul.f32 %v1219, %v1296
    %v1313 = vmul.f32 %v1221, %v1297
    %v1314 = vmul.f32 %v1223, %v1298
    %v1315 = vmul.f32 %v1225, %v1299
    %v1316 = vmul.f32 %v1227, %v1300
    %v1317 = vmul.f32 %v1229, %v1301
    %v1318 = vmul.f32 %v1231, %v1302
    %v1319 = vmul.f32 %v1233, %v1303
    %v1320 = vmul.f32 %v1235, %v1304
    %v1321 = vmul.f32 %v1237, %v1305
    %v1322 = vmul.f32 %v1239, %v1306
    %v1323 = vmul.f32 %v1241, %v1307
    %v1324 = vmul.f32 %v1243, %v1308
    %v1325 = vmul.f32 %v1245, %v1309
    %v1326 = vpack.c.bf16 %v1310, %v1310
    %v1327 = vpack.c.bf16 %v1311, %v1311
    %v1328 = vpack.c.bf16 %v1312, %v1312
    %v1329 = vpack.c.bf16 %v1313, %v1313
    %v1330 = vpack.c.bf16 %v1314, %v1314
    %v1331 = vpack.c.bf16 %v1315, %v1315
    %v1332 = vpack.c.bf16 %v1316, %v1316
    %v1333 = vpack.c.bf16 %v1317, %v1317
    %v1334 = vpack.c.bf16 %v1318, %v1318
    %v1335 = vpack.c.bf16 %v1319, %v1319
    %v1336 = vpack.c.bf16 %v1320, %v1320
    %v1337 = vpack.c.bf16 %v1321, %v1321
    %v1338 = vpack.c.bf16 %v1322, %v1322
    %v1339 = vpack.c.bf16 %v1323, %v1323
    %v1340 = vpack.c.bf16 %v1324, %v1324
    %v1341 = vpack.c.bf16 %v1325, %v1325
    %1342 = vrot.lane.b32.xlu0 %v217, 64
    %v1343 = vpop.permute.xlu0 %1342
    %v1345 = vsel %vm359, %v1326, 0
    %vm1347 = vcmask 1043456
    %v1349 = vsel %vm1347, %v1343, 0
    %1351 = vmatprep.subr.bf16.mxu0 0
    %1352 = vmatpush1.bf16.msra.mxu0 %v1349
    %1353 = vmatprep.subr.bf16.mxu0 0
    %1354 = vmatpush1.bf16.msra.mxu0 0
    %1355 = vmatprep.subr.bf16.mxu0 0
    %1356 = vmatpush1.bf16.msra.mxu0 0
    %1357 = vmatprep.subr.bf16.mxu0 0
    %1358 = vmatpush1.bf16.msra.mxu0 0
    %1359 = vmatprep.subr.bf16.mxu0 0
    %1360 = vmatpush1.bf16.msra.mxu0 0
    %1361 = vmatprep.subr.bf16.mxu0 0
    %1362 = vmatpush1.bf16.msra.mxu0 0
    %1363 = vmatprep.subr.bf16.mxu0 0
    %1364 = vmatpush1.bf16.msra.mxu0 0
    %1365 = vmatprep.subr.bf16.mxu0 0
    %1366 = vmatpush1.bf16.msra.mxu0 0
    %1367 = vmatprep.subr.bf16.mxu0 0
    %1368 = vmatpush1.bf16.msra.mxu0 0
    %1369 = vmatprep.subr.bf16.mxu0 0
    %1370 = vmatpush1.bf16.msra.mxu0 0
    %1371 = vmatprep.subr.bf16.mxu0 0
    %1372 = vmatpush1.bf16.msra.mxu0 0
    %1373 = vmatprep.subr.bf16.mxu0 0
    %1374 = vmatpush1.bf16.msra.mxu0 0
    %1375 = vmatprep.subr.bf16.mxu0 0
    %1376 = vmatpush1.bf16.msra.mxu0 0
    %1377 = vmatprep.subr.bf16.mxu0 0
    %1378 = vmatpush1.bf16.msra.mxu0 0
    %1379 = vmatprep.subr.bf16.mxu0 0
    %1380 = vmatpush1.bf16.msra.mxu0 0
    %1381 = vmatprep.subr.bf16.mxu0 0
    %1382 = vmatpush1.bf16.msra.mxu0 0
    %1383 = vmatprep.mubr.bf16.mxu0 0
    %1384 = vmatmul.mubr.bf16.gmra.mrb[0].mxu0 %v1345
    %v1385 = vpop.f32.mrb[0].mxu0
    %v1386 = vadd.f32 0.0, %v1385
    %v1387 = vpop.f32.mrb[0].mxu0
    %v1388 = vpop.f32.mrb[0].mxu0
    %v1389 = vpop.f32.mrb[0].mxu0
    %1390 = vdwg.mxu0
    %1391 = vrot.lane.b32.xlu0 %v407, 64
    %v1392 = vpop.permute.xlu0 %1391
    %v1394 = vsel %vm359, %v1327, 0
    %v1397 = vsel %vm1347, %v1392, 0
    %1399 = vmatprep.subr.bf16.mxu0 0
    %1400 = vmatpush1.bf16.msra.mxu0 %v1397
    %1401 = vmatprep.subr.bf16.mxu0 0
    %1402 = vmatpush1.bf16.msra.mxu0 0
    %1403 = vmatprep.subr.bf16.mxu0 0
    %1404 = vmatpush1.bf16.msra.mxu0 0
    %1405 = vmatprep.subr.bf16.mxu0 0
    %1406 = vmatpush1.bf16.msra.mxu0 0
    %1407 = vmatprep.subr.bf16.mxu0 0
    %1408 = vmatpush1.bf16.msra.mxu0 0
    %1409 = vmatprep.subr.bf16.mxu0 0
    %1410 = vmatpush1.bf16.msra.mxu0 0
    %1411 = vmatprep.subr.bf16.mxu0 0
    %1412 = vmatpush1.bf16.msra.mxu0 0
    %1413 = vmatprep.subr.bf16.mxu0 0
    %1414 = vmatpush1.bf16.msra.mxu0 0
    %1415 = vmatprep.subr.bf16.mxu0 0
    %1416 = vmatpush1.bf16.msra.mxu0 0
    %1417 = vmatprep.subr.bf16.mxu0 0
    %1418 = vmatpush1.bf16.msra.mxu0 0
    %1419 = vmatprep.subr.bf16.mxu0 0
    %1420 = vmatpush1.bf16.msra.mxu0 0
    %1421 = vmatprep.subr.bf16.mxu0 0
    %1422 = vmatpush1.bf16.msra.mxu0 0
    %1423 = vmatprep.subr.bf16.mxu0 0
    %1424 = vmatpush1.bf16.msra.mxu0 0
    %1425 = vmatprep.subr.bf16.mxu0 0
    %1426 = vmatpush1.bf16.msra.mxu0 0
    %1427 = vmatprep.subr.bf16.mxu0 0
    %1428 = vmatpush1.bf16.msra.mxu0 0
    %1429 = vmatprep.subr.bf16.mxu0 0
    %1430 = vmatpush1.bf16.msra.mxu0 0
    %1431 = vmatprep.mubr.bf16.mxu0 0
    %1432 = vmatmul.mubr.bf16.gmra.mrb[0].mxu0 %v1394
    %v1433 = vpop.f32.mrb[0].mxu0
    %v1434 = vadd.f32 0.0, %v1433
    %v1435 = vpop.f32.mrb[0].mxu0
    %v1436 = vpop.f32.mrb[0].mxu0
    %v1437 = vpop.f32.mrb[0].mxu0
    %1438 = vdwg.mxu0
    %1439 = vrot.lane.b32.xlu0 %v457, 64
    %v1440 = vpop.permute.xlu0 %1439
    %v1442 = vsel %vm359, %v1328, 0
    %v1445 = vsel %vm1347, %v1440, 0
    %1447 = vmatprep.subr.bf16.mxu0 0
    %1448 = vmatpush1.bf16.msra.mxu0 %v1445
    %1449 = vmatprep.subr.bf16.mxu0 0
    %1450 = vmatpush1.bf16.msra.mxu0 0
    %1451 = vmatprep.subr.bf16.mxu0 0
    %1452 = vmatpush1.bf16.msra.mxu0 0
    %1453 = vmatprep.subr.bf16.mxu0 0
    %1454 = vmatpush1.bf16.msra.mxu0 0
    %1455 = vmatprep.subr.bf16.mxu0 0
    %1456 = vmatpush1.bf16.msra.mxu0 0
    %1457 = vmatprep.subr.bf16.mxu0 0
    %1458 = vmatpush1.bf16.msra.mxu0 0
    %1459 = vmatprep.subr.bf16.mxu0 0
    %1460 = vmatpush1.bf16.msra.mxu0 0
    %1461 = vmatprep.subr.bf16.mxu0 0
    %1462 = vmatpush1.bf16.msra.mxu0 0
    %1463 = vmatprep.subr.bf16.mxu0 0
    %1464 = vmatpush1.bf16.msra.mxu0 0
    %1465 = vmatprep.subr.bf16.mxu0 0
    %1466 = vmatpush1.bf16.msra.mxu0 0
    %1467 = vmatprep.subr.bf16.mxu0 0
    %1468 = vmatpush1.bf16.msra.mxu0 0
    %1469 = vmatprep.subr.bf16.mxu0 0
    %1470 = vmatpush1.bf16.msra.mxu0 0
    %1471 = vmatprep.subr.bf16.mxu0 0
    %1472 = vmatpush1.bf16.msra.mxu0 0
    %1473 = vmatprep.subr.bf16.mxu0 0
    %1474 = vmatpush1.bf16.msra.mxu0 0
    %1475 = vmatprep.subr.bf16.mxu0 0
    %1476 = vmatpush1.bf16.msra.mxu0 0
    %1477 = vmatprep.subr.bf16.mxu0 0
    %1478 = vmatpush1.bf16.msra.mxu0 0
    %1479 = vmatprep.mubr.bf16.mxu0 0
    %1480 = vmatmul.mubr.bf16.gmra.mrb[0].mxu0 %v1442
    %v1481 = vpop.f32.mrb[0].mxu0
    %v1482 = vadd.f32 0.0, %v1481
    %v1483 = vpop.f32.mrb[0].mxu0
    %v1484 = vpop.f32.mrb[0].mxu0
    %v1485 = vpop.f32.mrb[0].mxu0
    %1486 = vdwg.mxu0
    %1487 = vrot.lane.b32.xlu0 %v507, 64
    %v1488 = vpop.permute.xlu0 %1487
    %v1490 = vsel %vm359, %v1329, 0
    %v1493 = vsel %vm1347, %v1488, 0
    %1495 = vmatprep.subr.bf16.mxu0 0
    %1496 = vmatpush1.bf16.msra.mxu0 %v1493
    %1497 = vmatprep.subr.bf16.mxu0 0
    %1498 = vmatpush1.bf16.msra.mxu0 0
    %1499 = vmatprep.subr.bf16.mxu0 0
    %1500 = vmatpush1.bf16.msra.mxu0 0
    %1501 = vmatprep.subr.bf16.mxu0 0
    %1502 = vmatpush1.bf16.msra.mxu0 0
    %1503 = vmatprep.subr.bf16.mxu0 0
    %1504 = vmatpush1.bf16.msra.mxu0 0
    %1505 = vmatprep.subr.bf16.mxu0 0
    %1506 = vmatpush1.bf16.msra.mxu0 0
    %1507 = vmatprep.subr.bf16.mxu0 0
    %1508 = vmatpush1.bf16.msra.mxu0 0
    %1509 = vmatprep.subr.bf16.mxu0 0
    %1510 = vmatpush1.bf16.msra.mxu0 0
    %1511 = vmatprep.subr.bf16.mxu0 0
    %1512 = vmatpush1.bf16.msra.mxu0 0
    %1513 = vmatprep.subr.bf16.mxu0 0
    %1514 = vmatpush1.bf16.msra.mxu0 0
    %1515 = vmatprep.subr.bf16.mxu0 0
    %1516 = vmatpush1.bf16.msra.mxu0 0
    %1517 = vmatprep.subr.bf16.mxu0 0
    %1518 = vmatpush1.bf16.msra.mxu0 0
    %1519 = vmatprep.subr.bf16.mxu0 0
    %1520 = vmatpush1.bf16.msra.mxu0 0
    %1521 = vmatprep.subr.bf16.mxu0 0
    %1522 = vmatpush1.bf16.msra.mxu0 0
    %1523 = vmatprep.subr.bf16.mxu0 0
    %1524 = vmatpush1.bf16.msra.mxu0 0
    %1525 = vmatprep.subr.bf16.mxu0 0
    %1526 = vmatpush1.bf16.msra.mxu0 0
    %1527 = vmatprep.mubr.bf16.mxu0 0
    %1528 = vmatmul.mubr.bf16.gmra.mrb[0].mxu0 %v1490
    %v1529 = vpop.f32.mrb[0].mxu0
    %v1530 = vadd.f32 0.0, %v1529
    %v1531 = vpop.f32.mrb[0].mxu0
    %v1532 = vpop.f32.mrb[0].mxu0
    %v1533 = vpop.f32.mrb[0].mxu0
    %1534 = vdwg.mxu0
    %1535 = vrot.lane.b32.xlu0 %v218, 64
    %v1536 = vpop.permute.xlu0 %1535
    %v1538 = vsel %vm359, %v1330, 0
    %v1541 = vsel %vm1347, %v1536, 0
    %1543 = vmatprep.subr.bf16.mxu0 0
    %1544 = vmatpush1.bf16.msra.mxu0 %v1541
    %1545 = vmatprep.subr.bf16.mxu0 0
    %1546 = vmatpush1.bf16.msra.mxu0 0
    %1547 = vmatprep.subr.bf16.mxu0 0
    %1548 = vmatpush1.bf16.msra.mxu0 0
    %1549 = vmatprep.subr.bf16.mxu0 0
    %1550 = vmatpush1.bf16.msra.mxu0 0
    %1551 = vmatprep.subr.bf16.mxu0 0
    %1552 = vmatpush1.bf16.msra.mxu0 0
    %1553 = vmatprep.subr.bf16.mxu0 0
    %1554 = vmatpush1.bf16.msra.mxu0 0
    %1555 = vmatprep.subr.bf16.mxu0 0
    %1556 = vmatpush1.bf16.msra.mxu0 0
    %1557 = vmatprep.subr.bf16.mxu0 0
    %1558 = vmatpush1.bf16.msra.mxu0 0
    %1559 = vmatprep.subr.bf16.mxu0 0
    %1560 = vmatpush1.bf16.msra.mxu0 0
    %1561 = vmatprep.subr.bf16.mxu0 0
    %1562 = vmatpush1.bf16.msra.mxu0 0
    %1563 = vmatprep.subr.bf16.mxu0 0
    %1564 = vmatpush1.bf16.msra.mxu0 0
    %1565 = vmatprep.subr.bf16.mxu0 0
    %1566 = vmatpush1.bf16.msra.mxu0 0
    %1567 = vmatprep.subr.bf16.mxu0 0
    %1568 = vmatpush1.bf16.msra.mxu0 0
    %1569 = vmatprep.subr.bf16.mxu0 0
    %1570 = vmatpush1.bf16.msra.mxu0 0
    %1571 = vmatprep.subr.bf16.mxu0 0
    %1572 = vmatpush1.bf16.msra.mxu0 0
    %1573 = vmatprep.subr.bf16.mxu0 0
    %1574 = vmatpush1.bf16.msra.mxu0 0
    %1575 = vmatprep.mubr.bf16.mxu0 0
    %1576 = vmatmul.mubr.bf16.gmra.mrb[0].mxu0 %v1538
    %v1577 = vpop.f32.mrb[0].mxu0
    %v1578 = vadd.f32 0.0, %v1577
    %v1579 = vpop.f32.mrb[0].mxu0
    %v1580 = vpop.f32.mrb[0].mxu0
    %v1581 = vpop.f32.mrb[0].mxu0
    %1582 = vdwg.mxu0
    %1583 = vrot.lane.b32.xlu0 %v605, 64
    %v1584 = vpop.permute.xlu0 %1583
    %v1586 = vsel %vm359, %v1331, 0
    %v1589 = vsel %vm1347, %v1584, 0
    %1591 = vmatprep.subr.bf16.mxu0 0
    %1592 = vmatpush1.bf16.msra.mxu0 %v1589
    %1593 = vmatprep.subr.bf16.mxu0 0
    %1594 = vmatpush1.bf16.msra.mxu0 0
    %1595 = vmatprep.subr.bf16.mxu0 0
    %1596 = vmatpush1.bf16.msra.mxu0 0
    %1597 = vmatprep.subr.bf16.mxu0 0
    %1598 = vmatpush1.bf16.msra.mxu0 0
    %1599 = vmatprep.subr.bf16.mxu0 0
    %1600 = vmatpush1.bf16.msra.mxu0 0
    %1601 = vmatprep.subr.bf16.mxu0 0
    %1602 = vmatpush1.bf16.msra.mxu0 0
    %1603 = vmatprep.subr.bf16.mxu0 0
    %1604 = vmatpush1.bf16.msra.mxu0 0
    %1605 = vmatprep.subr.bf16.mxu0 0
    %1606 = vmatpush1.bf16.msra.mxu0 0
    %1607 = vmatprep.subr.bf16.mxu0 0
    %1608 = vmatpush1.bf16.msra.mxu0 0
    %1609 = vmatprep.subr.bf16.mxu0 0
    %1610 = vmatpush1.bf16.msra.mxu0 0
    %1611 = vmatprep.subr.bf16.mxu0 0
    %1612 = vmatpush1.bf16.msra.mxu0 0
    %1613 = vmatprep.subr.bf16.mxu0 0
    %1614 = vmatpush1.bf16.msra.mxu0 0
    %1615 = vmatprep.subr.bf16.mxu0 0
    %1616 = vmatpush1.bf16.msra.mxu0 0
    %1617 = vmatprep.subr.bf16.mxu0 0
    %1618 = vmatpush1.bf16.msra.mxu0 0
    %1619 = vmatprep.subr.bf16.mxu0 0
    %1620 = vmatpush1.bf16.msra.mxu0 0
    %1621 = vmatprep.subr.bf16.mxu0 0
    %1622 = vmatpush1.bf16.msra.mxu0 0
    %1623 = vmatprep.mubr.bf16.mxu0 0
    %1624 = vmatmul.mubr.bf16.gmra.mrb[0].mxu0 %v1586
    %v1625 = vpop.f32.mrb[0].mxu0
    %v1626 = vadd.f32 0.0, %v1625
    %v1627 = vpop.f32.mrb[0].mxu0
    %v1628 = vpop.f32.mrb[0].mxu0
    %v1629 = vpop.f32.mrb[0].mxu0
    %1630 = vdwg.mxu0
    %1631 = vrot.lane.b32.xlu0 %v655, 64
    %v1632 = vpop.permute.xlu0 %1631
    %v1634 = vsel %vm359, %v1332, 0
    %v1637 = vsel %vm1347, %v1632, 0
    %1639 = vmatprep.subr.bf16.mxu0 0
    %1640 = vmatpush1.bf16.msra.mxu0 %v1637
    %1641 = vmatprep.subr.bf16.mxu0 0
    %1642 = vmatpush1.bf16.msra.mxu0 0
    %1643 = vmatprep.subr.bf16.mxu0 0
    %1644 = vmatpush1.bf16.msra.mxu0 0
    %1645 = vmatprep.subr.bf16.mxu0 0
    %1646 = vmatpush1.bf16.msra.mxu0 0
    %1647 = vmatprep.subr.bf16.mxu0 0
    %1648 = vmatpush1.bf16.msra.mxu0 0
    %1649 = vmatprep.subr.bf16.mxu0 0
    %1650 = vmatpush1.bf16.msra.mxu0 0
    %1651 = vmatprep.subr.bf16.mxu0 0
    %1652 = vmatpush1.bf16.msra.mxu0 0
    %1653 = vmatprep.subr.bf16.mxu0 0
    %1654 = vmatpush1.bf16.msra.mxu0 0
    %1655 = vmatprep.subr.bf16.mxu0 0
    %1656 = vmatpush1.bf16.msra.mxu0 0
    %1657 = vmatprep.subr.bf16.mxu0 0
    %1658 = vmatpush1.bf16.msra.mxu0 0
    %1659 = vmatprep.subr.bf16.mxu0 0
    %1660 = vmatpush1.bf16.msra.mxu0 0
    %1661 = vmatprep.subr.bf16.mxu0 0
    %1662 = vmatpush1.bf16.msra.mxu0 0
    %1663 = vmatprep.subr.bf16.mxu0 0
    %1664 = vmatpush1.bf16.msra.mxu0 0
    %1665 = vmatprep.subr.bf16.mxu0 0
    %1666 = vmatpush1.bf16.msra.mxu0 0
    %1667 = vmatprep.subr.bf16.mxu0 0
    %1668 = vmatpush1.bf16.msra.mxu0 0
    %1669 = vmatprep.subr.bf16.mxu0 0
    %1670 = vmatpush1.bf16.msra.mxu0 0
    %1671 = vmatprep.mubr.bf16.mxu0 0
    %1672 = vmatmul.mubr.bf16.gmra.mrb[0].mxu0 %v1634
    %v1673 = vpop.f32.mrb[0].mxu0
    %v1674 = vadd.f32 0.0, %v1673
    %v1675 = vpop.f32.mrb[0].mxu0
    %v1676 = vpop.f32.mrb[0].mxu0
    %v1677 = vpop.f32.mrb[0].mxu0
    %1678 = vdwg.mxu0
    %1679 = vrot.lane.b32.xlu0 %v705, 64
    %v1680 = vpop.permute.xlu0 %1679
    %v1682 = vsel %vm359, %v1333, 0
    %v1685 = vsel %vm1347, %v1680, 0
    %1687 = vmatprep.subr.bf16.mxu0 0
    %1688 = vmatpush1.bf16.msra.mxu0 %v1685
    %1689 = vmatprep.subr.bf16.mxu0 0
    %1690 = vmatpush1.bf16.msra.mxu0 0
    %1691 = vmatprep.subr.bf16.mxu0 0
    %1692 = vmatpush1.bf16.msra.mxu0 0
    %1693 = vmatprep.subr.bf16.mxu0 0
    %1694 = vmatpush1.bf16.msra.mxu0 0
    %1695 = vmatprep.subr.bf16.mxu0 0
    %1696 = vmatpush1.bf16.msra.mxu0 0
    %1697 = vmatprep.subr.bf16.mxu0 0
    %1698 = vmatpush1.bf16.msra.mxu0 0
    %1699 = vmatprep.subr.bf16.mxu0 0
    %1700 = vmatpush1.bf16.msra.mxu0 0
    %1701 = vmatprep.subr.bf16.mxu0 0
    %1702 = vmatpush1.bf16.msra.mxu0 0
    %1703 = vmatprep.subr.bf16.mxu0 0
    %1704 = vmatpush1.bf16.msra.mxu0 0
    %1705 = vmatprep.subr.bf16.mxu0 0
    %1706 = vmatpush1.bf16.msra.mxu0 0
    %1707 = vmatprep.subr.bf16.mxu0 0
    %1708 = vmatpush1.bf16.msra.mxu0 0
    %1709 = vmatprep.subr.bf16.mxu0 0
    %1710 = vmatpush1.bf16.msra.mxu0 0
    %1711 = vmatprep.subr.bf16.mxu0 0
    %1712 = vmatpush1.bf16.msra.mxu0 0
    %1713 = vmatprep.subr.bf16.mxu0 0
    %1714 = vmatpush1.bf16.msra.mxu0 0
    %1715 = vmatprep.subr.bf16.mxu0 0
    %1716 = vmatpush1.bf16.msra.mxu0 0
    %1717 = vmatprep.subr.bf16.mxu0 0
    %1718 = vmatpush1.bf16.msra.mxu0 0
    %1719 = vmatprep.mubr.bf16.mxu0 0
    %1720 = vmatmul.mubr.bf16.gmra.mrb[0].mxu0 %v1682
    %v1721 = vpop.f32.mrb[0].mxu0
    %v1722 = vadd.f32 0.0, %v1721
    %v1723 = vpop.f32.mrb[0].mxu0
    %v1724 = vpop.f32.mrb[0].mxu0
    %v1725 = vpop.f32.mrb[0].mxu0
    %1726 = vdwg.mxu0
    %1727 = vrot.lane.b32.xlu0 %v219, 64
    %v1728 = vpop.permute.xlu0 %1727
    %v1730 = vsel %vm359, %v1334, 0
    %v1733 = vsel %vm1347, %v1728, 0
    %1735 = vmatprep.subr.bf16.mxu0 0
    %1736 = vmatpush1.bf16.msra.mxu0 %v1733
    %1737 = vmatprep.subr.bf16.mxu0 0
    %1738 = vmatpush1.bf16.msra.mxu0 0
    %1739 = vmatprep.subr.bf16.mxu0 0
    %1740 = vmatpush1.bf16.msra.mxu0 0
    %1741 = vmatprep.subr.bf16.mxu0 0
    %1742 = vmatpush1.bf16.msra.mxu0 0
    %1743 = vmatprep.subr.bf16.mxu0 0
    %1744 = vmatpush1.bf16.msra.mxu0 0
    %1745 = vmatprep.subr.bf16.mxu0 0
    %1746 = vmatpush1.bf16.msra.mxu0 0
    %1747 = vmatprep.subr.bf16.mxu0 0
    %1748 = vmatpush1.bf16.msra.mxu0 0
    %1749 = vmatprep.subr.bf16.mxu0 0
    %1750 = vmatpush1.bf16.msra.mxu0 0
    %1751 = vmatprep.subr.bf16.mxu0 0
    %1752 = vmatpush1.bf16.msra.mxu0 0
    %1753 = vmatprep.subr.bf16.mxu0 0
    %1754 = vmatpush1.bf16.msra.mxu0 0
    %1755 = vmatprep.subr.bf16.mxu0 0
    %1756 = vmatpush1.bf16.msra.mxu0 0
    %1757 = vmatprep.subr.bf16.mxu0 0
    %1758 = vmatpush1.bf16.msra.mxu0 0
    %1759 = vmatprep.subr.bf16.mxu0 0
    %1760 = vmatpush1.bf16.msra.mxu0 0
    %1761 = vmatprep.subr.bf16.mxu0 0
    %1762 = vmatpush1.bf16.msra.mxu0 0
    %1763 = vmatprep.subr.bf16.mxu0 0
    %1764 = vmatpush1.bf16.msra.mxu0 0
    %1765 = vmatprep.subr.bf16.mxu0 0
    %1766 = vmatpush1.bf16.msra.mxu0 0
    %1767 = vmatprep.mubr.bf16.mxu0 0
    %1768 = vmatmul.mubr.bf16.gmra.mrb[0].mxu0 %v1730
    %v1769 = vpop.f32.mrb[0].mxu0
    %v1770 = vadd.f32 0.0, %v1769
    %v1771 = vpop.f32.mrb[0].mxu0
    %v1772 = vpop.f32.mrb[0].mxu0
    %v1773 = vpop.f32.mrb[0].mxu0
    %1774 = vdwg.mxu0
    %1775 = vrot.lane.b32.xlu0 %v803, 64
    %v1776 = vpop.permute.xlu0 %1775
    %v1778 = vsel %vm359, %v1335, 0
    %v1781 = vsel %vm1347, %v1776, 0
    %1783 = vmatprep.subr.bf16.mxu0 0
    %1784 = vmatpush1.bf16.msra.mxu0 %v1781
    %1785 = vmatprep.subr.bf16.mxu0 0
    %1786 = vmatpush1.bf16.msra.mxu0 0
    %1787 = vmatprep.subr.bf16.mxu0 0
    %1788 = vmatpush1.bf16.msra.mxu0 0
    %1789 = vmatprep.subr.bf16.mxu0 0
    %1790 = vmatpush1.bf16.msra.mxu0 0
    %1791 = vmatprep.subr.bf16.mxu0 0
    %1792 = vmatpush1.bf16.msra.mxu0 0
    %1793 = vmatprep.subr.bf16.mxu0 0
    %1794 = vmatpush1.bf16.msra.mxu0 0
    %1795 = vmatprep.subr.bf16.mxu0 0
    %1796 = vmatpush1.bf16.msra.mxu0 0
    %1797 = vmatprep.subr.bf16.mxu0 0
    %1798 = vmatpush1.bf16.msra.mxu0 0
    %1799 = vmatprep.subr.bf16.mxu0 0
    %1800 = vmatpush1.bf16.msra.mxu0 0
    %1801 = vmatprep.subr.bf16.mxu0 0
    %1802 = vmatpush1.bf16.msra.mxu0 0
    %1803 = vmatprep.subr.bf16.mxu0 0
    %1804 = vmatpush1.bf16.msra.mxu0 0
    %1805 = vmatprep.subr.bf16.mxu0 0
    %1806 = vmatpush1.bf16.msra.mxu0 0
    %1807 = vmatprep.subr.bf16.mxu0 0
    %1808 = vmatpush1.bf16.msra.mxu0 0
    %1809 = vmatprep.subr.bf16.mxu0 0
    %1810 = vmatpush1.bf16.msra.mxu0 0
    %1811 = vmatprep.subr.bf16.mxu0 0
    %1812 = vmatpush1.bf16.msra.mxu0 0
    %1813 = vmatprep.subr.bf16.mxu0 0
    %1814 = vmatpush1.bf16.msra.mxu0 0
    %1815 = vmatprep.mubr.bf16.mxu0 0
    %1816 = vmatmul.mubr.bf16.gmra.mrb[0].mxu0 %v1778
    %v1817 = vpop.f32.mrb[0].mxu0
    %v1818 = vadd.f32 0.0, %v1817
    %v1819 = vpop.f32.mrb[0].mxu0
    %v1820 = vpop.f32.mrb[0].mxu0
    %v1821 = vpop.f32.mrb[0].mxu0
    %1822 = vdwg.mxu0
    %1823 = vrot.lane.b32.xlu0 %v853, 64
    %v1824 = vpop.permute.xlu0 %1823
    %v1826 = vsel %vm359, %v1336, 0
    %v1829 = vsel %vm1347, %v1824, 0
    %1831 = vmatprep.subr.bf16.mxu0 0
    %1832 = vmatpush1.bf16.msra.mxu0 %v1829
    %1833 = vmatprep.subr.bf16.mxu0 0
    %1834 = vmatpush1.bf16.msra.mxu0 0
    %1835 = vmatprep.subr.bf16.mxu0 0
    %1836 = vmatpush1.bf16.msra.mxu0 0
    %1837 = vmatprep.subr.bf16.mxu0 0
    %1838 = vmatpush1.bf16.msra.mxu0 0
    %1839 = vmatprep.subr.bf16.mxu0 0
    %1840 = vmatpush1.bf16.msra.mxu0 0
    %1841 = vmatprep.subr.bf16.mxu0 0
    %1842 = vmatpush1.bf16.msra.mxu0 0
    %1843 = vmatprep.subr.bf16.mxu0 0
    %1844 = vmatpush1.bf16.msra.mxu0 0
    %1845 = vmatprep.subr.bf16.mxu0 0
    %1846 = vmatpush1.bf16.msra.mxu0 0
    %1847 = vmatprep.subr.bf16.mxu0 0
    %1848 = vmatpush1.bf16.msra.mxu0 0
    %1849 = vmatprep.subr.bf16.mxu0 0
    %1850 = vmatpush1.bf16.msra.mxu0 0
    %1851 = vmatprep.subr.bf16.mxu0 0
    %1852 = vmatpush1.bf16.msra.mxu0 0
    %1853 = vmatprep.subr.bf16.mxu0 0
    %1854 = vmatpush1.bf16.msra.mxu0 0
    %1855 = vmatprep.subr.bf16.mxu0 0
    %1856 = vmatpush1.bf16.msra.mxu0 0
    %1857 = vmatprep.subr.bf16.mxu0 0
    %1858 = vmatpush1.bf16.msra.mxu0 0
    %1859 = vmatprep.subr.bf16.mxu0 0
    %1860 = vmatpush1.bf16.msra.mxu0 0
    %1861 = vmatprep.subr.bf16.mxu0 0
    %1862 = vmatpush1.bf16.msra.mxu0 0
    %1863 = vmatprep.mubr.bf16.mxu0 0
    %1864 = vmatmul.mubr.bf16.gmra.mrb[0].mxu0 %v1826
    %v1865 = vpop.f32.mrb[0].mxu0
    %v1866 = vadd.f32 0.0, %v1865
    %v1867 = vpop.f32.mrb[0].mxu0
    %v1868 = vpop.f32.mrb[0].mxu0
    %v1869 = vpop.f32.mrb[0].mxu0
    %1870 = vdwg.mxu0
    %1871 = vrot.lane.b32.xlu0 %v903, 64
    %v1872 = vpop.permute.xlu0 %1871
    %v1874 = vsel %vm359, %v1337, 0
    %v1877 = vsel %vm1347, %v1872, 0
    %1879 = vmatprep.subr.bf16.mxu0 0
    %1880 = vmatpush1.bf16.msra.mxu0 %v1877
    %1881 = vmatprep.subr.bf16.mxu0 0
    %1882 = vmatpush1.bf16.msra.mxu0 0
    %1883 = vmatprep.subr.bf16.mxu0 0
    %1884 = vmatpush1.bf16.msra.mxu0 0
    %1885 = vmatprep.subr.bf16.mxu0 0
    %1886 = vmatpush1.bf16.msra.mxu0 0
    %1887 = vmatprep.subr.bf16.mxu0 0
    %1888 = vmatpush1.bf16.msra.mxu0 0
    %1889 = vmatprep.subr.bf16.mxu0 0
    %1890 = vmatpush1.bf16.msra.mxu0 0
    %1891 = vmatprep.subr.bf16.mxu0 0
    %1892 = vmatpush1.bf16.msra.mxu0 0
    %1893 = vmatprep.subr.bf16.mxu0 0
    %1894 = vmatpush1.bf16.msra.mxu0 0
    %1895 = vmatprep.subr.bf16.mxu0 0
    %1896 = vmatpush1.bf16.msra.mxu0 0
    %1897 = vmatprep.subr.bf16.mxu0 0
    %1898 = vmatpush1.bf16.msra.mxu0 0
    %1899 = vmatprep.subr.bf16.mxu0 0
    %1900 = vmatpush1.bf16.msra.mxu0 0
    %1901 = vmatprep.subr.bf16.mxu0 0
    %1902 = vmatpush1.bf16.msra.mxu0 0
    %1903 = vmatprep.subr.bf16.mxu0 0
    %1904 = vmatpush1.bf16.msra.mxu0 0
    %1905 = vmatprep.subr.bf16.mxu0 0
    %1906 = vmatpush1.bf16.msra.mxu0 0
    %1907 = vmatprep.subr.bf16.mxu0 0
    %1908 = vmatpush1.bf16.msra.mxu0 0
    %1909 = vmatprep.subr.bf16.mxu0 0
    %1910 = vmatpush1.bf16.msra.mxu0 0
    %1911 = vmatprep.mubr.bf16.mxu0 0
    %1912 = vmatmul.mubr.bf16.gmra.mrb[0].mxu0 %v1874
    %v1913 = vpop.f32.mrb[0].mxu0
    %v1914 = vadd.f32 0.0, %v1913
    %v1915 = vpop.f32.mrb[0].mxu0
    %v1916 = vpop.f32.mrb[0].mxu0
    %v1917 = vpop.f32.mrb[0].mxu0
    %1918 = vdwg.mxu0
    %1919 = vrot.lane.b32.xlu0 %v220, 64
    %v1920 = vpop.permute.xlu0 %1919
    %v1922 = vsel %vm359, %v1338, 0
    %v1925 = vsel %vm1347, %v1920, 0
    %1927 = vmatprep.subr.bf16.mxu0 0
    %1928 = vmatpush1.bf16.msra.mxu0 %v1925
    %1929 = vmatprep.subr.bf16.mxu0 0
    %1930 = vmatpush1.bf16.msra.mxu0 0
    %1931 = vmatprep.subr.bf16.mxu0 0
    %1932 = vmatpush1.bf16.msra.mxu0 0
    %1933 = vmatprep.subr.bf16.mxu0 0
    %1934 = vmatpush1.bf16.msra.mxu0 0
    %1935 = vmatprep.subr.bf16.mxu0 0
    %1936 = vmatpush1.bf16.msra.mxu0 0
    %1937 = vmatprep.subr.bf16.mxu0 0
    %1938 = vmatpush1.bf16.msra.mxu0 0
    %1939 = vmatprep.subr.bf16.mxu0 0
    %1940 = vmatpush1.bf16.msra.mxu0 0
    %1941 = vmatprep.subr.bf16.mxu0 0
    %1942 = vmatpush1.bf16.msra.mxu0 0
    %1943 = vmatprep.subr.bf16.mxu0 0
    %1944 = vmatpush1.bf16.msra.mxu0 0
    %1945 = vmatprep.subr.bf16.mxu0 0
    %1946 = vmatpush1.bf16.msra.mxu0 0
    %1947 = vmatprep.subr.bf16.mxu0 0
    %1948 = vmatpush1.bf16.msra.mxu0 0
    %1949 = vmatprep.subr.bf16.mxu0 0
    %1950 = vmatpush1.bf16.msra.mxu0 0
    %1951 = vmatprep.subr.bf16.mxu0 0
    %1952 = vmatpush1.bf16.msra.mxu0 0
    %1953 = vmatprep.subr.bf16.mxu0 0
    %1954 = vmatpush1.bf16.msra.mxu0 0
    %1955 = vmatprep.subr.bf16.mxu0 0
    %1956 = vmatpush1.bf16.msra.mxu0 0
    %1957 = vmatprep.subr.bf16.mxu0 0
    %1958 = vmatpush1.bf16.msra.mxu0 0
    %1959 = vmatprep.mubr.bf16.mxu0 0
    %1960 = vmatmul.mubr.bf16.gmra.mrb[0].mxu0 %v1922
    %v1961 = vpop.f32.mrb[0].mxu0
    %v1962 = vadd.f32 0.0, %v1961
    %v1963 = vpop.f32.mrb[0].mxu0
    %v1964 = vpop.f32.mrb[0].mxu0
    %v1965 = vpop.f32.mrb[0].mxu0
    %1966 = vdwg.mxu0
    %1967 = vrot.lane.b32.xlu0 %v1001, 64
    %v1968 = vpop.permute.xlu0 %1967
    %v1970 = vsel %vm359, %v1339, 0
    %v1973 = vsel %vm1347, %v1968, 0
    %1975 = vmatprep.subr.bf16.mxu0 0
    %1976 = vmatpush1.bf16.msra.mxu0 %v1973
    %1977 = vmatprep.subr.bf16.mxu0 0
    %1978 = vmatpush1.bf16.msra.mxu0 0
    %1979 = vmatprep.subr.bf16.mxu0 0
    %1980 = vmatpush1.bf16.msra.mxu0 0
    %1981 = vmatprep.subr.bf16.mxu0 0
    %1982 = vmatpush1.bf16.msra.mxu0 0
    %1983 = vmatprep.subr.bf16.mxu0 0
    %1984 = vmatpush1.bf16.msra.mxu0 0
    %1985 = vmatprep.subr.bf16.mxu0 0
    %1986 = vmatpush1.bf16.msra.mxu0 0
    %1987 = vmatprep.subr.bf16.mxu0 0
    %1988 = vmatpush1.bf16.msra.mxu0 0
    %1989 = vmatprep.subr.bf16.mxu0 0
    %1990 = vmatpush1.bf16.msra.mxu0 0
    %1991 = vmatprep.subr.bf16.mxu0 0
    %1992 = vmatpush1.bf16.msra.mxu0 0
    %1993 = vmatprep.subr.bf16.mxu0 0
    %1994 = vmatpush1.bf16.msra.mxu0 0
    %1995 = vmatprep.subr.bf16.mxu0 0
    %1996 = vmatpush1.bf16.msra.mxu0 0
    %1997 = vmatprep.subr.bf16.mxu0 0
    %1998 = vmatpush1.bf16.msra.mxu0 0
    %1999 = vmatprep.subr.bf16.mxu0 0
    %2000 = vmatpush1.bf16.msra.mxu0 0
    %2001 = vmatprep.subr.bf16.mxu0 0
    %2002 = vmatpush1.bf16.msra.mxu0 0
    %2003 = vmatprep.subr.bf16.mxu0 0
    %2004 = vmatpush1.bf16.msra.mxu0 0
    %2005 = vmatprep.subr.bf16.mxu0 0
    %2006 = vmatpush1.bf16.msra.mxu0 0
    %2007 = vmatprep.mubr.bf16.mxu0 0
    %2008 = vmatmul.mubr.bf16.gmra.mrb[0].mxu0 %v1970
    %v2009 = vpop.f32.mrb[0].mxu0
    %v2010 = vadd.f32 0.0, %v2009
    %v2011 = vpop.f32.mrb[0].mxu0
    %v2012 = vpop.f32.mrb[0].mxu0
    %v2013 = vpop.f32.mrb[0].mxu0
    %2014 = vdwg.mxu0
    %2015 = vrot.lane.b32.xlu0 %v1051, 64
    %v2016 = vpop.permute.xlu0 %2015
    %v2018 = vsel %vm359, %v1340, 0
    %v2021 = vsel %vm1347, %v2016, 0
    %2023 = vmatprep.subr.bf16.mxu0 0
    %2024 = vmatpush1.bf16.msra.mxu0 %v2021
    %2025 = vmatprep.subr.bf16.mxu0 0
    %2026 = vmatpush1.bf16.msra.mxu0 0
    %2027 = vmatprep.subr.bf16.mxu0 0
    %2028 = vmatpush1.bf16.msra.mxu0 0
    %2029 = vmatprep.subr.bf16.mxu0 0
    %2030 = vmatpush1.bf16.msra.mxu0 0
    %2031 = vmatprep.subr.bf16.mxu0 0
    %2032 = vmatpush1.bf16.msra.mxu0 0
    %2033 = vmatprep.subr.bf16.mxu0 0
    %2034 = vmatpush1.bf16.msra.mxu0 0
    %2035 = vmatprep.subr.bf16.mxu0 0
    %2036 = vmatpush1.bf16.msra.mxu0 0
    %2037 = vmatprep.subr.bf16.mxu0 0
    %2038 = vmatpush1.bf16.msra.mxu0 0
    %2039 = vmatprep.subr.bf16.mxu0 0
    %2040 = vmatpush1.bf16.msra.mxu0 0
    %2041 = vmatprep.subr.bf16.mxu0 0
    %2042 = vmatpush1.bf16.msra.mxu0 0
    %2043 = vmatprep.subr.bf16.mxu0 0
    %2044 = vmatpush1.bf16.msra.mxu0 0
    %2045 = vmatprep.subr.bf16.mxu0 0
    %2046 = vmatpush1.bf16.msra.mxu0 0
    %2047 = vmatprep.subr.bf16.mxu0 0
    %2048 = vmatpush1.bf16.msra.mxu0 0
    %2049 = vmatprep.subr.bf16.mxu0 0
    %2050 = vmatpush1.bf16.msra.mxu0 0
    %2051 = vmatprep.subr.bf16.mxu0 0
    %2052 = vmatpush1.bf16.msra.mxu0 0
    %2053 = vmatprep.subr.bf16.mxu0 0
    %2054 = vmatpush1.bf16.msra.mxu0 0
    %2055 = vmatprep.mubr.bf16.mxu0 0
    %2056 = vmatmul.mubr.bf16.gmra.mrb[0].mxu0 %v2018
    %v2057 = vpop.f32.mrb[0].mxu0
    %v2058 = vadd.f32 0.0, %v2057
    %v2059 = vpop.f32.mrb[0].mxu0
    %v2060 = vpop.f32.mrb[0].mxu0
    %v2061 = vpop.f32.mrb[0].mxu0
    %2062 = vdwg.mxu0
    %2063 = vrot.lane.b32.xlu0 %v1101, 64
    %v2064 = vpop.permute.xlu0 %2063
    %v2066 = vsel %vm359, %v1341, 0
    %v2069 = vsel %vm1347, %v2064, 0
    %2071 = vmatprep.subr.bf16.mxu0 0
    %2072 = vmatpush1.bf16.msra.mxu0 %v2069
    %2073 = vmatprep.subr.bf16.mxu0 0
    %2074 = vmatpush1.bf16.msra.mxu0 0
    %2075 = vmatprep.subr.bf16.mxu0 0
    %2076 = vmatpush1.bf16.msra.mxu0 0
    %2077 = vmatprep.subr.bf16.mxu0 0
    %2078 = vmatpush1.bf16.msra.mxu0 0
    %2079 = vmatprep.subr.bf16.mxu0 0
    %2080 = vmatpush1.bf16.msra.mxu0 0
    %2081 = vmatprep.subr.bf16.mxu0 0
    %2082 = vmatpush1.bf16.msra.mxu0 0
    %2083 = vmatprep.subr.bf16.mxu0 0
    %2084 = vmatpush1.bf16.msra.mxu0 0
    %2085 = vmatprep.subr.bf16.mxu0 0
    %2086 = vmatpush1.bf16.msra.mxu0 0
    %2087 = vmatprep.subr.bf16.mxu0 0
    %2088 = vmatpush1.bf16.msra.mxu0 0
    %2089 = vmatprep.subr.bf16.mxu0 0
    %2090 = vmatpush1.bf16.msra.mxu0 0
    %2091 = vmatprep.subr.bf16.mxu0 0
    %2092 = vmatpush1.bf16.msra.mxu0 0
    %2093 = vmatprep.subr.bf16.mxu0 0
    %2094 = vmatpush1.bf16.msra.mxu0 0
    %2095 = vmatprep.subr.bf16.mxu0 0
    %2096 = vmatpush1.bf16.msra.mxu0 0
    %2097 = vmatprep.subr.bf16.mxu0 0
    %2098 = vmatpush1.bf16.msra.mxu0 0
    %2099 = vmatprep.subr.bf16.mxu0 0
    %2100 = vmatpush1.bf16.msra.mxu0 0
    %2101 = vmatprep.subr.bf16.mxu0 0
    %2102 = vmatpush1.bf16.msra.mxu0 0
    %2103 = vmatprep.mubr.bf16.mxu0 0
    %2104 = vmatmul.mubr.bf16.gmra.mrb[0].mxu0 %v2066
    %v2105 = vpop.f32.mrb[0].mxu0
    %v2106 = vadd.f32 0.0, %v2105
    %v2107 = vpop.f32.mrb[0].mxu0
    %v2108 = vpop.f32.mrb[0].mxu0
    %v2109 = vpop.f32.mrb[0].mxu0
    %2110 = vdwg.mxu0
    %v2111 = vpack.c.bf16 %v1386, %v1386
    %v2112 = vpack.c.bf16 %v1434, %v1434
    %v2113 = vpack.c.bf16 %v1482, %v1482
    %v2114 = vpack.c.bf16 %v1530, %v1530
    %v2115 = vpack.c.bf16 %v1578, %v1578
    %v2116 = vpack.c.bf16 %v1626, %v1626
    %v2117 = vpack.c.bf16 %v1674, %v1674
    %v2118 = vpack.c.bf16 %v1722, %v1722
    %v2119 = vpack.c.bf16 %v1770, %v1770
    %v2120 = vpack.c.bf16 %v1818, %v1818
    %v2121 = vpack.c.bf16 %v1866, %v1866
    %v2122 = vpack.c.bf16 %v1914, %v1914
    %v2123 = vpack.c.bf16 %v1962, %v1962
    %v2124 = vpack.c.bf16 %v2010, %v2010
    %v2125 = vpack.c.bf16 %v2058, %v2058
    %v2126 = vpack.c.bf16 %v2106, %v2106
    %vm2127 = vcmask 60416
    %2128 = vst.msk [vmem:[#allocation2] sm:$0xf] %vm2127, %v2111
    %2129 = vst.msk [vmem:[#allocation2 + $0x4] sm:$0xf] %vm2127, %v2115
    %2130 = vst.msk [vmem:[#allocation2 + $0x8] sm:$0xf] %vm2127, %v2119
    %2131 = vst.msk [vmem:[#allocation2 + $0xc] sm:$0xf] %vm2127, %v2123
    %v2136 = vunpack.c.l.b16 %v2112
    %v2137 = vunpack.c.l.b16 %v2116
    %v2138 = vunpack.c.l.b16 %v2120
    %v2139 = vunpack.c.l.b16 %v2124
    %v2140 = vpack.c.b16 %v2136, %v2136
    %v2141 = vpack.c.b16 %v2137, %v2137
    %v2142 = vpack.c.b16 %v2138, %v2138
    %v2143 = vpack.c.b16 %v2139, %v2139
    %2144 = vrot.lane.b32.xlu0 %v2140, 8
    %v2145 = vpop.permute.xlu0 %2144
    %2146 = vrot.lane.b32.xlu0 %v2141, 8
    %v2147 = vpop.permute.xlu0 %2146
    %2148 = vrot.lane.b32.xlu0 %v2142, 8
    %v2149 = vpop.permute.xlu0 %2148
    %2150 = vrot.lane.b32.xlu0 %v2143, 8
    %v2151 = vpop.permute.xlu0 %2150
    %vm2156 = vcmask 126016
    %2157 = vst.msk [vmem:[#allocation2] sm:$0xf] %vm2156, %v2145
    %2158 = vst.msk [vmem:[#allocation2 + $0x4] sm:$0xf] %vm2156, %v2147
    %2159 = vst.msk [vmem:[#allocation2 + $0x8] sm:$0xf] %vm2156, %v2149
    %2160 = vst.msk [vmem:[#allocation2 + $0xc] sm:$0xf] %vm2156, %v2151
    %v2165 = vunpack.c.l.b16 %v2113
    %v2166 = vunpack.c.l.b16 %v2117
    %v2167 = vunpack.c.l.b16 %v2121
    %v2168 = vunpack.c.l.b16 %v2125
    %v2169 = vpack.c.b16 %v2165, %v2165
    %v2170 = vpack.c.b16 %v2166, %v2166
    %v2171 = vpack.c.b16 %v2167, %v2167
    %v2172 = vpack.c.b16 %v2168, %v2168
    %2173 = vrot.lane.b32.xlu0 %v2169, 16
    %v2174 = vpop.permute.xlu0 %2173
    %2175 = vrot.lane.b32.xlu0 %v2170, 16
    %v2176 = vpop.permute.xlu0 %2175
    %2177 = vrot.lane.b32.xlu0 %v2171, 16
    %v2178 = vpop.permute.xlu0 %2177
    %2179 = vrot.lane.b32.xlu0 %v2172, 16
    %v2180 = vpop.permute.xlu0 %2179
    %vm2185 = vcmask 191616
    %2186 = vst.msk [vmem:[#allocation2] sm:$0xf] %vm2185, %v2174
    %2187 = vst.msk [vmem:[#allocation2 + $0x4] sm:$0xf] %vm2185, %v2176
    %2188 = vst.msk [vmem:[#allocation2 + $0x8] sm:$0xf] %vm2185, %v2178
    %2189 = vst.msk [vmem:[#allocation2 + $0xc] sm:$0xf] %vm2185, %v2180
    %v2194 = vunpack.c.l.b16 %v2114
    %v2195 = vunpack.c.l.b16 %v2118
    %v2196 = vunpack.c.l.b16 %v2122
    %v2197 = vunpack.c.l.b16 %v2126
    %v2198 = vpack.c.b16 %v2194, %v2194
    %v2199 = vpack.c.b16 %v2195, %v2195
    %v2200 = vpack.c.b16 %v2196, %v2196
    %v2201 = vpack.c.b16 %v2197, %v2197
    %2202 = vrot.lane.b32.xlu0 %v2198, 24
    %v2203 = vpop.permute.xlu0 %2202
    %2204 = vrot.lane.b32.xlu0 %v2199, 24
    %v2205 = vpop.permute.xlu0 %2204
    %2206 = vrot.lane.b32.xlu0 %v2200, 24
    %v2207 = vpop.permute.xlu0 %2206
    %2208 = vrot.lane.b32.xlu0 %v2201, 24
    %v2209 = vpop.permute.xlu0 %2208
    %vm2214 = vcmask 257216
    %2215 = vst.msk [vmem:[#allocation2] sm:$0xf] %vm2214, %v2203
    %2216 = vst.msk [vmem:[#allocation2 + $0x4] sm:$0xf] %vm2214, %v2205
    %2217 = vst.msk [vmem:[#allocation2 + $0x8] sm:$0xf] %vm2214, %v2207
    %2218 = vst.msk [vmem:[#allocation2 + $0xc] sm:$0xf] %vm2214, %v2209
    %v2219 = vld [vmem:[#allocation2] sm:$0xf]
    %v2220 = vld [vmem:[#allocation2 + $0x4] sm:$0xf]
    %v2221 = vld [vmem:[#allocation2 + $0x8] sm:$0xf]
    %v2222 = vld [vmem:[#allocation2 + $0xc] sm:$0xf]
    %v2223 = vld [vmem:[%s6] sm:$0xf]
    %v2224 = vld [vmem:[%s6 + $0x4] sm:$0xf]
    %v2225 = vld [vmem:[%s6 + $0x8] sm:$0xf]
    %v2226 = vld [vmem:[%s6 + $0xc] sm:$0xf]
    %v2227 = vld [vmem:[%s7] sm:$0x1]
    %v2229 = vlaneseq
    %v2230 = vshrl.u32 %v2229, 7
    %v2231 = vsub.s32 0, %v2230
    %v2232 = vrot.slane %v2227, %v2231
    %v2238 = vunpack.c.l.b16 %v2219
    %v2239 = vunpack.c.l.b16 %v2220
    %v2240 = vunpack.c.l.b16 %v2221
    %v2241 = vunpack.c.l.b16 %v2222
    %v2242 = vpack.c.b16 %v2239, %v2238
    %v2243 = vpack.c.b16 %v2241, %v2240
    %v2248 = vunpack.c.l.b16 %v2223
    %v2249 = vunpack.c.l.b16 %v2224
    %v2250 = vunpack.c.l.b16 %v2225
    %v2251 = vunpack.c.l.b16 %v2226
    %v2252 = vpack.c.b16 %v2249, %v2248
    %v2253 = vpack.c.b16 %v2251, %v2250
    %v2257 = vsel %vm55, %v2242, 0
    %v2260 = vsel %vm55, %v2243, 0
    %2262 = vmatprep.subr.bf16.mxu0 0
    %2263 = vmatpush1.bf16.msra.mxu0 %v2252
    %2264 = vmatprep.subr.bf16.mxu0 0
    %2265 = vmatpush1.bf16.msra.mxu0 %v2253
    %2266 = vmatprep.subr.bf16.mxu0 0
    %2267 = vmatpush1.bf16.msra.mxu0 0
    %2268 = vmatprep.subr.bf16.mxu0 0
    %2269 = vmatpush1.bf16.msra.mxu0 0
    %2270 = vmatprep.subr.bf16.mxu0 0
    %2271 = vmatpush1.bf16.msra.mxu0 0
    %2272 = vmatprep.subr.bf16.mxu0 0
    %2273 = vmatpush1.bf16.msra.mxu0 0
    %2274 = vmatprep.subr.bf16.mxu0 0
    %2275 = vmatpush1.bf16.msra.mxu0 0
    %2276 = vmatprep.subr.bf16.mxu0 0
    %2277 = vmatpush1.bf16.msra.mxu0 0
    %2278 = vmatprep.subr.bf16.mxu0 0
    %2279 = vmatpush1.bf16.msra.mxu0 0
    %2280 = vmatprep.subr.bf16.mxu0 0
    %2281 = vmatpush1.bf16.msra.mxu0 0
    %2282 = vmatprep.subr.bf16.mxu0 0
    %2283 = vmatpush1.bf16.msra.mxu0 0
    %2284 = vmatprep.subr.bf16.mxu0 0
    %2285 = vmatpush1.bf16.msra.mxu0 0
    %2286 = vmatprep.subr.bf16.mxu0 0
    %2287 = vmatpush1.bf16.msra.mxu0 0
    %2288 = vmatprep.subr.bf16.mxu0 0
    %2289 = vmatpush1.bf16.msra.mxu0 0
    %2290 = vmatprep.subr.bf16.mxu0 0
    %2291 = vmatpush1.bf16.msra.mxu0 0
    %2292 = vmatprep.subr.bf16.mxu0 0
    %2293 = vmatpush1.bf16.msra.mxu0 0
    %2294 = vmatprep.mubr.bf16.mxu0 0
    %2295 = vmatmul.mubr.bf16.gmra.mrb[0].mxu0 %v2257
    %v2296 = vpop.f32.mrb[0].mxu0
    %v2297 = vadd.f32 %v2232, %v2296
    %v2298 = vpop.f32.mrb[0].mxu0
    %v2299 = vpop.f32.mrb[0].mxu0
    %v2300 = vadd.f32 %v2232, %v2299
    %v2301 = vpop.f32.mrb[0].mxu0
    %2302 = vmatprep.mubr.bf16.mxu0 0
    %2303 = vmatmul.mubr.bf16.gmra.mrb[0].mxu0 %v2260
    %v2304 = vpop.f32.mrb[0].mxu0
    %v2305 = vadd.f32 %v2232, %v2304
    %v2306 = vpop.f32.mrb[0].mxu0
    %v2307 = vpop.f32.mrb[0].mxu0
    %v2308 = vadd.f32 %v2232, %v2307
    %v2309 = vpop.f32.mrb[0].mxu0
    %2310 = vdwg.mxu0
    %v2311 = vadd.f32 %v49, %v2297
    %v2312 = vadd.f32 %v50, %v2300
    %v2313 = vadd.f32 %v51, %v2305
    %v2314 = vadd.f32 %v52, %v2308
    %v2315 = vld [vmem:[%s8] sm:$0x1]
    %v2316 = vld [vmem:[%s9] sm:$0x1]
    %v2317 = vsel %vm55, %v2311, 0.0
    %2318 = vadd.xlane.f32.xlu0 %v2317
    %v2319 = vpop.xlane.xlu0 %2318
    %v2320 = vsel %vm55, %v2312, 0.0
    %2321 = vadd.xlane.f32.xlu0 %v2320
    %v2322 = vpop.xlane.xlu0 %2321
    %v2323 = vsel %vm55, %v2313, 0.0
    %2324 = vadd.xlane.f32.xlu0 %v2323
    %v2325 = vpop.xlane.xlu0 %2324
    %v2326 = vsel %vm55, %v2314, 0.0
    %2327 = vadd.xlane.f32.xlu0 %v2326
    %v2328 = vpop.xlane.xlu0 %2327
    %v2329 = vmul.f32 %v2319, %v68
    %v2330 = vmul.f32 %v2322, %v68
    %v2331 = vmul.f32 %v2325, %v68
    %v2332 = vmul.f32 %v2328, %v68
    %v2333 = vsub.f32 %v2311, %v2329
    %v2334 = vsub.f32 %v2312, %v2330
    %v2335 = vsub.f32 %v2313, %v2331
    %v2336 = vsub.f32 %v2314, %v2332
    %v2337 = vmul.f32 %v2333, %v2333
    %v2338 = vmul.f32 %v2334, %v2334
    %v2339 = vmul.f32 %v2335, %v2335
    %v2340 = vmul.f32 %v2336, %v2336
    %v2341 = vsel %vm55, %v2337, 0.0
    %2342 = vadd.xlane.f32.xlu0 %v2341
    %v2343 = vpop.xlane.xlu0 %2342
    %v2344 = vsel %vm55, %v2338, 0.0
    %2345 = vadd.xlane.f32.xlu0 %v2344
    %v2346 = vpop.xlane.xlu0 %2345
    %v2347 = vsel %vm55, %v2339, 0.0
    %2348 = vadd.xlane.f32.xlu0 %v2347
    %v2349 = vpop.xlane.xlu0 %2348
    %v2350 = vsel %vm55, %v2340, 0.0
    %2351 = vadd.xlane.f32.xlu0 %v2350
    %v2352 = vpop.xlane.xlu0 %2351
    %v2353 = vmul.f32 %v2343, %v68
    %v2354 = vmul.f32 %v2346, %v68
    %v2355 = vmul.f32 %v2349, %v68
    %v2356 = vmul.f32 %v2352, %v68
    %v2357 = vadd.f32 %v2353, 1e-05
    %v2358 = vadd.f32 %v2354, 1e-05
    %v2359 = vadd.f32 %v2355, 1e-05
    %v2360 = vadd.f32 %v2356, 1e-05
    %v2361 = vrsqrt.pop %v2357
    %v2362 = vrsqrt.pop %v2358
    %v2363 = vrsqrt.pop %v2359
    %v2364 = vrsqrt.pop %v2360
    %v2365 = vmul.f32 %v2333, %v2361
    %v2366 = vmul.f32 %v2334, %v2362
    %v2367 = vmul.f32 %v2335, %v2363
    %v2368 = vmul.f32 %v2336, %v2364
    %v2370 = vlaneseq
    %v2371 = vshrl.u32 %v2370, 7
    %v2372 = vsub.s32 0, %v2371
    %v2373 = vrot.slane %v2315, %v2372
    %v2375 = vmul.f32 %v2365, %v2373
    %v2376 = vmul.f32 %v2366, %v2373
    %v2377 = vmul.f32 %v2367, %v2373
    %v2378 = vmul.f32 %v2368, %v2373
    %v2380 = vlaneseq
    %v2381 = vshrl.u32 %v2380, 7
    %v2382 = vsub.s32 0, %v2381
    %v2383 = vrot.slane %v2316, %v2382
    %v2385 = vadd.f32 %v2375, %v2383
    %v2386 = vadd.f32 %v2376, %v2383
    %v2387 = vadd.f32 %v2377, %v2383
    %v2388 = vadd.f32 %v2378, %v2383
    %v2389 = vpack.c.bf16 %v2386, %v2385
    %v2390 = vpack.c.bf16 %v2388, %v2387
    %v2391 = vld [vmem:[%s10] sm:$0xf]
    %v2392 = vld [vmem:[%s10 + $0x4] sm:$0xf]
    %v2393 = vld [vmem:[%s10 + $0x8] sm:$0xf]
    %v2394 = vld [vmem:[%s10 + $0xc] sm:$0xf]
    %v2395 = vld [vmem:[%s11] sm:$0x1]
    %v2397 = vlaneseq
    %v2398 = vshrl.u32 %v2397, 7
    %v2399 = vsub.s32 0, %v2398
    %v2400 = vrot.slane %v2395, %v2399
    %v2406 = vunpack.c.l.b16 %v2391
    %v2407 = vunpack.c.l.b16 %v2392
    %v2408 = vunpack.c.l.b16 %v2393
    %v2409 = vunpack.c.l.b16 %v2394
    %v2410 = vpack.c.b16 %v2407, %v2406
    %v2411 = vpack.c.b16 %v2409, %v2408
    %v2415 = vsel %vm55, %v2389, 0
    %v2418 = vsel %vm55, %v2390, 0
    %2420 = vmatprep.subr.bf16.mxu0 0
    %2421 = vmatpush1.bf16.msra.mxu0 %v2410
    %2422 = vmatprep.subr.bf16.mxu0 0
    %2423 = vmatpush1.bf16.msra.mxu0 %v2411
    %2424 = vmatprep.subr.bf16.mxu0 0
    %2425 = vmatpush1.bf16.msra.mxu0 0
    %2426 = vmatprep.subr.bf16.mxu0 0
    %2427 = vmatpush1.bf16.msra.mxu0 0
    %2428 = vmatprep.subr.bf16.mxu0 0
    %2429 = vmatpush1.bf16.msra.mxu0 0
    %2430 = vmatprep.subr.bf16.mxu0 0
    %2431 = vmatpush1.bf16.msra.mxu0 0
    %2432 = vmatprep.subr.bf16.mxu0 0
    %2433 = vmatpush1.bf16.msra.mxu0 0
    %2434 = vmatprep.subr.bf16.mxu0 0
    %2435 = vmatpush1.bf16.msra.mxu0 0
    %2436 = vmatprep.subr.bf16.mxu0 0
    %2437 = vmatpush1.bf16.msra.mxu0 0
    %2438 = vmatprep.subr.bf16.mxu0 0
    %2439 = vmatpush1.bf16.msra.mxu0 0
    %2440 = vmatprep.subr.bf16.mxu0 0
    %2441 = vmatpush1.bf16.msra.mxu0 0
    %2442 = vmatprep.subr.bf16.mxu0 0
    %2443 = vmatpush1.bf16.msra.mxu0 0
    %2444 = vmatprep.subr.bf16.mxu0 0
    %2445 = vmatpush1.bf16.msra.mxu0 0
    %2446 = vmatprep.subr.bf16.mxu0 0
    %2447 = vmatpush1.bf16.msra.mxu0 0
    %2448 = vmatprep.subr.bf16.mxu0 0
    %2449 = vmatpush1.bf16.msra.mxu0 0
    %2450 = vmatprep.subr.bf16.mxu0 0
    %2451 = vmatpush1.bf16.msra.mxu0 0
    %2452 = vmatprep.mubr.bf16.mxu0 0
    %2453 = vmatmul.mubr.bf16.gmra.mrb[0].mxu0 %v2415
    %v2454 = vpop.f32.mrb[0].mxu0
    %v2455 = vadd.f32 %v2400, %v2454
    %v2456 = vpop.f32.mrb[0].mxu0
    %v2457 = vpop.f32.mrb[0].mxu0
    %v2458 = vadd.f32 %v2400, %v2457
    %v2459 = vpop.f32.mrb[0].mxu0
    %2460 = vmatprep.mubr.bf16.mxu0 0
    %2461 = vmatmul.mubr.bf16.gmra.mrb[0].mxu0 %v2418
    %v2462 = vpop.f32.mrb[0].mxu0
    %v2463 = vadd.f32 %v2400, %v2462
    %v2464 = vpop.f32.mrb[0].mxu0
    %v2465 = vpop.f32.mrb[0].mxu0
    %v2466 = vadd.f32 %v2400, %v2465
    %v2467 = vpop.f32.mrb[0].mxu0
    %2468 = vdwg.mxu0
    %v2469 = vmul.f32 %v2455, 1.702
    %v2470 = vmul.f32 %v2458, 1.702
    %v2471 = vmul.f32 %v2463, 1.702
    %v2472 = vmul.f32 %v2466, 1.702
    %v2473 = vxor.u32 %v2469, 2147483648
    %v2474 = vxor.u32 %v2470, 2147483648
    %v2475 = vxor.u32 %v2471, 2147483648
    %v2476 = vxor.u32 %v2472, 2147483648
    %v2477 = vmul.f32 %v2473, 1.442695
    %v2478 = vpow.pop %v2477
    %v2479 = vmul.f32 %v2474, 1.442695
    %v2480 = vpow.pop %v2479
    %v2481 = vmul.f32 %v2475, 1.442695
    %v2482 = vpow.pop %v2481
    %v2483 = vmul.f32 %v2476, 1.442695
    %v2484 = vpow.pop %v2483
    %v2485 = vadd.f32 %v2478, 1.0
    %v2486 = vadd.f32 %v2480, 1.0
    %v2487 = vadd.f32 %v2482, 1.0
    %v2488 = vadd.f32 %v2484, 1.0
    %v2489 = vrcp.pop %v2485
    %v2490 = vmul.f32 1.0, %v2489
    %v2491 = vrcp.pop %v2486
    %v2492 = vmul.f32 1.0, %v2491
    %v2493 = vrcp.pop %v2487
    %v2494 = vmul.f32 1.0, %v2493
    %v2495 = vrcp.pop %v2488
    %v2496 = vmul.f32 1.0, %v2495
    %v2497 = vmul.f32 %v2455, %v2490
    %v2498 = vmul.f32 %v2458, %v2492
    %v2499 = vmul.f32 %v2463, %v2494
    %v2500 = vmul.f32 %v2466, %v2496
    %v2501 = vpack.c.bf16 %v2498, %v2497
    %v2502 = vpack.c.bf16 %v2500, %v2499
    %v2503 = vld [vmem:[%s12] sm:$0xf]
    %v2504 = vld [vmem:[%s12 + $0x4] sm:$0xf]
    %v2505 = vld [vmem:[%s12 + $0x8] sm:$0xf]
    %v2506 = vld [vmem:[%s12 + $0xc] sm:$0xf]
    %v2507 = vld [vmem:[%s12 + $0x10] sm:$0xf]
    %v2508 = vld [vmem:[%s12 + $0x14] sm:$0xf]
    %v2509 = vld [vmem:[%s12 + $0x18] sm:$0xf]
    %v2510 = vld [vmem:[%s12 + $0x1c] sm:$0xf]
    %v2511 = vld [vmem:[%s12 + $0x20] sm:$0xf]
    %v2512 = vld [vmem:[%s12 + $0x24] sm:$0xf]
    %v2513 = vld [vmem:[%s12 + $0x28] sm:$0xf]
    %v2514 = vld [vmem:[%s12 + $0x2c] sm:$0xf]
    %v2515 = vld [vmem:[%s12 + $0x30] sm:$0xf]
    %v2516 = vld [vmem:[%s12 + $0x34] sm:$0xf]
    %v2517 = vld [vmem:[%s12 + $0x38] sm:$0xf]
    %v2518 = vld [vmem:[%s12 + $0x3c] sm:$0xf]
    %v2519 = vld [vmem:[%s13] sm:$0x1]
    %v2521 = vlaneseq
    %v2522 = vshrl.u32 %v2521, 7
    %v2523 = vsub.s32 0, %v2522
    %v2524 = vrot.slane %v2519, %v2523
    %v2542 = vunpack.c.l.b16 %v2503
    %v2543 = vunpack.c.l.b16 %v2504
    %v2544 = vunpack.c.l.b16 %v2505
    %v2545 = vunpack.c.l.b16 %v2506
    %v2546 = vunpack.c.l.b16 %v2507
    %v2547 = vunpack.c.l.b16 %v2508
    %v2548 = vunpack.c.l.b16 %v2509
    %v2549 = vunpack.c.l.b16 %v2510
    %v2550 = vunpack.c.l.b16 %v2511
    %v2551 = vunpack.c.l.b16 %v2512
    %v2552 = vunpack.c.l.b16 %v2513
    %v2553 = vunpack.c.l.b16 %v2514
    %v2554 = vunpack.c.l.b16 %v2515
    %v2555 = vunpack.c.l.b16 %v2516
    %v2556 = vunpack.c.l.b16 %v2517
    %v2557 = vunpack.c.l.b16 %v2518
    %v2558 = vpack.c.b16 %v2543, %v2542
    %v2559 = vpack.c.b16 %v2545, %v2544
    %v2560 = vpack.c.b16 %v2547, %v2546
    %v2561 = vpack.c.b16 %v2549, %v2548
    %v2562 = vpack.c.b16 %v2551, %v2550
    %v2563 = vpack.c.b16 %v2553, %v2552
    %v2564 = vpack.c.b16 %v2555, %v2554
    %v2565 = vpack.c.b16 %v2557, %v2556
    %2574 = vmatprep.subr.bf16.mxu0 0
    %2575 = vmatpush1.bf16.msra.mxu0 %v2558
    %2576 = vmatprep.subr.bf16.mxu0 0
    %2577 = vmatpush1.bf16.msra.mxu0 %v2559
    %2578 = vmatprep.subr.bf16.mxu0 0
    %2579 = vmatpush1.bf16.msra.mxu0 %v2560
    %2580 = vmatprep.subr.bf16.mxu0 0
    %2581 = vmatpush1.bf16.msra.mxu0 %v2561
    %2582 = vmatprep.subr.bf16.mxu0 0
    %2583 = vmatpush1.bf16.msra.mxu0 %v2562
    %2584 = vmatprep.subr.bf16.mxu0 0
    %2585 = vmatpush1.bf16.msra.mxu0 %v2563
    %2586 = vmatprep.subr.bf16.mxu0 0
    %2587 = vmatpush1.bf16.msra.mxu0 %v2564
    %2588 = vmatprep.subr.bf16.mxu0 0
    %2589 = vmatpush1.bf16.msra.mxu0 %v2565
    %2590 = vmatprep.subr.bf16.mxu0 0
    %2591 = vmatpush1.bf16.msra.mxu0 0
    %2592 = vmatprep.subr.bf16.mxu0 0
    %2593 = vmatpush1.bf16.msra.mxu0 0
    %2594 = vmatprep.subr.bf16.mxu0 0
    %2595 = vmatpush1.bf16.msra.mxu0 0
    %2596 = vmatprep.subr.bf16.mxu0 0
    %2597 = vmatpush1.bf16.msra.mxu0 0
    %2598 = vmatprep.subr.bf16.mxu0 0
    %2599 = vmatpush1.bf16.msra.mxu0 0
    %2600 = vmatprep.subr.bf16.mxu0 0
    %2601 = vmatpush1.bf16.msra.mxu0 0
    %2602 = vmatprep.subr.bf16.mxu0 0
    %2603 = vmatpush1.bf16.msra.mxu0 0
    %2604 = vmatprep.subr.bf16.mxu0 0
    %2605 = vmatpush1.bf16.msra.mxu0 0
    %2606 = vmatprep.mubr.bf16.mxu0 0
    %2607 = vmatmul.mubr.bf16.gmra.mrb[0].mxu0 %v2501
    %v2608 = vpop.f32.mrb[0].mxu0
    %v2609 = vadd.f32 %v2524, %v2608
    %v2610 = vpop.f32.mrb[0].mxu0
    %v2611 = vpop.f32.mrb[0].mxu0
    %v2612 = vadd.f32 %v2524, %v2611
    %v2613 = vpop.f32.mrb[0].mxu0
    %2614 = vmatprep.mubr.bf16.mxu0 0
    %2615 = vmatmul.mubr.bf16.gmra.mrb[0].mxu0 %v2502
    %v2616 = vpop.f32.mrb[0].mxu0
    %v2617 = vadd.f32 %v2524, %v2616
    %v2618 = vpop.f32.mrb[0].mxu0
    %v2619 = vpop.f32.mrb[0].mxu0
    %v2620 = vadd.f32 %v2524, %v2619
    %v2621 = vpop.f32.mrb[0].mxu0
    %2622 = vdwg.mxu0
    %v2623 = vadd.f32 %v2311, %v2609
    %v2624 = vadd.f32 %v2312, %v2612
    %v2625 = vadd.f32 %v2313, %v2617
    %v2626 = vadd.f32 %v2314, %v2620
    %2627 = vst.msk [vmem:[#allocation3] sm:$0xff] %vm55, %v2623
    %2628 = vst.msk [vmem:[#allocation3 + $0x8] sm:$0xff] %vm55, %v2624
    %2629 = vst.msk [vmem:[#allocation3 + $0x10] sm:$0xff] %vm55, %v2625
    %2630 = vst.msk [vmem:[#allocation3 + $0x18] sm:$0xff] %vm55, %v2626
    // Predicated region
    $region58: #{tpu_custom_call.1} parent=1 // pred_check
      _
    $region59: #{tpu_custom_call.1} parent=1 // pred_check_branch
      %2632 = sbr.rel (0) target = $region61
    $region60: #{tpu_custom_call.1} parent=1 // pred_region
      %s2634 = ssub.s32 512, 512
      %2635 = vsyncadd [#allocation4], %s2634
      %s2636 = sshll.u32 [#allocation3], 4
      %s2637 = int_to_ptr.vmem [resolvable:$true] %s2636
      %2642 = dma.vmem_to_hbm [thread:$0]  %s2637, 512, %s14, [#allocation4], 128, 128, 8
    $region61: #{tpu_custom_call.1} parent=1 // pred_fallthru
      _
    // Predicated region
    $region62: #{tpu_custom_call.1} parent=1 // pred_check
      _
    $region63: #{tpu_custom_call.1} parent=1 // pred_check_branch
      %2644 = sbr.rel (0) target = $region65
    $region64: #{tpu_custom_call.1} parent=1 // pred_region
      %2645 = dma.done [#allocation4], 512
    $region65: #{tpu_custom_call.1} parent=1 // pred_fallthru
      _
    %2646 = vsyncpa [#allocation4], 1

</llo_original>
